<compile_context>
chip_gen: v5e
topology: v5e:2x2
jax: 0.10.0
libtpu: 0.0.40
codegen_flags: <defaults>
</compile_context>

<pallas_src>
import functools

import jax
import jax.numpy as jnp
from jax import lax
from jax.experimental import pallas as pl
from jax.experimental.pallas import tpu as pltpu


def _round_up(n, m):
    return ((n + m - 1) // m) * m


def _device_kind():
    try:
        return jax.devices()[0].device_kind.lower()
    except Exception:
        return ""


def _select_compute_dtype():
    """bf16 spline evaluation on bf16-native-VALU chips (v6e/v7x), f32 otherwise."""
    kind = _device_kind()
    if ("v6" in kind) or ("v7" in kind) or ("7x" in kind):
        return jnp.bfloat16
    return jnp.float32


def _cubic_bspline_basis(s):
    """B3 cubic B-spline at |scaled distance| s (trimmed select chain, VPU-only)."""
    s2 = s * s
    near = (2.0 / 3.0) + s2 * (0.5 * s - 1.0)          # |s| < 1 : 2/3 - s^2 + s^3/2
    q = jnp.maximum(2.0 - s, 0.0)
    far = q * q * q * (1.0 / 6.0)                      # 1 <= |s| : (2-s)^3/6, 0 past 2
    return jnp.where(s < 1.0, near, far)


def _kan_kernel(sknots_ref, x_ref, w_ref, c_ref, b_ref, o_ref, *, unroll):
    # sknots: (G,)  f32 SMEM (knots / h, scalar-prefetched)
    # x: (TB, TIN, 1)  w: (TIN, TO)  (w/h, transposed)   c: (G, TIN, TO)
    # b: (1, TO) f32   o: (TB, TO) f32 output (resident across the ki axis)
    ki = pl.program_id(2)

    @pl.when(ki == 0)
    def _init():
        o_ref[...] = jnp.zeros_like(o_ref)

    x = x_ref[...]                       # (TB, TIN, 1), compute dtype
    w = w_ref[...]                       # (TIN, TO),    compute dtype
    # t[b, j, o] = (w[o, j] / h) * x[b, j]  -- size-1 lane broadcast + outer broadcast
    t = x * w[None, :, :]                # (TB, TIN, TO)
    cdt = t.dtype
    grid_size = c_ref.shape[0]

    def body(k, acc):
        s = jnp.abs(t - sknots_ref[k].astype(cdt))     # scaled knots: |u - t_k| / h
        phi = _cubic_bspline_basis(s)                  # (TB, TIN, TO), compute dtype
        prod = phi * c_ref[k]                          # (TB, TIN, TO)
        # reduce over IN (sublane axis); accumulate in f32
        return acc + jnp.sum(prod.astype(jnp.float32), axis=1)

    contrib = lax.fori_loop(
        0, grid_size, body, jnp.zeros(o_ref.shape, jnp.float32), unroll=unroll
    )
    o_ref[...] += contrib

    @pl.when(ki == pl.num_programs(2) - 1)
    def _bias():
        o_ref[...] += b_ref[...]                       # broadcast (1, TO)


def kan_layer_forward(x, weights, coeffs, bias, knots, h, *,
                      tb=None, to=None, tin=None, compute_dtype=None):
    """Pallas-backed KANLayer forward.  x:(B, IN) -> (B, OUT), float32."""
    B, IN = x.shape
    OUT = weights.shape[0]
    G = coeffs.shape[0]

    if compute_dtype is None:
        compute_dtype = _select_compute_dtype()
    csize = jnp.dtype(compute_dtype).itemsize
    sub = 16 if compute_dtype == jnp.bfloat16 else 8   # sublane granularity

    # OUT is lane-dense (multiple of 128); IN sits on sublanes and only needs
    # sublane granularity (or 128-chunks when large enough to tile the reduce).
    TO = to if to is not None else 128
    OUTp = _round_up(OUT, TO)
    if IN >= 128:
        INp = _round_up(IN, 128)
        TIN = tin if tin is not None else 128
    else:
        INp = _round_up(IN, sub)
        TIN = tin if tin is not None else INp

    if tb is None:
        TB = min(64, _round_up(B, sub))
        # v7x has 2 TensorCores: make sure the parallel axes yield >= 2 tiles
        # when the batch is big enough to split (neutral on 1-TC chips).
        n_parallel = (_round_up(B, TB) // TB) * (OUTp // TO)
        if n_parallel < 2 and B >= 2 * sub:
            TB = _round_up(B // 2, sub)
    else:
        TB = tb
    Bp = _round_up(B, TB)

    inv_h = jnp.float32(1.0) / jnp.asarray(h, jnp.float32)

    # Zero padding is exact: padded-IN rows are killed by zero coeffs/weights,
    # padded OUT columns / batch rows are sliced off below.
    x_p = jnp.pad(x.astype(jnp.float32), ((0, Bp - B), (0, INp - IN)))
    x_p = x_p.astype(compute_dtype).reshape(Bp, INp, 1)
    w_T = jnp.pad((weights.astype(jnp.float32) * inv_h).T,
                  ((0, INp - IN), (0, OUTp - OUT))).astype(compute_dtype)
    c_T = jnp.pad(jnp.transpose(coeffs.astype(jnp.float32), (0, 2, 1)),
                  ((0, 0), (0, INp - IN), (0, OUTp - OUT))).astype(compute_dtype)
    b_p = jnp.pad(bias.astype(jnp.float32), (0, OUTp - OUT)).reshape(1, OUTp)
    sknots = knots.astype(jnp.float32) * inv_h          # (G,), runtime values

    grid = (Bp // TB, OUTp // TO, INp // TIN)
    unroll_opt = True if G <= 16 else 4

    # Advisory cost estimate (pure VPU work, no MXU / transcendentals).
    flops = int(Bp) * int(OUTp) * int(INp) * (14 * int(G) + 3)
    bytes_accessed = 4 * int(G) + csize * (
        (OUTp // TO) * Bp * INp                         # x re-streamed per out tile
        + (Bp // TB) * (INp * OUTp + G * INp * OUTp)    # w, c re-streamed per batch tile
    ) + 4 * (OUTp + Bp * OUTp)
    cost = pl.CostEstimate(flops=flops, transcendentals=0,
                           bytes_accessed=int(bytes_accessed))

    # Generation-aware VMEM request: live temps (t / s / phi, conservatively f32)
    # + double-buffered c/x/w/out.  Cap lower on v7x (64 MiB physical VMEM).
    live = (3 * TB * TIN * TO * 4
            + 2 * G * TIN * TO * csize
            + 2 * (TB * TIN * csize + TIN * TO * csize + TO * 4)
            + 3 * TB * TO * 4)
    kind = _device_kind()
    cap = 48 * 1024 * 1024 if (("v7" in kind) or ("7x" in kind)) else 64 * 1024 * 1024
    vmem_limit = int(min(cap, max(32 * 1024 * 1024, 2 * live)))

    grid_spec = pltpu.PrefetchScalarGridSpec(
        num_scalar_prefetch=1,                           # sknots -> SMEM
        grid=grid,
        in_specs=[
            pl.BlockSpec((TB, TIN, 1), lambda bi, oi, ki, sk: (bi, ki, 0)),
            pl.BlockSpec((TIN, TO), lambda bi, oi, ki, sk: (ki, oi)),
            pl.BlockSpec((G, TIN, TO), lambda bi, oi, ki, sk: (0, ki, oi)),
            pl.BlockSpec((1, TO), lambda bi, oi, ki, sk: (0, oi)),
        ],
        out_specs=pl.BlockSpec((TB, TO), lambda bi, oi, ki, sk: (bi, oi)),
    )

    out_p = pl.pallas_call(
        functools.partial(_kan_kernel, unroll=unroll_opt),
        out_shape=jax.ShapeDtypeStruct((Bp, OUTp), jnp.float32),
        grid_spec=grid_spec,
        compiler_params=pltpu.CompilerParams(
            dimension_semantics=("parallel", "parallel", "arbitrary"),
            vmem_limit_bytes=vmem_limit,
        ),
        cost_estimate=cost,
    )(sknots, x_p, w_T, c_T, b_p)

    return out_p[:B, :OUT]


def kan_layer_reference(x, weights, coeffs, bias, knots, h):
    """Pure-JAX f32 reference of the same math (for correctness check)."""
    u = x[:, None, :] * weights[None, :, :]              # (B, OUT, IN)
    s = jnp.abs((u[..., None] - knots[None, None, None, :]) / h)   # (B,OUT,IN,G)
    phi = _cubic_bspline_basis(s)
    out = jnp.einsum("boig,goi->bo", phi, coeffs)
    return out + bias[None, :]


def init_kan_params(key, in_features, out_features, grid_size):
    """Deterministic parameter init mirroring KANLayer.__init__ shapes."""
    k_w, k_c = jax.random.split(key)
    # nn.init.kaiming_uniform_(weights, a=1): bound = sqrt(3 / fan_in)
    bound = (3.0 / in_features) ** 0.5
    weights = jax.random.uniform(
        k_w, (out_features, in_features), jnp.float32, -bound, bound
    )
    bias = jnp.zeros((out_features,), jnp.float32)        # nn.init.zeros_
    # per-edge spline coefficients (grid_size per spline, out*in splines)
    coeffs = jax.random.uniform(
        k_c, (grid_size, out_features, in_features), jnp.float32, -0.5, 0.5
    )
    knots = jnp.linspace(-1.0, 1.0, grid_size).astype(jnp.float32)
    h = jnp.float32(2.0 / (grid_size - 1))
    return weights, bias, coeffs, knots, h


if __name__ == "__main__":
    batch, in_features, out_features, grid_size = 8, 16, 32, 10

    key = jax.random.PRNGKey(0)
    k_x, k_p = jax.random.split(key)
    x = jax.random.normal(k_x, (batch, in_features), jnp.float32)
    weights, bias, coeffs, knots, h = init_kan_params(
        k_p, in_features, out_features, grid_size
    )

    ref = kan_layer_reference(x, weights, coeffs, bias, knots, h)

    # 1) Forced-f32 path: tight numerical check of the kernel math / layout.
    out_f32 = kan_layer_forward(x, weights, coeffs, bias, knots, h,
                                compute_dtype=jnp.float32)
    out_f32 = jax.block_until_ready(out_f32)
    assert out_f32.shape == (batch, out_features)
    assert jnp.allclose(out_f32, ref, atol=1e-4, rtol=1e-4), "f32 mismatch vs reference"

    # 2) Auto path (bf16 spline eval on v6e/v7x, f32 on v5e): looser tolerance
    #    when bf16 is in play, per the perf review.
    auto_dtype = _select_compute_dtype()
    out = kan_layer_forward(x, weights, coeffs, bias, knots, h)
    out = jax.block_until_ready(out)
    assert out.shape == (batch, out_features)
    if auto_dtype == jnp.float32:
        atol = rtol = 1e-4
    else:
        atol = rtol = 1e-1
    assert jnp.allclose(out, ref, atol=atol, rtol=rtol), "auto-dtype mismatch vs reference"

    print("KERNEL_OK")
</pallas_src>

<mosaic_0001>
module attributes {stable_mosaic.version = 11 : i64} {
  func.func @_kan_kernel(%arg0: i32, %arg1: i32, %arg2: i32, %arg3: memref<10xf32, #tpu.memory_space<smem>>, %arg4: memref<8x16x1xf32, #tpu.memory_space<vmem>>, %arg5: memref<16x128xf32, #tpu.memory_space<vmem>>, %arg6: memref<10x16x128xf32, #tpu.memory_space<vmem>>, %arg7: memref<1x128xf32, #tpu.memory_space<vmem>>, %arg8: memref<8x128xf32, #tpu.memory_space<vmem>>) attributes {dimension_semantics = [#tpu.dimension_semantics<parallel>, #tpu.dimension_semantics<parallel>, #tpu.dimension_semantics<arbitrary>], iteration_bounds = array<i64: 1, 1, 1>, scalar_prefetch = 1 : i64, scratch_operands = 0 : i64, tpu.core_type = #tpu.core_type<tc>, window_params = [{transform_indices = @transform_0, window_bounds = array<i64: 8, 16, 1>}, {transform_indices = @transform_1, window_bounds = array<i64: 16, 128>}, {transform_indices = @transform_2, window_bounds = array<i64: 10, 16, 128>}, {transform_indices = @transform_3, window_bounds = array<i64: 1, 128>}, {transform_indices = @transform_4, window_bounds = array<i64: 8, 128>}]} {
    %c0_i32 = arith.constant 0 : i32
    %0 = arith.cmpi eq, %arg2, %c0_i32 : i32
    %1 = arith.extui %0 : i1 to i32
    %c0_i32_0 = arith.constant 0 : i32
    %2 = arith.cmpi ne, %1, %c0_i32_0 : i32
    scf.if %2 {
      %cst_112 = arith.constant 0.000000e+00 : f32
      %336 = vector.broadcast %cst_112 : f32 to vector<8x128xf32>
      %c0_113 = arith.constant 0 : index
      %c0_114 = arith.constant 0 : index
      %337 = vector.load %arg8[%c0_113, %c0_114] : memref<8x128xf32, #tpu.memory_space<vmem>>, vector<8x128xf32>
      tpu.vector_store %arg8[%c0_113, %c0_114], %336 {strides = array<i32>} : memref<8x128xf32, #tpu.memory_space<vmem>>, vector<8x128xf32>,
    } else {
    }
    %c0 = arith.constant 0 : index
    %c0_1 = arith.constant 0 : index
    %c0_2 = arith.constant 0 : index
    %3 = vector.load %arg4[%c0, %c0_1, %c0_2] : memref<8x16x1xf32, #tpu.memory_space<vmem>>, vector<8x16x1xf32>
    %c0_3 = arith.constant 0 : index
    %c0_4 = arith.constant 0 : index
    %4 = vector.load %arg5[%c0_3, %c0_4] : memref<16x128xf32, #tpu.memory_space<vmem>>, vector<16x128xf32>
    %5 = vector.shape_cast %4 : vector<16x128xf32> to vector<1x16x128xf32>
    %6 = vector.broadcast %3 : vector<8x16x1xf32> to vector<8x16x128xf32>
    %7 = vector.broadcast %5 : vector<1x16x128xf32> to vector<8x16x128xf32>
    %8 = arith.mulf %6, %7 : vector<8x16x128xf32>
    %cst = arith.constant 0.000000e+00 : f32
    %9 = vector.broadcast %cst : f32 to vector<8x128xf32>
    %c0_i32_5 = arith.constant 0 : i32
    %10 = arith.index_cast %c0_i32_5 : i32 to index
    %11 = memref.load %arg3[%10] : memref<10xf32, #tpu.memory_space<smem>>
    %12 = vector.broadcast %11 : f32 to vector<8x16x128xf32>
    %13 = arith.subf %8, %12 : vector<8x16x128xf32>
    %14 = math.absf %13 : vector<8x16x128xf32>
    %15 = arith.mulf %14, %14 : vector<8x16x128xf32>
    %cst_6 = arith.constant 5.000000e-01 : f32
    %16 = vector.broadcast %cst_6 : f32 to vector<8x16x128xf32>
    %17 = arith.mulf %16, %14 : vector<8x16x128xf32>
    %cst_7 = arith.constant 1.000000e+00 : f32
    %18 = vector.broadcast %cst_7 : f32 to vector<8x16x128xf32>
    %19 = arith.subf %17, %18 : vector<8x16x128xf32>
    %20 = arith.mulf %15, %19 : vector<8x16x128xf32>
    %cst_8 = arith.constant 0.666666686 : f32
    %21 = vector.broadcast %cst_8 : f32 to vector<8x16x128xf32>
    %22 = arith.addf %21, %20 : vector<8x16x128xf32>
    %cst_9 = arith.constant 2.000000e+00 : f32
    %23 = vector.broadcast %cst_9 : f32 to vector<8x16x128xf32>
    %24 = arith.subf %23, %14 : vector<8x16x128xf32>
    %cst_10 = arith.constant 0.000000e+00 : f32
    %25 = vector.broadcast %cst_10 : f32 to vector<8x16x128xf32>
    %26 = arith.maximumf %24, %25 : vector<8x16x128xf32>
    %27 = arith.mulf %26, %26 : vector<8x16x128xf32>
    %28 = arith.mulf %27, %26 : vector<8x16x128xf32>
    %cst_11 = arith.constant 0.166666672 : f32
    %29 = vector.broadcast %cst_11 : f32 to vector<8x16x128xf32>
    %30 = arith.mulf %28, %29 : vector<8x16x128xf32>
    %cst_12 = arith.constant 1.000000e+00 : f32
    %31 = vector.broadcast %cst_12 : f32 to vector<8x16x128xf32>
    %32 = arith.cmpf olt, %14, %31 : vector<8x16x128xf32>
    %33 = arith.select %32, %22, %30 : vector<8x16x128xi1>, vector<8x16x128xf32>
    %34 = arith.index_cast %c0_i32_5 : i32 to index
    %c0_13 = arith.constant 0 : index
    %c0_14 = arith.constant 0 : index
    %35 = vector.load %arg6[%34, %c0_13, %c0_14] : memref<10x16x128xf32, #tpu.memory_space<vmem>>, vector<1x16x128xf32>
    %36 = vector.shape_cast %35 : vector<1x16x128xf32> to vector<16x128xf32>
    %37 = vector.shape_cast %36 : vector<16x128xf32> to vector<1x16x128xf32>
    %38 = vector.broadcast %37 : vector<1x16x128xf32> to vector<8x16x128xf32>
    %39 = arith.mulf %33, %38 : vector<8x16x128xf32>
    %cst_15 = arith.constant dense<0.000000e+00> : vector<8x128xf32>
    %40 = vector.multi_reduction <add>, %39, %cst_15 [1] : vector<8x16x128xf32> to vector<8x128xf32>
    %41 = arith.addf %9, %40 : vector<8x128xf32>
    %c1_i32 = arith.constant 1 : i32
    %42 = arith.index_cast %c1_i32 : i32 to index
    %43 = memref.load %arg3[%42] : memref<10xf32, #tpu.memory_space<smem>>
    %44 = vector.broadcast %43 : f32 to vector<8x16x128xf32>
    %45 = arith.subf %8, %44 : vector<8x16x128xf32>
    %46 = math.absf %45 : vector<8x16x128xf32>
    %47 = arith.mulf %46, %46 : vector<8x16x128xf32>
    %cst_16 = arith.constant 5.000000e-01 : f32
    %48 = vector.broadcast %cst_16 : f32 to vector<8x16x128xf32>
    %49 = arith.mulf %48, %46 : vector<8x16x128xf32>
    %cst_17 = arith.constant 1.000000e+00 : f32
    %50 = vector.broadcast %cst_17 : f32 to vector<8x16x128xf32>
    %51 = arith.subf %49, %50 : vector<8x16x128xf32>
    %52 = arith.mulf %47, %51 : vector<8x16x128xf32>
    %cst_18 = arith.constant 0.666666686 : f32
    %53 = vector.broadcast %cst_18 : f32 to vector<8x16x128xf32>
    %54 = arith.addf %53, %52 : vector<8x16x128xf32>
    %cst_19 = arith.constant 2.000000e+00 : f32
    %55 = vector.broadcast %cst_19 : f32 to vector<8x16x128xf32>
    %56 = arith.subf %55, %46 : vector<8x16x128xf32>
    %cst_20 = arith.constant 0.000000e+00 : f32
    %57 = vector.broadcast %cst_20 : f32 to vector<8x16x128xf32>
    %58 = arith.maximumf %56, %57 : vector<8x16x128xf32>
    %59 = arith.mulf %58, %58 : vector<8x16x128xf32>
    %60 = arith.mulf %59, %58 : vector<8x16x128xf32>
    %cst_21 = arith.constant 0.166666672 : f32
    %61 = vector.broadcast %cst_21 : f32 to vector<8x16x128xf32>
    %62 = arith.mulf %60, %61 : vector<8x16x128xf32>
    %cst_22 = arith.constant 1.000000e+00 : f32
    %63 = vector.broadcast %cst_22 : f32 to vector<8x16x128xf32>
    %64 = arith.cmpf olt, %46, %63 : vector<8x16x128xf32>
    %65 = arith.select %64, %54, %62 : vector<8x16x128xi1>, vector<8x16x128xf32>
    %66 = arith.index_cast %c1_i32 : i32 to index
    %c0_23 = arith.constant 0 : index
    %c0_24 = arith.constant 0 : index
    %67 = vector.load %arg6[%66, %c0_23, %c0_24] : memref<10x16x128xf32, #tpu.memory_space<vmem>>, vector<1x16x128xf32>
    %68 = vector.shape_cast %67 : vector<1x16x128xf32> to vector<16x128xf32>
    %69 = vector.shape_cast %68 : vector<16x128xf32> to vector<1x16x128xf32>
    %70 = vector.broadcast %69 : vector<1x16x128xf32> to vector<8x16x128xf32>
    %71 = arith.mulf %65, %70 : vector<8x16x128xf32>
    %cst_25 = arith.constant dense<0.000000e+00> : vector<8x128xf32>
    %72 = vector.multi_reduction <add>, %71, %cst_25 [1] : vector<8x16x128xf32> to vector<8x128xf32>
    %73 = arith.addf %41, %72 : vector<8x128xf32>
    %c2_i32 = arith.constant 2 : i32
    %74 = arith.index_cast %c2_i32 : i32 to index
    %75 = memref.load %arg3[%74] : memref<10xf32, #tpu.memory_space<smem>>
    %76 = vector.broadcast %75 : f32 to vector<8x16x128xf32>
    %77 = arith.subf %8, %76 : vector<8x16x128xf32>
    %78 = math.absf %77 : vector<8x16x128xf32>
    %79 = arith.mulf %78, %78 : vector<8x16x128xf32>
    %cst_26 = arith.constant 5.000000e-01 : f32
    %80 = vector.broadcast %cst_26 : f32 to vector<8x16x128xf32>
    %81 = arith.mulf %80, %78 : vector<8x16x128xf32>
    %cst_27 = arith.constant 1.000000e+00 : f32
    %82 = vector.broadcast %cst_27 : f32 to vector<8x16x128xf32>
    %83 = arith.subf %81, %82 : vector<8x16x128xf32>
    %84 = arith.mulf %79, %83 : vector<8x16x128xf32>
    %cst_28 = arith.constant 0.666666686 : f32
    %85 = vector.broadcast %cst_28 : f32 to vector<8x16x128xf32>
    %86 = arith.addf %85, %84 : vector<8x16x128xf32>
    %cst_29 = arith.constant 2.000000e+00 : f32
    %87 = vector.broadcast %cst_29 : f32 to vector<8x16x128xf32>
    %88 = arith.subf %87, %78 : vector<8x16x128xf32>
    %cst_30 = arith.constant 0.000000e+00 : f32
    %89 = vector.broadcast %cst_30 : f32 to vector<8x16x128xf32>
    %90 = arith.maximumf %88, %89 : vector<8x16x128xf32>
    %91 = arith.mulf %90, %90 : vector<8x16x128xf32>
    %92 = arith.mulf %91, %90 : vector<8x16x128xf32>
    %cst_31 = arith.constant 0.166666672 : f32
    %93 = vector.broadcast %cst_31 : f32 to vector<8x16x128xf32>
    %94 = arith.mulf %92, %93 : vector<8x16x128xf32>
    %cst_32 = arith.constant 1.000000e+00 : f32
    %95 = vector.broadcast %cst_32 : f32 to vector<8x16x128xf32>
    %96 = arith.cmpf olt, %78, %95 : vector<8x16x128xf32>
    %97 = arith.select %96, %86, %94 : vector<8x16x128xi1>, vector<8x16x128xf32>
    %98 = arith.index_cast %c2_i32 : i32 to index
    %c0_33 = arith.constant 0 : index
    %c0_34 = arith.constant 0 : index
    %99 = vector.load %arg6[%98, %c0_33, %c0_34] : memref<10x16x128xf32, #tpu.memory_space<vmem>>, vector<1x16x128xf32>
    %100 = vector.shape_cast %99 : vector<1x16x128xf32> to vector<16x128xf32>
    %101 = vector.shape_cast %100 : vector<16x128xf32> to vector<1x16x128xf32>
    %102 = vector.broadcast %101 : vector<1x16x128xf32> to vector<8x16x128xf32>
    %103 = arith.mulf %97, %102 : vector<8x16x128xf32>
    %cst_35 = arith.constant dense<0.000000e+00> : vector<8x128xf32>
    %104 = vector.multi_reduction <add>, %103, %cst_35 [1] : vector<8x16x128xf32> to vector<8x128xf32>
    %105 = arith.addf %73, %104 : vector<8x128xf32>
    %c3_i32 = arith.constant 3 : i32
    %106 = arith.index_cast %c3_i32 : i32 to index
    %107 = memref.load %arg3[%106] : memref<10xf32, #tpu.memory_space<smem>>
    %108 = vector.broadcast %107 : f32 to vector<8x16x128xf32>
    %109 = arith.subf %8, %108 : vector<8x16x128xf32>
    %110 = math.absf %109 : vector<8x16x128xf32>
    %111 = arith.mulf %110, %110 : vector<8x16x128xf32>
    %cst_36 = arith.constant 5.000000e-01 : f32
    %112 = vector.broadcast %cst_36 : f32 to vector<8x16x128xf32>
    %113 = arith.mulf %112, %110 : vector<8x16x128xf32>
    %cst_37 = arith.constant 1.000000e+00 : f32
    %114 = vector.broadcast %cst_37 : f32 to vector<8x16x128xf32>
    %115 = arith.subf %113, %114 : vector<8x16x128xf32>
    %116 = arith.mulf %111, %115 : vector<8x16x128xf32>
    %cst_38 = arith.constant 0.666666686 : f32
    %117 = vector.broadcast %cst_38 : f32 to vector<8x16x128xf32>
    %118 = arith.addf %117, %116 : vector<8x16x128xf32>
    %cst_39 = arith.constant 2.000000e+00 : f32
    %119 = vector.broadcast %cst_39 : f32 to vector<8x16x128xf32>
    %120 = arith.subf %119, %110 : vector<8x16x128xf32>
    %cst_40 = arith.constant 0.000000e+00 : f32
    %121 = vector.broadcast %cst_40 : f32 to vector<8x16x128xf32>
    %122 = arith.maximumf %120, %121 : vector<8x16x128xf32>
    %123 = arith.mulf %122, %122 : vector<8x16x128xf32>
    %124 = arith.mulf %123, %122 : vector<8x16x128xf32>
    %cst_41 = arith.constant 0.166666672 : f32
    %125 = vector.broadcast %cst_41 : f32 to vector<8x16x128xf32>
    %126 = arith.mulf %124, %125 : vector<8x16x128xf32>
    %cst_42 = arith.constant 1.000000e+00 : f32
    %127 = vector.broadcast %cst_42 : f32 to vector<8x16x128xf32>
    %128 = arith.cmpf olt, %110, %127 : vector<8x16x128xf32>
    %129 = arith.select %128, %118, %126 : vector<8x16x128xi1>, vector<8x16x128xf32>
    %130 = arith.index_cast %c3_i32 : i32 to index
    %c0_43 = arith.constant 0 : index
    %c0_44 = arith.constant 0 : index
    %131 = vector.load %arg6[%130, %c0_43, %c0_44] : memref<10x16x128xf32, #tpu.memory_space<vmem>>, vector<1x16x128xf32>
    %132 = vector.shape_cast %131 : vector<1x16x128xf32> to vector<16x128xf32>
    %133 = vector.shape_cast %132 : vector<16x128xf32> to vector<1x16x128xf32>
    %134 = vector.broadcast %133 : vector<1x16x128xf32> to vector<8x16x128xf32>
    %135 = arith.mulf %129, %134 : vector<8x16x128xf32>
    %cst_45 = arith.constant dense<0.000000e+00> : vector<8x128xf32>
    %136 = vector.multi_reduction <add>, %135, %cst_45 [1] : vector<8x16x128xf32> to vector<8x128xf32>
    %137 = arith.addf %105, %136 : vector<8x128xf32>
    %c4_i32 = arith.constant 4 : i32
    %138 = arith.index_cast %c4_i32 : i32 to index
    %139 = memref.load %arg3[%138] : memref<10xf32, #tpu.memory_space<smem>>
    %140 = vector.broadcast %139 : f32 to vector<8x16x128xf32>
    %141 = arith.subf %8, %140 : vector<8x16x128xf32>
    %142 = math.absf %141 : vector<8x16x128xf32>
    %143 = arith.mulf %142, %142 : vector<8x16x128xf32>
    %cst_46 = arith.constant 5.000000e-01 : f32
    %144 = vector.broadcast %cst_46 : f32 to vector<8x16x128xf32>
    %145 = arith.mulf %144, %142 : vector<8x16x128xf32>
    %cst_47 = arith.constant 1.000000e+00 : f32
    %146 = vector.broadcast %cst_47 : f32 to vector<8x16x128xf32>
    %147 = arith.subf %145, %146 : vector<8x16x128xf32>
    %148 = arith.mulf %143, %147 : vector<8x16x128xf32>
    %cst_48 = arith.constant 0.666666686 : f32
    %149 = vector.broadcast %cst_48 : f32 to vector<8x16x128xf32>
    %150 = arith.addf %149, %148 : vector<8x16x128xf32>
    %cst_49 = arith.constant 2.000000e+00 : f32
    %151 = vector.broadcast %cst_49 : f32 to vector<8x16x128xf32>
    %152 = arith.subf %151, %142 : vector<8x16x128xf32>
    %cst_50 = arith.constant 0.000000e+00 : f32
    %153 = vector.broadcast %cst_50 : f32 to vector<8x16x128xf32>
    %154 = arith.maximumf %152, %153 : vector<8x16x128xf32>
    %155 = arith.mulf %154, %154 : vector<8x16x128xf32>
    %156 = arith.mulf %155, %154 : vector<8x16x128xf32>
    %cst_51 = arith.constant 0.166666672 : f32
    %157 = vector.broadcast %cst_51 : f32 to vector<8x16x128xf32>
    %158 = arith.mulf %156, %157 : vector<8x16x128xf32>
    %cst_52 = arith.constant 1.000000e+00 : f32
    %159 = vector.broadcast %cst_52 : f32 to vector<8x16x128xf32>
    %160 = arith.cmpf olt, %142, %159 : vector<8x16x128xf32>
    %161 = arith.select %160, %150, %158 : vector<8x16x128xi1>, vector<8x16x128xf32>
    %162 = arith.index_cast %c4_i32 : i32 to index
    %c0_53 = arith.constant 0 : index
    %c0_54 = arith.constant 0 : index
    %163 = vector.load %arg6[%162, %c0_53, %c0_54] : memref<10x16x128xf32, #tpu.memory_space<vmem>>, vector<1x16x128xf32>
    %164 = vector.shape_cast %163 : vector<1x16x128xf32> to vector<16x128xf32>
    %165 = vector.shape_cast %164 : vector<16x128xf32> to vector<1x16x128xf32>
    %166 = vector.broadcast %165 : vector<1x16x128xf32> to vector<8x16x128xf32>
    %167 = arith.mulf %161, %166 : vector<8x16x128xf32>
    %cst_55 = arith.constant dense<0.000000e+00> : vector<8x128xf32>
    %168 = vector.multi_reduction <add>, %167, %cst_55 [1] : vector<8x16x128xf32> to vector<8x128xf32>
    %169 = arith.addf %137, %168 : vector<8x128xf32>
    %c5_i32 = arith.constant 5 : i32
    %170 = arith.index_cast %c5_i32 : i32 to index
    %171 = memref.load %arg3[%170] : memref<10xf32, #tpu.memory_space<smem>>
    %172 = vector.broadcast %171 : f32 to vector<8x16x128xf32>
    %173 = arith.subf %8, %172 : vector<8x16x128xf32>
    %174 = math.absf %173 : vector<8x16x128xf32>
    %175 = arith.mulf %174, %174 : vector<8x16x128xf32>
    %cst_56 = arith.constant 5.000000e-01 : f32
    %176 = vector.broadcast %cst_56 : f32 to vector<8x16x128xf32>
    %177 = arith.mulf %176, %174 : vector<8x16x128xf32>
    %cst_57 = arith.constant 1.000000e+00 : f32
    %178 = vector.broadcast %cst_57 : f32 to vector<8x16x128xf32>
    %179 = arith.subf %177, %178 : vector<8x16x128xf32>
    %180 = arith.mulf %175, %179 : vector<8x16x128xf32>
    %cst_58 = arith.constant 0.666666686 : f32
    %181 = vector.broadcast %cst_58 : f32 to vector<8x16x128xf32>
    %182 = arith.addf %181, %180 : vector<8x16x128xf32>
    %cst_59 = arith.constant 2.000000e+00 : f32
    %183 = vector.broadcast %cst_59 : f32 to vector<8x16x128xf32>
    %184 = arith.subf %183, %174 : vector<8x16x128xf32>
    %cst_60 = arith.constant 0.000000e+00 : f32
    %185 = vector.broadcast %cst_60 : f32 to vector<8x16x128xf32>
    %186 = arith.maximumf %184, %185 : vector<8x16x128xf32>
    %187 = arith.mulf %186, %186 : vector<8x16x128xf32>
    %188 = arith.mulf %187, %186 : vector<8x16x128xf32>
    %cst_61 = arith.constant 0.166666672 : f32
    %189 = vector.broadcast %cst_61 : f32 to vector<8x16x128xf32>
    %190 = arith.mulf %188, %189 : vector<8x16x128xf32>
    %cst_62 = arith.constant 1.000000e+00 : f32
    %191 = vector.broadcast %cst_62 : f32 to vector<8x16x128xf32>
    %192 = arith.cmpf olt, %174, %191 : vector<8x16x128xf32>
    %193 = arith.select %192, %182, %190 : vector<8x16x128xi1>, vector<8x16x128xf32>
    %194 = arith.index_cast %c5_i32 : i32 to index
    %c0_63 = arith.constant 0 : index
    %c0_64 = arith.constant 0 : index
    %195 = vector.load %arg6[%194, %c0_63, %c0_64] : memref<10x16x128xf32, #tpu.memory_space<vmem>>, vector<1x16x128xf32>
    %196 = vector.shape_cast %195 : vector<1x16x128xf32> to vector<16x128xf32>
    %197 = vector.shape_cast %196 : vector<16x128xf32> to vector<1x16x128xf32>
    %198 = vector.broadcast %197 : vector<1x16x128xf32> to vector<8x16x128xf32>
    %199 = arith.mulf %193, %198 : vector<8x16x128xf32>
    %cst_65 = arith.constant dense<0.000000e+00> : vector<8x128xf32>
    %200 = vector.multi_reduction <add>, %199, %cst_65 [1] : vector<8x16x128xf32> to vector<8x128xf32>
    %201 = arith.addf %169, %200 : vector<8x128xf32>
    %c6_i32 = arith.constant 6 : i32
    %202 = arith.index_cast %c6_i32 : i32 to index
    %203 = memref.load %arg3[%202] : memref<10xf32, #tpu.memory_space<smem>>
    %204 = vector.broadcast %203 : f32 to vector<8x16x128xf32>
    %205 = arith.subf %8, %204 : vector<8x16x128xf32>
    %206 = math.absf %205 : vector<8x16x128xf32>
    %207 = arith.mulf %206, %206 : vector<8x16x128xf32>
    %cst_66 = arith.constant 5.000000e-01 : f32
    %208 = vector.broadcast %cst_66 : f32 to vector<8x16x128xf32>
    %209 = arith.mulf %208, %206 : vector<8x16x128xf32>
    %cst_67 = arith.constant 1.000000e+00 : f32
    %210 = vector.broadcast %cst_67 : f32 to vector<8x16x128xf32>
    %211 = arith.subf %209, %210 : vector<8x16x128xf32>
    %212 = arith.mulf %207, %211 : vector<8x16x128xf32>
    %cst_68 = arith.constant 0.666666686 : f32
    %213 = vector.broadcast %cst_68 : f32 to vector<8x16x128xf32>
    %214 = arith.addf %213, %212 : vector<8x16x128xf32>
    %cst_69 = arith.constant 2.000000e+00 : f32
    %215 = vector.broadcast %cst_69 : f32 to vector<8x16x128xf32>
    %216 = arith.subf %215, %206 : vector<8x16x128xf32>
    %cst_70 = arith.constant 0.000000e+00 : f32
    %217 = vector.broadcast %cst_70 : f32 to vector<8x16x128xf32>
    %218 = arith.maximumf %216, %217 : vector<8x16x128xf32>
    %219 = arith.mulf %218, %218 : vector<8x16x128xf32>
    %220 = arith.mulf %219, %218 : vector<8x16x128xf32>
    %cst_71 = arith.constant 0.166666672 : f32
    %221 = vector.broadcast %cst_71 : f32 to vector<8x16x128xf32>
    %222 = arith.mulf %220, %221 : vector<8x16x128xf32>
    %cst_72 = arith.constant 1.000000e+00 : f32
    %223 = vector.broadcast %cst_72 : f32 to vector<8x16x128xf32>
    %224 = arith.cmpf olt, %206, %223 : vector<8x16x128xf32>
    %225 = arith.select %224, %214, %222 : vector<8x16x128xi1>, vector<8x16x128xf32>
    %226 = arith.index_cast %c6_i32 : i32 to index
    %c0_73 = arith.constant 0 : index
    %c0_74 = arith.constant 0 : index
    %227 = vector.load %arg6[%226, %c0_73, %c0_74] : memref<10x16x128xf32, #tpu.memory_space<vmem>>, vector<1x16x128xf32>
    %228 = vector.shape_cast %227 : vector<1x16x128xf32> to vector<16x128xf32>
    %229 = vector.shape_cast %228 : vector<16x128xf32> to vector<1x16x128xf32>
    %230 = vector.broadcast %229 : vector<1x16x128xf32> to vector<8x16x128xf32>
    %231 = arith.mulf %225, %230 : vector<8x16x128xf32>
    %cst_75 = arith.constant dense<0.000000e+00> : vector<8x128xf32>
    %232 = vector.multi_reduction <add>, %231, %cst_75 [1] : vector<8x16x128xf32> to vector<8x128xf32>
    %233 = arith.addf %201, %232 : vector<8x128xf32>
    %c7_i32 = arith.constant 7 : i32
    %234 = arith.index_cast %c7_i32 : i32 to index
    %235 = memref.load %arg3[%234] : memref<10xf32, #tpu.memory_space<smem>>
    %236 = vector.broadcast %235 : f32 to vector<8x16x128xf32>
    %237 = arith.subf %8, %236 : vector<8x16x128xf32>
    %238 = math.absf %237 : vector<8x16x128xf32>
    %239 = arith.mulf %238, %238 : vector<8x16x128xf32>
    %cst_76 = arith.constant 5.000000e-01 : f32
    %240 = vector.broadcast %cst_76 : f32 to vector<8x16x128xf32>
    %241 = arith.mulf %240, %238 : vector<8x16x128xf32>
    %cst_77 = arith.constant 1.000000e+00 : f32
    %242 = vector.broadcast %cst_77 : f32 to vector<8x16x128xf32>
    %243 = arith.subf %241, %242 : vector<8x16x128xf32>
    %244 = arith.mulf %239, %243 : vector<8x16x128xf32>
    %cst_78 = arith.constant 0.666666686 : f32
    %245 = vector.broadcast %cst_78 : f32 to vector<8x16x128xf32>
    %246 = arith.addf %245, %244 : vector<8x16x128xf32>
    %cst_79 = arith.constant 2.000000e+00 : f32
    %247 = vector.broadcast %cst_79 : f32 to vector<8x16x128xf32>
    %248 = arith.subf %247, %238 : vector<8x16x128xf32>
    %cst_80 = arith.constant 0.000000e+00 : f32
    %249 = vector.broadcast %cst_80 : f32 to vector<8x16x128xf32>
    %250 = arith.maximumf %248, %249 : vector<8x16x128xf32>
    %251 = arith.mulf %250, %250 : vector<8x16x128xf32>
    %252 = arith.mulf %251, %250 : vector<8x16x128xf32>
    %cst_81 = arith.constant 0.166666672 : f32
    %253 = vector.broadcast %cst_81 : f32 to vector<8x16x128xf32>
    %254 = arith.mulf %252, %253 : vector<8x16x128xf32>
    %cst_82 = arith.constant 1.000000e+00 : f32
    %255 = vector.broadcast %cst_82 : f32 to vector<8x16x128xf32>
    %256 = arith.cmpf olt, %238, %255 : vector<8x16x128xf32>
    %257 = arith.select %256, %246, %254 : vector<8x16x128xi1>, vector<8x16x128xf32>
    %258 = arith.index_cast %c7_i32 : i32 to index
    %c0_83 = arith.constant 0 : index
    %c0_84 = arith.constant 0 : index
    %259 = vector.load %arg6[%258, %c0_83, %c0_84] : memref<10x16x128xf32, #tpu.memory_space<vmem>>, vector<1x16x128xf32>
    %260 = vector.shape_cast %259 : vector<1x16x128xf32> to vector<16x128xf32>
    %261 = vector.shape_cast %260 : vector<16x128xf32> to vector<1x16x128xf32>
    %262 = vector.broadcast %261 : vector<1x16x128xf32> to vector<8x16x128xf32>
    %263 = arith.mulf %257, %262 : vector<8x16x128xf32>
    %cst_85 = arith.constant dense<0.000000e+00> : vector<8x128xf32>
    %264 = vector.multi_reduction <add>, %263, %cst_85 [1] : vector<8x16x128xf32> to vector<8x128xf32>
    %265 = arith.addf %233, %264 : vector<8x128xf32>
    %c8_i32 = arith.constant 8 : i32
    %266 = arith.index_cast %c8_i32 : i32 to index
    %267 = memref.load %arg3[%266] : memref<10xf32, #tpu.memory_space<smem>>
    %268 = vector.broadcast %267 : f32 to vector<8x16x128xf32>
    %269 = arith.subf %8, %268 : vector<8x16x128xf32>
    %270 = math.absf %269 : vector<8x16x128xf32>
    %271 = arith.mulf %270, %270 : vector<8x16x128xf32>
    %cst_86 = arith.constant 5.000000e-01 : f32
    %272 = vector.broadcast %cst_86 : f32 to vector<8x16x128xf32>
    %273 = arith.mulf %272, %270 : vector<8x16x128xf32>
    %cst_87 = arith.constant 1.000000e+00 : f32
    %274 = vector.broadcast %cst_87 : f32 to vector<8x16x128xf32>
    %275 = arith.subf %273, %274 : vector<8x16x128xf32>
    %276 = arith.mulf %271, %275 : vector<8x16x128xf32>
    %cst_88 = arith.constant 0.666666686 : f32
    %277 = vector.broadcast %cst_88 : f32 to vector<8x16x128xf32>
    %278 = arith.addf %277, %276 : vector<8x16x128xf32>
    %cst_89 = arith.constant 2.000000e+00 : f32
    %279 = vector.broadcast %cst_89 : f32 to vector<8x16x128xf32>
    %280 = arith.subf %279, %270 : vector<8x16x128xf32>
    %cst_90 = arith.constant 0.000000e+00 : f32
    %281 = vector.broadcast %cst_90 : f32 to vector<8x16x128xf32>
    %282 = arith.maximumf %280, %281 : vector<8x16x128xf32>
    %283 = arith.mulf %282, %282 : vector<8x16x128xf32>
    %284 = arith.mulf %283, %282 : vector<8x16x128xf32>
    %cst_91 = arith.constant 0.166666672 : f32
    %285 = vector.broadcast %cst_91 : f32 to vector<8x16x128xf32>
    %286 = arith.mulf %284, %285 : vector<8x16x128xf32>
    %cst_92 = arith.constant 1.000000e+00 : f32
    %287 = vector.broadcast %cst_92 : f32 to vector<8x16x128xf32>
    %288 = arith.cmpf olt, %270, %287 : vector<8x16x128xf32>
    %289 = arith.select %288, %278, %286 : vector<8x16x128xi1>, vector<8x16x128xf32>
    %290 = arith.index_cast %c8_i32 : i32 to index
    %c0_93 = arith.constant 0 : index
    %c0_94 = arith.constant 0 : index
    %291 = vector.load %arg6[%290, %c0_93, %c0_94] : memref<10x16x128xf32, #tpu.memory_space<vmem>>, vector<1x16x128xf32>
    %292 = vector.shape_cast %291 : vector<1x16x128xf32> to vector<16x128xf32>
    %293 = vector.shape_cast %292 : vector<16x128xf32> to vector<1x16x128xf32>
    %294 = vector.broadcast %293 : vector<1x16x128xf32> to vector<8x16x128xf32>
    %295 = arith.mulf %289, %294 : vector<8x16x128xf32>
    %cst_95 = arith.constant dense<0.000000e+00> : vector<8x128xf32>
    %296 = vector.multi_reduction <add>, %295, %cst_95 [1] : vector<8x16x128xf32> to vector<8x128xf32>
    %297 = arith.addf %265, %296 : vector<8x128xf32>
    %c9_i32 = arith.constant 9 : i32
    %298 = arith.index_cast %c9_i32 : i32 to index
    %299 = memref.load %arg3[%298] : memref<10xf32, #tpu.memory_space<smem>>
    %300 = vector.broadcast %299 : f32 to vector<8x16x128xf32>
    %301 = arith.subf %8, %300 : vector<8x16x128xf32>
    %302 = math.absf %301 : vector<8x16x128xf32>
    %303 = arith.mulf %302, %302 : vector<8x16x128xf32>
    %cst_96 = arith.constant 5.000000e-01 : f32
    %304 = vector.broadcast %cst_96 : f32 to vector<8x16x128xf32>
    %305 = arith.mulf %304, %302 : vector<8x16x128xf32>
    %cst_97 = arith.constant 1.000000e+00 : f32
    %306 = vector.broadcast %cst_97 : f32 to vector<8x16x128xf32>
    %307 = arith.subf %305, %306 : vector<8x16x128xf32>
    %308 = arith.mulf %303, %307 : vector<8x16x128xf32>
    %cst_98 = arith.constant 0.666666686 : f32
    %309 = vector.broadcast %cst_98 : f32 to vector<8x16x128xf32>
    %310 = arith.addf %309, %308 : vector<8x16x128xf32>
    %cst_99 = arith.constant 2.000000e+00 : f32
    %311 = vector.broadcast %cst_99 : f32 to vector<8x16x128xf32>
    %312 = arith.subf %311, %302 : vector<8x16x128xf32>
    %cst_100 = arith.constant 0.000000e+00 : f32
    %313 = vector.broadcast %cst_100 : f32 to vector<8x16x128xf32>
    %314 = arith.maximumf %312, %313 : vector<8x16x128xf32>
    %315 = arith.mulf %314, %314 : vector<8x16x128xf32>
    %316 = arith.mulf %315, %314 : vector<8x16x128xf32>
    %cst_101 = arith.constant 0.166666672 : f32
    %317 = vector.broadcast %cst_101 : f32 to vector<8x16x128xf32>
    %318 = arith.mulf %316, %317 : vector<8x16x128xf32>
    %cst_102 = arith.constant 1.000000e+00 : f32
    %319 = vector.broadcast %cst_102 : f32 to vector<8x16x128xf32>
    %320 = arith.cmpf olt, %302, %319 : vector<8x16x128xf32>
    %321 = arith.select %320, %310, %318 : vector<8x16x128xi1>, vector<8x16x128xf32>
    %322 = arith.index_cast %c9_i32 : i32 to index
    %c0_103 = arith.constant 0 : index
    %c0_104 = arith.constant 0 : index
    %323 = vector.load %arg6[%322, %c0_103, %c0_104] : memref<10x16x128xf32, #tpu.memory_space<vmem>>, vector<1x16x128xf32>
    %324 = vector.shape_cast %323 : vector<1x16x128xf32> to vector<16x128xf32>
    %325 = vector.shape_cast %324 : vector<16x128xf32> to vector<1x16x128xf32>
    %326 = vector.broadcast %325 : vector<1x16x128xf32> to vector<8x16x128xf32>
    %327 = arith.mulf %321, %326 : vector<8x16x128xf32>
    %cst_105 = arith.constant dense<0.000000e+00> : vector<8x128xf32>
    %328 = vector.multi_reduction <add>, %327, %cst_105 [1] : vector<8x16x128xf32> to vector<8x128xf32>
    %329 = arith.addf %297, %328 : vector<8x128xf32>
    %c10_i32 = arith.constant 10 : i32
    %c0_106 = arith.constant 0 : index
    %c0_107 = arith.constant 0 : index
    %330 = vector.load %arg8[%c0_106, %c0_107] : memref<8x128xf32, #tpu.memory_space<vmem>>, vector<8x128xf32>
    %331 = arith.addf %330, %329 : vector<8x128xf32>
    %c0_108 = arith.constant 0 : index
    %c0_109 = arith.constant 0 : index
    %332 = vector.load %arg8[%c0_108, %c0_109] : memref<8x128xf32, #tpu.memory_space<vmem>>, vector<8x128xf32>
    tpu.vector_store %arg8[%c0_108, %c0_109], %331 {strides = array<i32>} : memref<8x128xf32, #tpu.memory_space<vmem>>, vector<8x128xf32>,
    %c0_i32_110 = arith.constant 0 : i32
    %333 = arith.cmpi eq, %arg2, %c0_i32_110 : i32
    %334 = arith.extui %333 : i1 to i32
    %c0_i32_111 = arith.constant 0 : i32
    %335 = arith.cmpi ne, %334, %c0_i32_111 : i32
    scf.if %335 {
      %c0_112 = arith.constant 0 : index
      %c0_113 = arith.constant 0 : index
      %336 = vector.load %arg8[%c0_112, %c0_113] : memref<8x128xf32, #tpu.memory_space<vmem>>, vector<8x128xf32>
      %c0_114 = arith.constant 0 : index
      %c0_115 = arith.constant 0 : index
      %337 = vector.load %arg7[%c0_114, %c0_115] : memref<1x128xf32, #tpu.memory_space<vmem>>, vector<1x128xf32>
      %338 = vector.broadcast %337 : vector<1x128xf32> to vector<8x128xf32>
      %339 = arith.addf %336, %338 : vector<8x128xf32>
      %c0_116 = arith.constant 0 : index
      %c0_117 = arith.constant 0 : index
      %340 = vector.load %arg8[%c0_116, %c0_117] : memref<8x128xf32, #tpu.memory_space<vmem>>, vector<8x128xf32>
      tpu.vector_store %arg8[%c0_116, %c0_117], %339 {strides = array<i32>} : memref<8x128xf32, #tpu.memory_space<vmem>>, vector<8x128xf32>,
    } else {
    }
    return
  }
  func.func @transform_0(%arg0: i32, %arg1: i32, %arg2: i32, %arg3: memref<10xf32, #tpu.memory_space<smem>>) -> (i32, i32, i32) {
    %c0_i32 = arith.constant 0 : i32
    %c0_i32_0 = arith.constant 0 : i32
    return %arg0, %arg2, %c0_i32 : i32, i32, i32
  }
  func.func @transform_1(%arg0: i32, %arg1: i32, %arg2: i32, %arg3: memref<10xf32, #tpu.memory_space<smem>>) -> (i32, i32) {
    %c0_i32 = arith.constant 0 : i32
    return %arg2, %arg1 : i32, i32
  }
  func.func @transform_2(%arg0: i32, %arg1: i32, %arg2: i32, %arg3: memref<10xf32, #tpu.memory_space<smem>>) -> (i32, i32, i32) {
    %c0_i32 = arith.constant 0 : i32
    %c0_i32_0 = arith.constant 0 : i32
    return %c0_i32, %arg2, %arg1 : i32, i32, i32
  }
  func.func @transform_3(%arg0: i32, %arg1: i32, %arg2: i32, %arg3: memref<10xf32, #tpu.memory_space<smem>>) -> (i32, i32) {
    %c0_i32 = arith.constant 0 : i32
    %c0_i32_0 = arith.constant 0 : i32
    return %c0_i32, %arg1 : i32, i32
  }
  func.func @transform_4(%arg0: i32, %arg1: i32, %arg2: i32, %arg3: memref<10xf32, #tpu.memory_space<smem>>) -> (i32, i32) {
    %c0_i32 = arith.constant 0 : i32
    return %arg0, %arg1 : i32, i32
  }
}

</mosaic_0001>

<llo_original>
// kernel: tpu_custom_call.1
$region0: #{tpu_custom_call.1}
  #allocation0 [shape = 'u32[]', space=smem, size = 0x4, offset = 0x4, fixed_abs, tag = 'smem constant byte address 0x4 - core index']
  #allocation1 [shape = 'u32[72,128]{1,0:T(1,128)}', space=vmem, size = 0x9000, scoped, tag = 'internal scratch']
  #allocation2 [shape = 's32[1]{0}', space=sflag, size = 0x4, scoped, tag = 'scoped memory for tpu_custom_call.1']
  #allocation3 [shape = 'u8[512]{0}', space=smem, size = 0x200, scoped, tag = 'prefetched SMEM operand 0']
  %s0 = inlined_call_operand.vmem [shape: f32[10], index: 0, kind: input, shape index: {}]
  %s1 = inlined_call_operand.vmem [shape: f32[8,16,1], index: 1, kind: input, shape index: {}]
  %s2 = inlined_call_operand.vmem [shape: f32[16,128], index: 2, kind: input, shape index: {}]
  %s3 = inlined_call_operand.hbm [shape: f32[10,16,128], index: 3, kind: input, shape index: {}]
  %s4 = inlined_call_operand.vmem [shape: f32[1,128], index: 4, kind: input, shape index: {}]
  %s5 = inlined_call_operand.hbm [shape: f32[8,128], index: 5, kind: output, shape index: {}]
  %s6 = sld [smem:[#allocation0]]
  $region38: #{tpu_custom_call.1} parent=0
    _
  %s8 = ssub.s32 1, %s6
  %s9 = scalar_select 0, %s8, %s6
  %s11 = sshll.u32 %s0, 4
  %s12 = int_to_ptr.vmem [resolvable:$true] %s11
  %14 = dma.vmem_to_smem %s12, 16, [#allocation3], [#allocation2]
  %16 = dma.done [#allocation2], 16
  %17 = sfence
  $region1: #{tpu_custom_call.1} parent=0
    #allocation4 [shape = 'u8[81920]{0}', space=vmem, size = 0x14000, scoped, tag = 'input window, operand 3, single buffered']
    #allocation5 [shape = 's32[1]{0}', space=sflag, size = 0x4, scoped, tag = 'scoped memory for tpu_custom_call.1']
    #allocation6 [shape = 's32[1]{0}', space=sflag, size = 0x4, scoped, tag = 'scoped memory for tpu_custom_call.1']
    #allocation7 [shape = 'u8[4096]{0}', space=vmem, size = 0x1000, scoped, tag = 'output window, operand 0, single buffered']
    %18 = vsyncpa [#allocation5], 0
    %19 = vsyncpa [#allocation6], 0
    // Predicated region
    $region2: #{tpu_custom_call.1} parent=1 // pred_check
      _
    $region3: #{tpu_custom_call.1} parent=1 // pred_check_branch
      %21 = sbr.rel (0) target = $region5
    $region4: #{tpu_custom_call.1} parent=1 // pred_region
      _
    $region5: #{tpu_custom_call.1} parent=1 // pred_fallthru
      _
    // Predicated region
    $region6: #{tpu_custom_call.1} parent=1 // pred_check
      _
    $region7: #{tpu_custom_call.1} parent=1 // pred_check_branch
      %23 = sbr.rel (0) target = $region9
    $region8: #{tpu_custom_call.1} parent=1 // pred_region
      _
    $region9: #{tpu_custom_call.1} parent=1 // pred_fallthru
      _
    // Predicated region
    $region10: #{tpu_custom_call.1} parent=1 // pred_check
      _
    $region11: #{tpu_custom_call.1} parent=1 // pred_check_branch
      %25 = sbr.rel (0) target = $region13
    $region12: #{tpu_custom_call.1} parent=1 // pred_region
      %27 = vsyncadd [#allocation5], 0
      %s28 = sshll.u32 %s3, 4
      %s29 = int_to_ptr.hbm [resolvable:$true] %s28
      %s30 = sshll.u32 [#allocation4], 4
      %s31 = int_to_ptr.vmem [resolvable:$true] %s30
      %36 = dma.hbm_to_vmem [thread:$0]  %s29, 2560, %s31, [#allocation5], 128, 128, 8
    $region13: #{tpu_custom_call.1} parent=1 // pred_fallthru
      _
    // Predicated region
    $region14: #{tpu_custom_call.1} parent=1 // pred_check
      _
    $region15: #{tpu_custom_call.1} parent=1 // pred_check_branch
      %38 = sbr.rel (0) target = $region17
    $region16: #{tpu_custom_call.1} parent=1 // pred_region
      _
    $region17: #{tpu_custom_call.1} parent=1 // pred_fallthru
      _
    // Predicated region
    $region18: #{tpu_custom_call.1} parent=1 // pred_check
      _
    $region19: #{tpu_custom_call.1} parent=1 // pred_check_branch
      %40 = sbr.rel (0) target = $region21
    $region20: #{tpu_custom_call.1} parent=1 // pred_region
      %42 = dma.done [#allocation5], 2560
    $region21: #{tpu_custom_call.1} parent=1 // pred_fallthru
      _
    %p43 = scmp.eq.s32.totalorder 0, 0
    // Predicated region
    $region22: #{tpu_custom_call.1} parent=1 // pred_check
      %p44 = pneg %p43
    $region23: #{tpu_custom_call.1} parent=1 // pred_check_branch
      %46 = sbr.rel (%p44) target = $region25
    $region24: #{tpu_custom_call.1} parent=1 // pred_region
      %47 = vst [vmem:[#allocation7] sm:$0xff] 0.0
    $region25: #{tpu_custom_call.1} parent=1 // pred_fallthru
      _
    %v48 = vld [vmem:[%s1] sm:$0xff]
    %v49 = vld [vmem:[%s1 + $0x8] sm:$0xff]
    %v50 = vld [vmem:[%s1 + $0x10] sm:$0xff]
    %v51 = vld [vmem:[%s1 + $0x18] sm:$0xff]
    %v52 = vld [vmem:[%s1 + $0x20] sm:$0xff]
    %v53 = vld [vmem:[%s1 + $0x28] sm:$0xff]
    %v54 = vld [vmem:[%s1 + $0x30] sm:$0xff]
    %v55 = vld [vmem:[%s1 + $0x38] sm:$0xff]
    %v56 = vld [vmem:[%s1 + $0x40] sm:$0xff]
    %v57 = vld [vmem:[%s1 + $0x48] sm:$0xff]
    %v58 = vld [vmem:[%s1 + $0x50] sm:$0xff]
    %v59 = vld [vmem:[%s1 + $0x58] sm:$0xff]
    %v60 = vld [vmem:[%s1 + $0x60] sm:$0xff]
    %v61 = vld [vmem:[%s1 + $0x68] sm:$0xff]
    %v62 = vld [vmem:[%s1 + $0x70] sm:$0xff]
    %v63 = vld [vmem:[%s1 + $0x78] sm:$0xff]
    %v64 = vld [vmem:[%s2] sm:$0xff]
    %v65 = vld [vmem:[%s2 + $0x8] sm:$0xff]
    %67 = vset.pattern.permute.xlu0 0
    %68 = vperm.xlu0 %67, %v48
    %v69 = vpop.permute.xlu0 %68
    %72 = vset.pattern.permute.xlu0 0
    %73 = vperm.xlu0 %72, %v49
    %v74 = vpop.permute.xlu0 %73
    %77 = vset.pattern.permute.xlu0 0
    %78 = vperm.xlu0 %77, %v50
    %v79 = vpop.permute.xlu0 %78
    %82 = vset.pattern.permute.xlu0 0
    %83 = vperm.xlu0 %82, %v51
    %v84 = vpop.permute.xlu0 %83
    %87 = vset.pattern.permute.xlu0 0
    %88 = vperm.xlu0 %87, %v52
    %v89 = vpop.permute.xlu0 %88
    %92 = vset.pattern.permute.xlu0 0
    %93 = vperm.xlu0 %92, %v53
    %v94 = vpop.permute.xlu0 %93
    %97 = vset.pattern.permute.xlu0 0
    %98 = vperm.xlu0 %97, %v54
    %v99 = vpop.permute.xlu0 %98
    %102 = vset.pattern.permute.xlu0 0
    %103 = vperm.xlu0 %102, %v55
    %v104 = vpop.permute.xlu0 %103
    %107 = vset.pattern.permute.xlu0 0
    %108 = vperm.xlu0 %107, %v56
    %v109 = vpop.permute.xlu0 %108
    %112 = vset.pattern.permute.xlu0 0
    %113 = vperm.xlu0 %112, %v57
    %v114 = vpop.permute.xlu0 %113
    %117 = vset.pattern.permute.xlu0 0
    %118 = vperm.xlu0 %117, %v58
    %v119 = vpop.permute.xlu0 %118
    %122 = vset.pattern.permute.xlu0 0
    %123 = vperm.xlu0 %122, %v59
    %v124 = vpop.permute.xlu0 %123
    %127 = vset.pattern.permute.xlu0 0
    %128 = vperm.xlu0 %127, %v60
    %v129 = vpop.permute.xlu0 %128
    %132 = vset.pattern.permute.xlu0 0
    %133 = vperm.xlu0 %132, %v61
    %v134 = vpop.permute.xlu0 %133
    %137 = vset.pattern.permute.xlu0 0
    %138 = vperm.xlu0 %137, %v62
    %v139 = vpop.permute.xlu0 %138
    %142 = vset.pattern.permute.xlu0 0
    %143 = vperm.xlu0 %142, %v63
    %v144 = vpop.permute.xlu0 %143
    %v146 = vmul.f32 %v69, %v64
    %v147 = vmul.f32 %v74, %v65
    %v148 = vmul.f32 %v79, %v64
    %v149 = vmul.f32 %v84, %v65
    %v150 = vmul.f32 %v89, %v64
    %v151 = vmul.f32 %v94, %v65
    %v152 = vmul.f32 %v99, %v64
    %v153 = vmul.f32 %v104, %v65
    %v154 = vmul.f32 %v109, %v64
    %v155 = vmul.f32 %v114, %v65
    %v156 = vmul.f32 %v119, %v64
    %v157 = vmul.f32 %v124, %v65
    %v158 = vmul.f32 %v129, %v64
    %v159 = vmul.f32 %v134, %v65
    %v160 = vmul.f32 %v139, %v64
    %v161 = vmul.f32 %v144, %v65
    %s162 = sld [smem:[#allocation3]]
    %v163 = vstv %s162
    %v164 = vsub.f32 %v146, %v163
    %v165 = vsub.f32 %v147, %v163
    %v166 = vsub.f32 %v148, %v163
    %v167 = vsub.f32 %v149, %v163
    %v168 = vsub.f32 %v150, %v163
    %v169 = vsub.f32 %v151, %v163
    %v170 = vsub.f32 %v152, %v163
    %v171 = vsub.f32 %v153, %v163
    %v172 = vsub.f32 %v154, %v163
    %v173 = vsub.f32 %v155, %v163
    %v174 = vsub.f32 %v156, %v163
    %v175 = vsub.f32 %v157, %v163
    %v176 = vsub.f32 %v158, %v163
    %v177 = vsub.f32 %v159, %v163
    %v178 = vsub.f32 %v160, %v163
    %v179 = vsub.f32 %v161, %v163
    %v180 = vand.u32 2147483647, %v164
    %v181 = vand.u32 2147483647, %v165
    %v182 = vand.u32 2147483647, %v166
    %v183 = vand.u32 2147483647, %v167
    %v184 = vand.u32 2147483647, %v168
    %v185 = vand.u32 2147483647, %v169
    %v186 = vand.u32 2147483647, %v170
    %v187 = vand.u32 2147483647, %v171
    %v188 = vand.u32 2147483647, %v172
    %v189 = vand.u32 2147483647, %v173
    %v190 = vand.u32 2147483647, %v174
    %v191 = vand.u32 2147483647, %v175
    %v192 = vand.u32 2147483647, %v176
    %v193 = vand.u32 2147483647, %v177
    %v194 = vand.u32 2147483647, %v178
    %v195 = vand.u32 2147483647, %v179
    %v196 = vmul.f32 %v180, %v180
    %v197 = vmul.f32 %v181, %v181
    %v198 = vmul.f32 %v182, %v182
    %v199 = vmul.f32 %v183, %v183
    %v200 = vmul.f32 %v184, %v184
    %v201 = vmul.f32 %v185, %v185
    %v202 = vmul.f32 %v186, %v186
    %v203 = vmul.f32 %v187, %v187
    %v204 = vmul.f32 %v188, %v188
    %v205 = vmul.f32 %v189, %v189
    %v206 = vmul.f32 %v190, %v190
    %v207 = vmul.f32 %v191, %v191
    %v208 = vmul.f32 %v192, %v192
    %v209 = vmul.f32 %v193, %v193
    %v210 = vmul.f32 %v194, %v194
    %v211 = vmul.f32 %v195, %v195
    %v212 = vmul.f32 %v180, 0.5
    %v213 = vmul.f32 %v181, 0.5
    %v214 = vmul.f32 %v182, 0.5
    %v215 = vmul.f32 %v183, 0.5
    %v216 = vmul.f32 %v184, 0.5
    %v217 = vmul.f32 %v185, 0.5
    %v218 = vmul.f32 %v186, 0.5
    %v219 = vmul.f32 %v187, 0.5
    %v220 = vmul.f32 %v188, 0.5
    %v221 = vmul.f32 %v189, 0.5
    %v222 = vmul.f32 %v190, 0.5
    %v223 = vmul.f32 %v191, 0.5
    %v224 = vmul.f32 %v192, 0.5
    %v225 = vmul.f32 %v193, 0.5
    %v226 = vmul.f32 %v194, 0.5
    %v227 = vmul.f32 %v195, 0.5
    %v228 = vsub.f32 %v212, 1.0
    %v229 = vsub.f32 %v213, 1.0
    %v230 = vsub.f32 %v214, 1.0
    %v231 = vsub.f32 %v215, 1.0
    %v232 = vsub.f32 %v216, 1.0
    %v233 = vsub.f32 %v217, 1.0
    %v234 = vsub.f32 %v218, 1.0
    %v235 = vsub.f32 %v219, 1.0
    %v236 = vsub.f32 %v220, 1.0
    %v237 = vsub.f32 %v221, 1.0
    %v238 = vsub.f32 %v222, 1.0
    %v239 = vsub.f32 %v223, 1.0
    %v240 = vsub.f32 %v224, 1.0
    %v241 = vsub.f32 %v225, 1.0
    %v242 = vsub.f32 %v226, 1.0
    %v243 = vsub.f32 %v227, 1.0
    %v244 = vmul.f32 %v196, %v228
    %v245 = vmul.f32 %v197, %v229
    %v246 = vmul.f32 %v198, %v230
    %v247 = vmul.f32 %v199, %v231
    %v248 = vmul.f32 %v200, %v232
    %v249 = vmul.f32 %v201, %v233
    %v250 = vmul.f32 %v202, %v234
    %v251 = vmul.f32 %v203, %v235
    %v252 = vmul.f32 %v204, %v236
    %v253 = vmul.f32 %v205, %v237
    %v254 = vmul.f32 %v206, %v238
    %v255 = vmul.f32 %v207, %v239
    %v256 = vmul.f32 %v208, %v240
    %v257 = vmul.f32 %v209, %v241
    %v258 = vmul.f32 %v210, %v242
    %v259 = vmul.f32 %v211, %v243
    %v260 = vadd.f32 %v244, 0.6666667
    %v261 = vadd.f32 %v245, 0.6666667
    %v262 = vadd.f32 %v246, 0.6666667
    %v263 = vadd.f32 %v247, 0.6666667
    %v264 = vadd.f32 %v248, 0.6666667
    %v265 = vadd.f32 %v249, 0.6666667
    %v266 = vadd.f32 %v250, 0.6666667
    %v267 = vadd.f32 %v251, 0.6666667
    %v268 = vadd.f32 %v252, 0.6666667
    %v269 = vadd.f32 %v253, 0.6666667
    %v270 = vadd.f32 %v254, 0.6666667
    %v271 = vadd.f32 %v255, 0.6666667
    %v272 = vadd.f32 %v256, 0.6666667
    %v273 = vadd.f32 %v257, 0.6666667
    %v274 = vadd.f32 %v258, 0.6666667
    %v275 = vadd.f32 %v259, 0.6666667
    %v276 = vsub.f32 2.0, %v180
    %v277 = vsub.f32 2.0, %v181
    %v278 = vsub.f32 2.0, %v182
    %v279 = vsub.f32 2.0, %v183
    %v280 = vsub.f32 2.0, %v184
    %v281 = vsub.f32 2.0, %v185
    %v282 = vsub.f32 2.0, %v186
    %v283 = vsub.f32 2.0, %v187
    %v284 = vsub.f32 2.0, %v188
    %v285 = vsub.f32 2.0, %v189
    %v286 = vsub.f32 2.0, %v190
    %v287 = vsub.f32 2.0, %v191
    %v288 = vsub.f32 2.0, %v192
    %v289 = vsub.f32 2.0, %v193
    %v290 = vsub.f32 2.0, %v194
    %v291 = vsub.f32 2.0, %v195
    %v292 = vmax.f32 %v276, 0.0
    %v293 = vmax.f32 %v277, 0.0
    %v294 = vmax.f32 %v278, 0.0
    %v295 = vmax.f32 %v279, 0.0
    %v296 = vmax.f32 %v280, 0.0
    %v297 = vmax.f32 %v281, 0.0
    %v298 = vmax.f32 %v282, 0.0
    %v299 = vmax.f32 %v283, 0.0
    %v300 = vmax.f32 %v284, 0.0
    %v301 = vmax.f32 %v285, 0.0
    %v302 = vmax.f32 %v286, 0.0
    %v303 = vmax.f32 %v287, 0.0
    %v304 = vmax.f32 %v288, 0.0
    %v305 = vmax.f32 %v289, 0.0
    %v306 = vmax.f32 %v290, 0.0
    %v307 = vmax.f32 %v291, 0.0
    %v308 = vmul.f32 %v292, %v292
    %v309 = vmul.f32 %v293, %v293
    %v310 = vmul.f32 %v294, %v294
    %v311 = vmul.f32 %v295, %v295
    %v312 = vmul.f32 %v296, %v296
    %v313 = vmul.f32 %v297, %v297
    %v314 = vmul.f32 %v298, %v298
    %v315 = vmul.f32 %v299, %v299
    %v316 = vmul.f32 %v300, %v300
    %v317 = vmul.f32 %v301, %v301
    %v318 = vmul.f32 %v302, %v302
    %v319 = vmul.f32 %v303, %v303
    %v320 = vmul.f32 %v304, %v304
    %v321 = vmul.f32 %v305, %v305
    %v322 = vmul.f32 %v306, %v306
    %v323 = vmul.f32 %v307, %v307
    %v324 = vmul.f32 %v308, %v292
    %v325 = vmul.f32 %v309, %v293
    %v326 = vmul.f32 %v310, %v294
    %v327 = vmul.f32 %v311, %v295
    %v328 = vmul.f32 %v312, %v296
    %v329 = vmul.f32 %v313, %v297
    %v330 = vmul.f32 %v314, %v298
    %v331 = vmul.f32 %v315, %v299
    %v332 = vmul.f32 %v316, %v300
    %v333 = vmul.f32 %v317, %v301
    %v334 = vmul.f32 %v318, %v302
    %v335 = vmul.f32 %v319, %v303
    %v336 = vmul.f32 %v320, %v304
    %v337 = vmul.f32 %v321, %v305
    %v338 = vmul.f32 %v322, %v306
    %v339 = vmul.f32 %v323, %v307
    %v340 = vmul.f32 %v324, 0.16666667
    %v341 = vmul.f32 %v325, 0.16666667
    %v342 = vmul.f32 %v326, 0.16666667
    %v343 = vmul.f32 %v327, 0.16666667
    %v344 = vmul.f32 %v328, 0.16666667
    %v345 = vmul.f32 %v329, 0.16666667
    %v346 = vmul.f32 %v330, 0.16666667
    %v347 = vmul.f32 %v331, 0.16666667
    %v348 = vmul.f32 %v332, 0.16666667
    %v349 = vmul.f32 %v333, 0.16666667
    %v350 = vmul.f32 %v334, 0.16666667
    %v351 = vmul.f32 %v335, 0.16666667
    %v352 = vmul.f32 %v336, 0.16666667
    %v353 = vmul.f32 %v337, 0.16666667
    %v354 = vmul.f32 %v338, 0.16666667
    %v355 = vmul.f32 %v339, 0.16666667
    %vm356 = vcmp.lt.f32.partialorder %v180, 1.0
    %vm357 = vcmp.lt.f32.partialorder %v181, 1.0
    %vm358 = vcmp.lt.f32.partialorder %v182, 1.0
    %vm359 = vcmp.lt.f32.partialorder %v183, 1.0
    %vm360 = vcmp.lt.f32.partialorder %v184, 1.0
    %vm361 = vcmp.lt.f32.partialorder %v185, 1.0
    %vm362 = vcmp.lt.f32.partialorder %v186, 1.0
    %vm363 = vcmp.lt.f32.partialorder %v187, 1.0
    %vm364 = vcmp.lt.f32.partialorder %v188, 1.0
    %vm365 = vcmp.lt.f32.partialorder %v189, 1.0
    %vm366 = vcmp.lt.f32.partialorder %v190, 1.0
    %vm367 = vcmp.lt.f32.partialorder %v191, 1.0
    %vm368 = vcmp.lt.f32.partialorder %v192, 1.0
    %vm369 = vcmp.lt.f32.partialorder %v193, 1.0
    %vm370 = vcmp.lt.f32.partialorder %v194, 1.0
    %vm371 = vcmp.lt.f32.partialorder %v195, 1.0
    %v372 = vsel %vm356, %v260, %v340
    %v373 = vsel %vm357, %v261, %v341
    %v374 = vsel %vm358, %v262, %v342
    %v375 = vsel %vm359, %v263, %v343
    %v376 = vsel %vm360, %v264, %v344
    %v377 = vsel %vm361, %v265, %v345
    %v378 = vsel %vm362, %v266, %v346
    %v379 = vsel %vm363, %v267, %v347
    %v380 = vsel %vm364, %v268, %v348
    %v381 = vsel %vm365, %v269, %v349
    %v382 = vsel %vm366, %v270, %v350
    %v383 = vsel %vm367, %v271, %v351
    %v384 = vsel %vm368, %v272, %v352
    %v385 = vsel %vm369, %v273, %v353
    %v386 = vsel %vm370, %v274, %v354
    %v387 = vsel %vm371, %v275, %v355
    %v388 = vld [vmem:[#allocation4] sm:$0xff]
    %v389 = vld [vmem:[#allocation4 + $0x8] sm:$0xff]
    %v390 = vmul.f32 %v372, %v388
    %v391 = vmul.f32 %v373, %v389
    %v392 = vmul.f32 %v374, %v388
    %v393 = vmul.f32 %v375, %v389
    %v394 = vmul.f32 %v376, %v388
    %v395 = vmul.f32 %v377, %v389
    %v396 = vmul.f32 %v378, %v388
    %v397 = vmul.f32 %v379, %v389
    %v398 = vmul.f32 %v380, %v388
    %v399 = vmul.f32 %v381, %v389
    %v400 = vmul.f32 %v382, %v388
    %v401 = vmul.f32 %v383, %v389
    %v402 = vmul.f32 %v384, %v388
    %v403 = vmul.f32 %v385, %v389
    %v404 = vmul.f32 %v386, %v388
    %v405 = vmul.f32 %v387, %v389
    %v406 = vadd.f32 %v390, %v391
    %v407 = vrot.slane %v406, 4
    %v408 = vadd.f32 %v406, %v407
    %v409 = vrot.slane %v408, 2
    %v410 = vadd.f32 %v408, %v409
    %v411 = vrot.slane %v410, 1
    %v412 = vadd.f32 %v410, %v411
    %v413 = vadd.f32 %v392, %v393
    %v414 = vrot.slane %v413, 4
    %v415 = vadd.f32 %v413, %v414
    %v416 = vrot.slane %v415, 2
    %v417 = vadd.f32 %v415, %v416
    %v418 = vrot.slane %v417, 1
    %v419 = vadd.f32 %v417, %v418
    %v420 = vadd.f32 %v394, %v395
    %v421 = vrot.slane %v420, 4
    %v422 = vadd.f32 %v420, %v421
    %v423 = vrot.slane %v422, 2
    %v424 = vadd.f32 %v422, %v423
    %v425 = vrot.slane %v424, 1
    %v426 = vadd.f32 %v424, %v425
    %v427 = vadd.f32 %v396, %v397
    %v428 = vrot.slane %v427, 4
    %v429 = vadd.f32 %v427, %v428
    %v430 = vrot.slane %v429, 2
    %v431 = vadd.f32 %v429, %v430
    %v432 = vrot.slane %v431, 1
    %v433 = vadd.f32 %v431, %v432
    %v434 = vadd.f32 %v398, %v399
    %v435 = vrot.slane %v434, 4
    %v436 = vadd.f32 %v434, %v435
    %v437 = vrot.slane %v436, 2
    %v438 = vadd.f32 %v436, %v437
    %v439 = vrot.slane %v438, 1
    %v440 = vadd.f32 %v438, %v439
    %v441 = vadd.f32 %v400, %v401
    %v442 = vrot.slane %v441, 4
    %v443 = vadd.f32 %v441, %v442
    %v444 = vrot.slane %v443, 2
    %v445 = vadd.f32 %v443, %v444
    %v446 = vrot.slane %v445, 1
    %v447 = vadd.f32 %v445, %v446
    %v448 = vadd.f32 %v402, %v403
    %v449 = vrot.slane %v448, 4
    %v450 = vadd.f32 %v448, %v449
    %v451 = vrot.slane %v450, 2
    %v452 = vadd.f32 %v450, %v451
    %v453 = vrot.slane %v452, 1
    %v454 = vadd.f32 %v452, %v453
    %v455 = vadd.f32 %v404, %v405
    %v456 = vrot.slane %v455, 4
    %v457 = vadd.f32 %v455, %v456
    %v458 = vrot.slane %v457, 2
    %v459 = vadd.f32 %v457, %v458
    %v460 = vrot.slane %v459, 1
    %v461 = vadd.f32 %v459, %v460
    %v462 = vadd.f32 %v412, 0.0
    %v463 = vadd.f32 %v419, 0.0
    %v464 = vadd.f32 %v426, 0.0
    %v465 = vadd.f32 %v433, 0.0
    %v466 = vadd.f32 %v440, 0.0
    %v467 = vadd.f32 %v447, 0.0
    %v468 = vadd.f32 %v454, 0.0
    %v469 = vadd.f32 %v461, 0.0
    %s470 = sld [smem:[#allocation3 + $0x1]]
    %v471 = vstv %s470
    %v472 = vsub.f32 %v146, %v471
    %v473 = vsub.f32 %v147, %v471
    %v474 = vsub.f32 %v148, %v471
    %v475 = vsub.f32 %v149, %v471
    %v476 = vsub.f32 %v150, %v471
    %v477 = vsub.f32 %v151, %v471
    %v478 = vsub.f32 %v152, %v471
    %v479 = vsub.f32 %v153, %v471
    %v480 = vsub.f32 %v154, %v471
    %v481 = vsub.f32 %v155, %v471
    %v482 = vsub.f32 %v156, %v471
    %v483 = vsub.f32 %v157, %v471
    %v484 = vsub.f32 %v158, %v471
    %v485 = vsub.f32 %v159, %v471
    %v486 = vsub.f32 %v160, %v471
    %v487 = vsub.f32 %v161, %v471
    %v488 = vand.u32 2147483647, %v472
    %v489 = vand.u32 2147483647, %v473
    %v490 = vand.u32 2147483647, %v474
    %v491 = vand.u32 2147483647, %v475
    %v492 = vand.u32 2147483647, %v476
    %v493 = vand.u32 2147483647, %v477
    %v494 = vand.u32 2147483647, %v478
    %v495 = vand.u32 2147483647, %v479
    %v496 = vand.u32 2147483647, %v480
    %v497 = vand.u32 2147483647, %v481
    %v498 = vand.u32 2147483647, %v482
    %v499 = vand.u32 2147483647, %v483
    %v500 = vand.u32 2147483647, %v484
    %v501 = vand.u32 2147483647, %v485
    %v502 = vand.u32 2147483647, %v486
    %v503 = vand.u32 2147483647, %v487
    %v504 = vmul.f32 %v488, %v488
    %v505 = vmul.f32 %v489, %v489
    %v506 = vmul.f32 %v490, %v490
    %v507 = vmul.f32 %v491, %v491
    %v508 = vmul.f32 %v492, %v492
    %v509 = vmul.f32 %v493, %v493
    %v510 = vmul.f32 %v494, %v494
    %v511 = vmul.f32 %v495, %v495
    %v512 = vmul.f32 %v496, %v496
    %v513 = vmul.f32 %v497, %v497
    %v514 = vmul.f32 %v498, %v498
    %v515 = vmul.f32 %v499, %v499
    %v516 = vmul.f32 %v500, %v500
    %v517 = vmul.f32 %v501, %v501
    %v518 = vmul.f32 %v502, %v502
    %v519 = vmul.f32 %v503, %v503
    %v520 = vmul.f32 %v488, 0.5
    %v521 = vmul.f32 %v489, 0.5
    %v522 = vmul.f32 %v490, 0.5
    %v523 = vmul.f32 %v491, 0.5
    %v524 = vmul.f32 %v492, 0.5
    %v525 = vmul.f32 %v493, 0.5
    %v526 = vmul.f32 %v494, 0.5
    %v527 = vmul.f32 %v495, 0.5
    %v528 = vmul.f32 %v496, 0.5
    %v529 = vmul.f32 %v497, 0.5
    %v530 = vmul.f32 %v498, 0.5
    %v531 = vmul.f32 %v499, 0.5
    %v532 = vmul.f32 %v500, 0.5
    %v533 = vmul.f32 %v501, 0.5
    %v534 = vmul.f32 %v502, 0.5
    %v535 = vmul.f32 %v503, 0.5
    %v536 = vsub.f32 %v520, 1.0
    %v537 = vsub.f32 %v521, 1.0
    %v538 = vsub.f32 %v522, 1.0
    %v539 = vsub.f32 %v523, 1.0
    %v540 = vsub.f32 %v524, 1.0
    %v541 = vsub.f32 %v525, 1.0
    %v542 = vsub.f32 %v526, 1.0
    %v543 = vsub.f32 %v527, 1.0
    %v544 = vsub.f32 %v528, 1.0
    %v545 = vsub.f32 %v529, 1.0
    %v546 = vsub.f32 %v530, 1.0
    %v547 = vsub.f32 %v531, 1.0
    %v548 = vsub.f32 %v532, 1.0
    %v549 = vsub.f32 %v533, 1.0
    %v550 = vsub.f32 %v534, 1.0
    %v551 = vsub.f32 %v535, 1.0
    %v552 = vmul.f32 %v504, %v536
    %v553 = vmul.f32 %v505, %v537
    %v554 = vmul.f32 %v506, %v538
    %v555 = vmul.f32 %v507, %v539
    %v556 = vmul.f32 %v508, %v540
    %v557 = vmul.f32 %v509, %v541
    %v558 = vmul.f32 %v510, %v542
    %v559 = vmul.f32 %v511, %v543
    %v560 = vmul.f32 %v512, %v544
    %v561 = vmul.f32 %v513, %v545
    %v562 = vmul.f32 %v514, %v546
    %v563 = vmul.f32 %v515, %v547
    %v564 = vmul.f32 %v516, %v548
    %v565 = vmul.f32 %v517, %v549
    %v566 = vmul.f32 %v518, %v550
    %v567 = vmul.f32 %v519, %v551
    %v568 = vadd.f32 %v552, 0.6666667
    %v569 = vadd.f32 %v553, 0.6666667
    %v570 = vadd.f32 %v554, 0.6666667
    %v571 = vadd.f32 %v555, 0.6666667
    %v572 = vadd.f32 %v556, 0.6666667
    %v573 = vadd.f32 %v557, 0.6666667
    %v574 = vadd.f32 %v558, 0.6666667
    %v575 = vadd.f32 %v559, 0.6666667
    %v576 = vadd.f32 %v560, 0.6666667
    %v577 = vadd.f32 %v561, 0.6666667
    %v578 = vadd.f32 %v562, 0.6666667
    %v579 = vadd.f32 %v563, 0.6666667
    %v580 = vadd.f32 %v564, 0.6666667
    %v581 = vadd.f32 %v565, 0.6666667
    %v582 = vadd.f32 %v566, 0.6666667
    %v583 = vadd.f32 %v567, 0.6666667
    %v584 = vsub.f32 2.0, %v488
    %v585 = vsub.f32 2.0, %v489
    %v586 = vsub.f32 2.0, %v490
    %v587 = vsub.f32 2.0, %v491
    %v588 = vsub.f32 2.0, %v492
    %v589 = vsub.f32 2.0, %v493
    %v590 = vsub.f32 2.0, %v494
    %v591 = vsub.f32 2.0, %v495
    %v592 = vsub.f32 2.0, %v496
    %v593 = vsub.f32 2.0, %v497
    %v594 = vsub.f32 2.0, %v498
    %v595 = vsub.f32 2.0, %v499
    %v596 = vsub.f32 2.0, %v500
    %v597 = vsub.f32 2.0, %v501
    %v598 = vsub.f32 2.0, %v502
    %v599 = vsub.f32 2.0, %v503
    %v600 = vmax.f32 %v584, 0.0
    %v601 = vmax.f32 %v585, 0.0
    %v602 = vmax.f32 %v586, 0.0
    %v603 = vmax.f32 %v587, 0.0
    %v604 = vmax.f32 %v588, 0.0
    %v605 = vmax.f32 %v589, 0.0
    %v606 = vmax.f32 %v590, 0.0
    %v607 = vmax.f32 %v591, 0.0
    %v608 = vmax.f32 %v592, 0.0
    %v609 = vmax.f32 %v593, 0.0
    %v610 = vmax.f32 %v594, 0.0
    %v611 = vmax.f32 %v595, 0.0
    %v612 = vmax.f32 %v596, 0.0
    %v613 = vmax.f32 %v597, 0.0
    %v614 = vmax.f32 %v598, 0.0
    %v615 = vmax.f32 %v599, 0.0
    %v616 = vmul.f32 %v600, %v600
    %v617 = vmul.f32 %v601, %v601
    %v618 = vmul.f32 %v602, %v602
    %v619 = vmul.f32 %v603, %v603
    %v620 = vmul.f32 %v604, %v604
    %v621 = vmul.f32 %v605, %v605
    %v622 = vmul.f32 %v606, %v606
    %v623 = vmul.f32 %v607, %v607
    %v624 = vmul.f32 %v608, %v608
    %v625 = vmul.f32 %v609, %v609
    %v626 = vmul.f32 %v610, %v610
    %v627 = vmul.f32 %v611, %v611
    %v628 = vmul.f32 %v612, %v612
    %v629 = vmul.f32 %v613, %v613
    %v630 = vmul.f32 %v614, %v614
    %v631 = vmul.f32 %v615, %v615
    %v632 = vmul.f32 %v616, %v600
    %v633 = vmul.f32 %v617, %v601
    %v634 = vmul.f32 %v618, %v602
    %v635 = vmul.f32 %v619, %v603
    %v636 = vmul.f32 %v620, %v604
    %v637 = vmul.f32 %v621, %v605
    %v638 = vmul.f32 %v622, %v606
    %v639 = vmul.f32 %v623, %v607
    %v640 = vmul.f32 %v624, %v608
    %v641 = vmul.f32 %v625, %v609
    %v642 = vmul.f32 %v626, %v610
    %v643 = vmul.f32 %v627, %v611
    %v644 = vmul.f32 %v628, %v612
    %v645 = vmul.f32 %v629, %v613
    %v646 = vmul.f32 %v630, %v614
    %v647 = vmul.f32 %v631, %v615
    %v648 = vmul.f32 %v632, 0.16666667
    %v649 = vmul.f32 %v633, 0.16666667
    %v650 = vmul.f32 %v634, 0.16666667
    %v651 = vmul.f32 %v635, 0.16666667
    %v652 = vmul.f32 %v636, 0.16666667
    %v653 = vmul.f32 %v637, 0.16666667
    %v654 = vmul.f32 %v638, 0.16666667
    %v655 = vmul.f32 %v639, 0.16666667
    %v656 = vmul.f32 %v640, 0.16666667
    %v657 = vmul.f32 %v641, 0.16666667
    %v658 = vmul.f32 %v642, 0.16666667
    %v659 = vmul.f32 %v643, 0.16666667
    %v660 = vmul.f32 %v644, 0.16666667
    %v661 = vmul.f32 %v645, 0.16666667
    %v662 = vmul.f32 %v646, 0.16666667
    %v663 = vmul.f32 %v647, 0.16666667
    %vm664 = vcmp.lt.f32.partialorder %v488, 1.0
    %vm665 = vcmp.lt.f32.partialorder %v489, 1.0
    %vm666 = vcmp.lt.f32.partialorder %v490, 1.0
    %vm667 = vcmp.lt.f32.partialorder %v491, 1.0
    %vm668 = vcmp.lt.f32.partialorder %v492, 1.0
    %vm669 = vcmp.lt.f32.partialorder %v493, 1.0
    %vm670 = vcmp.lt.f32.partialorder %v494, 1.0
    %vm671 = vcmp.lt.f32.partialorder %v495, 1.0
    %vm672 = vcmp.lt.f32.partialorder %v496, 1.0
    %vm673 = vcmp.lt.f32.partialorder %v497, 1.0
    %vm674 = vcmp.lt.f32.partialorder %v498, 1.0
    %vm675 = vcmp.lt.f32.partialorder %v499, 1.0
    %vm676 = vcmp.lt.f32.partialorder %v500, 1.0
    %vm677 = vcmp.lt.f32.partialorder %v501, 1.0
    %vm678 = vcmp.lt.f32.partialorder %v502, 1.0
    %vm679 = vcmp.lt.f32.partialorder %v503, 1.0
    %v680 = vsel %vm664, %v568, %v648
    %v681 = vsel %vm665, %v569, %v649
    %v682 = vsel %vm666, %v570, %v650
    %v683 = vsel %vm667, %v571, %v651
    %v684 = vsel %vm668, %v572, %v652
    %v685 = vsel %vm669, %v573, %v653
    %v686 = vsel %vm670, %v574, %v654
    %v687 = vsel %vm671, %v575, %v655
    %v688 = vsel %vm672, %v576, %v656
    %v689 = vsel %vm673, %v577, %v657
    %v690 = vsel %vm674, %v578, %v658
    %v691 = vsel %vm675, %v579, %v659
    %v692 = vsel %vm676, %v580, %v660
    %v693 = vsel %vm677, %v581, %v661
    %v694 = vsel %vm678, %v582, %v662
    %v695 = vsel %vm679, %v583, %v663
    %s696 = scalar_lea.vmem [#allocation4], 16
    %v697 = vld [vmem:[%s696] sm:$0xff]
    %v698 = vld [vmem:[%s696 + $0x8] sm:$0xff]
    %v699 = vmul.f32 %v680, %v697
    %v700 = vmul.f32 %v681, %v698
    %v701 = vmul.f32 %v682, %v697
    %v702 = vmul.f32 %v683, %v698
    %v703 = vmul.f32 %v684, %v697
    %v704 = vmul.f32 %v685, %v698
    %v705 = vmul.f32 %v686, %v697
    %v706 = vmul.f32 %v687, %v698
    %v707 = vmul.f32 %v688, %v697
    %v708 = vmul.f32 %v689, %v698
    %v709 = vmul.f32 %v690, %v697
    %v710 = vmul.f32 %v691, %v698
    %v711 = vmul.f32 %v692, %v697
    %v712 = vmul.f32 %v693, %v698
    %v713 = vmul.f32 %v694, %v697
    %v714 = vmul.f32 %v695, %v698
    %v715 = vadd.f32 %v699, %v700
    %v716 = vrot.slane %v715, 4
    %v717 = vadd.f32 %v715, %v716
    %v718 = vrot.slane %v717, 2
    %v719 = vadd.f32 %v717, %v718
    %v720 = vrot.slane %v719, 1
    %v721 = vadd.f32 %v719, %v720
    %v722 = vadd.f32 %v701, %v702
    %v723 = vrot.slane %v722, 4
    %v724 = vadd.f32 %v722, %v723
    %v725 = vrot.slane %v724, 2
    %v726 = vadd.f32 %v724, %v725
    %v727 = vrot.slane %v726, 1
    %v728 = vadd.f32 %v726, %v727
    %v729 = vadd.f32 %v703, %v704
    %v730 = vrot.slane %v729, 4
    %v731 = vadd.f32 %v729, %v730
    %v732 = vrot.slane %v731, 2
    %v733 = vadd.f32 %v731, %v732
    %v734 = vrot.slane %v733, 1
    %v735 = vadd.f32 %v733, %v734
    %v736 = vadd.f32 %v705, %v706
    %v737 = vrot.slane %v736, 4
    %v738 = vadd.f32 %v736, %v737
    %v739 = vrot.slane %v738, 2
    %v740 = vadd.f32 %v738, %v739
    %v741 = vrot.slane %v740, 1
    %v742 = vadd.f32 %v740, %v741
    %v743 = vadd.f32 %v707, %v708
    %v744 = vrot.slane %v743, 4
    %v745 = vadd.f32 %v743, %v744
    %v746 = vrot.slane %v745, 2
    %v747 = vadd.f32 %v745, %v746
    %v748 = vrot.slane %v747, 1
    %v749 = vadd.f32 %v747, %v748
    %v750 = vadd.f32 %v709, %v710
    %v751 = vrot.slane %v750, 4
    %v752 = vadd.f32 %v750, %v751
    %v753 = vrot.slane %v752, 2
    %v754 = vadd.f32 %v752, %v753
    %v755 = vrot.slane %v754, 1
    %v756 = vadd.f32 %v754, %v755
    %v757 = vadd.f32 %v711, %v712
    %v758 = vrot.slane %v757, 4
    %v759 = vadd.f32 %v757, %v758
    %v760 = vrot.slane %v759, 2
    %v761 = vadd.f32 %v759, %v760
    %v762 = vrot.slane %v761, 1
    %v763 = vadd.f32 %v761, %v762
    %v764 = vadd.f32 %v713, %v714
    %v765 = vrot.slane %v764, 4
    %v766 = vadd.f32 %v764, %v765
    %v767 = vrot.slane %v766, 2
    %v768 = vadd.f32 %v766, %v767
    %v769 = vrot.slane %v768, 1
    %v770 = vadd.f32 %v768, %v769
    %v771 = vadd.f32 %v462, %v721
    %v772 = vadd.f32 %v463, %v728
    %v773 = vadd.f32 %v464, %v735
    %v774 = vadd.f32 %v465, %v742
    %v775 = vadd.f32 %v466, %v749
    %v776 = vadd.f32 %v467, %v756
    %v777 = vadd.f32 %v468, %v763
    %v778 = vadd.f32 %v469, %v770
    %s779 = sld [smem:[#allocation3 + $0x2]]
    %v780 = vstv %s779
    %v781 = vsub.f32 %v146, %v780
    %v782 = vsub.f32 %v147, %v780
    %v783 = vsub.f32 %v148, %v780
    %v784 = vsub.f32 %v149, %v780
    %v785 = vsub.f32 %v150, %v780
    %v786 = vsub.f32 %v151, %v780
    %v787 = vsub.f32 %v152, %v780
    %v788 = vsub.f32 %v153, %v780
    %v789 = vsub.f32 %v154, %v780
    %v790 = vsub.f32 %v155, %v780
    %v791 = vsub.f32 %v156, %v780
    %v792 = vsub.f32 %v157, %v780
    %v793 = vsub.f32 %v158, %v780
    %v794 = vsub.f32 %v159, %v780
    %v795 = vsub.f32 %v160, %v780
    %v796 = vsub.f32 %v161, %v780
    %v797 = vand.u32 2147483647, %v781
    %v798 = vand.u32 2147483647, %v782
    %v799 = vand.u32 2147483647, %v783
    %v800 = vand.u32 2147483647, %v784
    %v801 = vand.u32 2147483647, %v785
    %v802 = vand.u32 2147483647, %v786
    %v803 = vand.u32 2147483647, %v787
    %v804 = vand.u32 2147483647, %v788
    %v805 = vand.u32 2147483647, %v789
    %v806 = vand.u32 2147483647, %v790
    %v807 = vand.u32 2147483647, %v791
    %v808 = vand.u32 2147483647, %v792
    %v809 = vand.u32 2147483647, %v793
    %v810 = vand.u32 2147483647, %v794
    %v811 = vand.u32 2147483647, %v795
    %v812 = vand.u32 2147483647, %v796
    %v813 = vmul.f32 %v797, %v797
    %v814 = vmul.f32 %v798, %v798
    %v815 = vmul.f32 %v799, %v799
    %v816 = vmul.f32 %v800, %v800
    %v817 = vmul.f32 %v801, %v801
    %v818 = vmul.f32 %v802, %v802
    %v819 = vmul.f32 %v803, %v803
    %v820 = vmul.f32 %v804, %v804
    %v821 = vmul.f32 %v805, %v805
    %v822 = vmul.f32 %v806, %v806
    %v823 = vmul.f32 %v807, %v807
    %v824 = vmul.f32 %v808, %v808
    %v825 = vmul.f32 %v809, %v809
    %v826 = vmul.f32 %v810, %v810
    %v827 = vmul.f32 %v811, %v811
    %v828 = vmul.f32 %v812, %v812
    %v829 = vmul.f32 %v797, 0.5
    %v830 = vmul.f32 %v798, 0.5
    %v831 = vmul.f32 %v799, 0.5
    %v832 = vmul.f32 %v800, 0.5
    %v833 = vmul.f32 %v801, 0.5
    %v834 = vmul.f32 %v802, 0.5
    %v835 = vmul.f32 %v803, 0.5
    %v836 = vmul.f32 %v804, 0.5
    %v837 = vmul.f32 %v805, 0.5
    %v838 = vmul.f32 %v806, 0.5
    %v839 = vmul.f32 %v807, 0.5
    %v840 = vmul.f32 %v808, 0.5
    %v841 = vmul.f32 %v809, 0.5
    %v842 = vmul.f32 %v810, 0.5
    %v843 = vmul.f32 %v811, 0.5
    %v844 = vmul.f32 %v812, 0.5
    %v845 = vsub.f32 %v829, 1.0
    %v846 = vsub.f32 %v830, 1.0
    %v847 = vsub.f32 %v831, 1.0
    %v848 = vsub.f32 %v832, 1.0
    %v849 = vsub.f32 %v833, 1.0
    %v850 = vsub.f32 %v834, 1.0
    %v851 = vsub.f32 %v835, 1.0
    %v852 = vsub.f32 %v836, 1.0
    %v853 = vsub.f32 %v837, 1.0
    %v854 = vsub.f32 %v838, 1.0
    %v855 = vsub.f32 %v839, 1.0
    %v856 = vsub.f32 %v840, 1.0
    %v857 = vsub.f32 %v841, 1.0
    %v858 = vsub.f32 %v842, 1.0
    %v859 = vsub.f32 %v843, 1.0
    %v860 = vsub.f32 %v844, 1.0
    %v861 = vmul.f32 %v813, %v845
    %v862 = vmul.f32 %v814, %v846
    %v863 = vmul.f32 %v815, %v847
    %v864 = vmul.f32 %v816, %v848
    %v865 = vmul.f32 %v817, %v849
    %v866 = vmul.f32 %v818, %v850
    %v867 = vmul.f32 %v819, %v851
    %v868 = vmul.f32 %v820, %v852
    %v869 = vmul.f32 %v821, %v853
    %v870 = vmul.f32 %v822, %v854
    %v871 = vmul.f32 %v823, %v855
    %v872 = vmul.f32 %v824, %v856
    %v873 = vmul.f32 %v825, %v857
    %v874 = vmul.f32 %v826, %v858
    %v875 = vmul.f32 %v827, %v859
    %v876 = vmul.f32 %v828, %v860
    %v877 = vadd.f32 %v861, 0.6666667
    %v878 = vadd.f32 %v862, 0.6666667
    %v879 = vadd.f32 %v863, 0.6666667
    %v880 = vadd.f32 %v864, 0.6666667
    %v881 = vadd.f32 %v865, 0.6666667
    %v882 = vadd.f32 %v866, 0.6666667
    %v883 = vadd.f32 %v867, 0.6666667
    %v884 = vadd.f32 %v868, 0.6666667
    %v885 = vadd.f32 %v869, 0.6666667
    %v886 = vadd.f32 %v870, 0.6666667
    %v887 = vadd.f32 %v871, 0.6666667
    %v888 = vadd.f32 %v872, 0.6666667
    %v889 = vadd.f32 %v873, 0.6666667
    %v890 = vadd.f32 %v874, 0.6666667
    %v891 = vadd.f32 %v875, 0.6666667
    %v892 = vadd.f32 %v876, 0.6666667
    %v893 = vsub.f32 2.0, %v797
    %v894 = vsub.f32 2.0, %v798
    %v895 = vsub.f32 2.0, %v799
    %v896 = vsub.f32 2.0, %v800
    %v897 = vsub.f32 2.0, %v801
    %v898 = vsub.f32 2.0, %v802
    %v899 = vsub.f32 2.0, %v803
    %v900 = vsub.f32 2.0, %v804
    %v901 = vsub.f32 2.0, %v805
    %v902 = vsub.f32 2.0, %v806
    %v903 = vsub.f32 2.0, %v807
    %v904 = vsub.f32 2.0, %v808
    %v905 = vsub.f32 2.0, %v809
    %v906 = vsub.f32 2.0, %v810
    %v907 = vsub.f32 2.0, %v811
    %v908 = vsub.f32 2.0, %v812
    %v909 = vmax.f32 %v893, 0.0
    %v910 = vmax.f32 %v894, 0.0
    %v911 = vmax.f32 %v895, 0.0
    %v912 = vmax.f32 %v896, 0.0
    %v913 = vmax.f32 %v897, 0.0
    %v914 = vmax.f32 %v898, 0.0
    %v915 = vmax.f32 %v899, 0.0
    %v916 = vmax.f32 %v900, 0.0
    %v917 = vmax.f32 %v901, 0.0
    %v918 = vmax.f32 %v902, 0.0
    %v919 = vmax.f32 %v903, 0.0
    %v920 = vmax.f32 %v904, 0.0
    %v921 = vmax.f32 %v905, 0.0
    %v922 = vmax.f32 %v906, 0.0
    %v923 = vmax.f32 %v907, 0.0
    %v924 = vmax.f32 %v908, 0.0
    %v925 = vmul.f32 %v909, %v909
    %v926 = vmul.f32 %v910, %v910
    %v927 = vmul.f32 %v911, %v911
    %v928 = vmul.f32 %v912, %v912
    %v929 = vmul.f32 %v913, %v913
    %v930 = vmul.f32 %v914, %v914
    %v931 = vmul.f32 %v915, %v915
    %v932 = vmul.f32 %v916, %v916
    %v933 = vmul.f32 %v917, %v917
    %v934 = vmul.f32 %v918, %v918
    %v935 = vmul.f32 %v919, %v919
    %v936 = vmul.f32 %v920, %v920
    %v937 = vmul.f32 %v921, %v921
    %v938 = vmul.f32 %v922, %v922
    %v939 = vmul.f32 %v923, %v923
    %v940 = vmul.f32 %v924, %v924
    %v941 = vmul.f32 %v925, %v909
    %v942 = vmul.f32 %v926, %v910
    %v943 = vmul.f32 %v927, %v911
    %v944 = vmul.f32 %v928, %v912
    %v945 = vmul.f32 %v929, %v913
    %v946 = vmul.f32 %v930, %v914
    %v947 = vmul.f32 %v931, %v915
    %v948 = vmul.f32 %v932, %v916
    %v949 = vmul.f32 %v933, %v917
    %v950 = vmul.f32 %v934, %v918
    %v951 = vmul.f32 %v935, %v919
    %v952 = vmul.f32 %v936, %v920
    %v953 = vmul.f32 %v937, %v921
    %v954 = vmul.f32 %v938, %v922
    %v955 = vmul.f32 %v939, %v923
    %v956 = vmul.f32 %v940, %v924
    %v957 = vmul.f32 %v941, 0.16666667
    %v958 = vmul.f32 %v942, 0.16666667
    %v959 = vmul.f32 %v943, 0.16666667
    %v960 = vmul.f32 %v944, 0.16666667
    %v961 = vmul.f32 %v945, 0.16666667
    %v962 = vmul.f32 %v946, 0.16666667
    %v963 = vmul.f32 %v947, 0.16666667
    %v964 = vmul.f32 %v948, 0.16666667
    %v965 = vmul.f32 %v949, 0.16666667
    %v966 = vmul.f32 %v950, 0.16666667
    %v967 = vmul.f32 %v951, 0.16666667
    %v968 = vmul.f32 %v952, 0.16666667
    %v969 = vmul.f32 %v953, 0.16666667
    %v970 = vmul.f32 %v954, 0.16666667
    %v971 = vmul.f32 %v955, 0.16666667
    %v972 = vmul.f32 %v956, 0.16666667
    %vm973 = vcmp.lt.f32.partialorder %v797, 1.0
    %vm974 = vcmp.lt.f32.partialorder %v798, 1.0
    %vm975 = vcmp.lt.f32.partialorder %v799, 1.0
    %vm976 = vcmp.lt.f32.partialorder %v800, 1.0
    %vm977 = vcmp.lt.f32.partialorder %v801, 1.0
    %vm978 = vcmp.lt.f32.partialorder %v802, 1.0
    %vm979 = vcmp.lt.f32.partialorder %v803, 1.0
    %vm980 = vcmp.lt.f32.partialorder %v804, 1.0
    %vm981 = vcmp.lt.f32.partialorder %v805, 1.0
    %vm982 = vcmp.lt.f32.partialorder %v806, 1.0
    %vm983 = vcmp.lt.f32.partialorder %v807, 1.0
    %vm984 = vcmp.lt.f32.partialorder %v808, 1.0
    %vm985 = vcmp.lt.f32.partialorder %v809, 1.0
    %vm986 = vcmp.lt.f32.partialorder %v810, 1.0
    %vm987 = vcmp.lt.f32.partialorder %v811, 1.0
    %vm988 = vcmp.lt.f32.partialorder %v812, 1.0
    %v989 = vsel %vm973, %v877, %v957
    %v990 = vsel %vm974, %v878, %v958
    %v991 = vsel %vm975, %v879, %v959
    %v992 = vsel %vm976, %v880, %v960
    %v993 = vsel %vm977, %v881, %v961
    %v994 = vsel %vm978, %v882, %v962
    %v995 = vsel %vm979, %v883, %v963
    %v996 = vsel %vm980, %v884, %v964
    %v997 = vsel %vm981, %v885, %v965
    %v998 = vsel %vm982, %v886, %v966
    %v999 = vsel %vm983, %v887, %v967
    %v1000 = vsel %vm984, %v888, %v968
    %v1001 = vsel %vm985, %v889, %v969
    %v1002 = vsel %vm986, %v890, %v970
    %v1003 = vsel %vm987, %v891, %v971
    %v1004 = vsel %vm988, %v892, %v972
    %s1005 = scalar_lea.vmem [#allocation4], 32
    %v1006 = vld [vmem:[%s1005] sm:$0xff]
    %v1007 = vld [vmem:[%s1005 + $0x8] sm:$0xff]
    %v1008 = vmul.f32 %v989, %v1006
    %v1009 = vmul.f32 %v990, %v1007
    %v1010 = vmul.f32 %v991, %v1006
    %v1011 = vmul.f32 %v992, %v1007
    %v1012 = vmul.f32 %v993, %v1006
    %v1013 = vmul.f32 %v994, %v1007
    %v1014 = vmul.f32 %v995, %v1006
    %v1015 = vmul.f32 %v996, %v1007
    %v1016 = vmul.f32 %v997, %v1006
    %v1017 = vmul.f32 %v998, %v1007
    %v1018 = vmul.f32 %v999, %v1006
    %v1019 = vmul.f32 %v1000, %v1007
    %v1020 = vmul.f32 %v1001, %v1006
    %v1021 = vmul.f32 %v1002, %v1007
    %v1022 = vmul.f32 %v1003, %v1006
    %v1023 = vmul.f32 %v1004, %v1007
    %v1024 = vadd.f32 %v1008, %v1009
    %v1025 = vrot.slane %v1024, 4
    %v1026 = vadd.f32 %v1024, %v1025
    %v1027 = vrot.slane %v1026, 2
    %v1028 = vadd.f32 %v1026, %v1027
    %v1029 = vrot.slane %v1028, 1
    %v1030 = vadd.f32 %v1028, %v1029
    %v1031 = vadd.f32 %v1010, %v1011
    %v1032 = vrot.slane %v1031, 4
    %v1033 = vadd.f32 %v1031, %v1032
    %v1034 = vrot.slane %v1033, 2
    %v1035 = vadd.f32 %v1033, %v1034
    %v1036 = vrot.slane %v1035, 1
    %v1037 = vadd.f32 %v1035, %v1036
    %v1038 = vadd.f32 %v1012, %v1013
    %v1039 = vrot.slane %v1038, 4
    %v1040 = vadd.f32 %v1038, %v1039
    %v1041 = vrot.slane %v1040, 2
    %v1042 = vadd.f32 %v1040, %v1041
    %v1043 = vrot.slane %v1042, 1
    %v1044 = vadd.f32 %v1042, %v1043
    %v1045 = vadd.f32 %v1014, %v1015
    %v1046 = vrot.slane %v1045, 4
    %v1047 = vadd.f32 %v1045, %v1046
    %v1048 = vrot.slane %v1047, 2
    %v1049 = vadd.f32 %v1047, %v1048
    %v1050 = vrot.slane %v1049, 1
    %v1051 = vadd.f32 %v1049, %v1050
    %v1052 = vadd.f32 %v1016, %v1017
    %v1053 = vrot.slane %v1052, 4
    %v1054 = vadd.f32 %v1052, %v1053
    %v1055 = vrot.slane %v1054, 2
    %v1056 = vadd.f32 %v1054, %v1055
    %v1057 = vrot.slane %v1056, 1
    %v1058 = vadd.f32 %v1056, %v1057
    %v1059 = vadd.f32 %v1018, %v1019
    %v1060 = vrot.slane %v1059, 4
    %v1061 = vadd.f32 %v1059, %v1060
    %v1062 = vrot.slane %v1061, 2
    %v1063 = vadd.f32 %v1061, %v1062
    %v1064 = vrot.slane %v1063, 1
    %v1065 = vadd.f32 %v1063, %v1064
    %v1066 = vadd.f32 %v1020, %v1021
    %v1067 = vrot.slane %v1066, 4
    %v1068 = vadd.f32 %v1066, %v1067
    %v1069 = vrot.slane %v1068, 2
    %v1070 = vadd.f32 %v1068, %v1069
    %v1071 = vrot.slane %v1070, 1
    %v1072 = vadd.f32 %v1070, %v1071
    %v1073 = vadd.f32 %v1022, %v1023
    %v1074 = vrot.slane %v1073, 4
    %v1075 = vadd.f32 %v1073, %v1074
    %v1076 = vrot.slane %v1075, 2
    %v1077 = vadd.f32 %v1075, %v1076
    %v1078 = vrot.slane %v1077, 1
    %v1079 = vadd.f32 %v1077, %v1078
    %v1080 = vadd.f32 %v771, %v1030
    %v1081 = vadd.f32 %v772, %v1037
    %v1082 = vadd.f32 %v773, %v1044
    %v1083 = vadd.f32 %v774, %v1051
    %v1084 = vadd.f32 %v775, %v1058
    %v1085 = vadd.f32 %v776, %v1065
    %v1086 = vadd.f32 %v777, %v1072
    %v1087 = vadd.f32 %v778, %v1079
    %s1088 = sld [smem:[#allocation3 + $0x3]]
    %v1089 = vstv %s1088
    %v1090 = vsub.f32 %v146, %v1089
    %v1091 = vsub.f32 %v147, %v1089
    %v1092 = vsub.f32 %v148, %v1089
    %v1093 = vsub.f32 %v149, %v1089
    %v1094 = vsub.f32 %v150, %v1089
    %v1095 = vsub.f32 %v151, %v1089
    %v1096 = vsub.f32 %v152, %v1089
    %v1097 = vsub.f32 %v153, %v1089
    %v1098 = vsub.f32 %v154, %v1089
    %v1099 = vsub.f32 %v155, %v1089
    %v1100 = vsub.f32 %v156, %v1089
    %v1101 = vsub.f32 %v157, %v1089
    %v1102 = vsub.f32 %v158, %v1089
    %v1103 = vsub.f32 %v159, %v1089
    %v1104 = vsub.f32 %v160, %v1089
    %v1105 = vsub.f32 %v161, %v1089
    %v1106 = vand.u32 2147483647, %v1090
    %v1107 = vand.u32 2147483647, %v1091
    %v1108 = vand.u32 2147483647, %v1092
    %v1109 = vand.u32 2147483647, %v1093
    %v1110 = vand.u32 2147483647, %v1094
    %v1111 = vand.u32 2147483647, %v1095
    %v1112 = vand.u32 2147483647, %v1096
    %v1113 = vand.u32 2147483647, %v1097
    %v1114 = vand.u32 2147483647, %v1098
    %v1115 = vand.u32 2147483647, %v1099
    %v1116 = vand.u32 2147483647, %v1100
    %v1117 = vand.u32 2147483647, %v1101
    %v1118 = vand.u32 2147483647, %v1102
    %v1119 = vand.u32 2147483647, %v1103
    %v1120 = vand.u32 2147483647, %v1104
    %v1121 = vand.u32 2147483647, %v1105
    %v1122 = vmul.f32 %v1106, %v1106
    %v1123 = vmul.f32 %v1107, %v1107
    %v1124 = vmul.f32 %v1108, %v1108
    %v1125 = vmul.f32 %v1109, %v1109
    %v1126 = vmul.f32 %v1110, %v1110
    %v1127 = vmul.f32 %v1111, %v1111
    %v1128 = vmul.f32 %v1112, %v1112
    %v1129 = vmul.f32 %v1113, %v1113
    %v1130 = vmul.f32 %v1114, %v1114
    %v1131 = vmul.f32 %v1115, %v1115
    %v1132 = vmul.f32 %v1116, %v1116
    %v1133 = vmul.f32 %v1117, %v1117
    %v1134 = vmul.f32 %v1118, %v1118
    %v1135 = vmul.f32 %v1119, %v1119
    %v1136 = vmul.f32 %v1120, %v1120
    %v1137 = vmul.f32 %v1121, %v1121
    %v1138 = vmul.f32 %v1106, 0.5
    %v1139 = vmul.f32 %v1107, 0.5
    %v1140 = vmul.f32 %v1108, 0.5
    %v1141 = vmul.f32 %v1109, 0.5
    %v1142 = vmul.f32 %v1110, 0.5
    %v1143 = vmul.f32 %v1111, 0.5
    %v1144 = vmul.f32 %v1112, 0.5
    %v1145 = vmul.f32 %v1113, 0.5
    %v1146 = vmul.f32 %v1114, 0.5
    %v1147 = vmul.f32 %v1115, 0.5
    %v1148 = vmul.f32 %v1116, 0.5
    %v1149 = vmul.f32 %v1117, 0.5
    %v1150 = vmul.f32 %v1118, 0.5
    %v1151 = vmul.f32 %v1119, 0.5
    %v1152 = vmul.f32 %v1120, 0.5
    %v1153 = vmul.f32 %v1121, 0.5
    %v1154 = vsub.f32 %v1138, 1.0
    %v1155 = vsub.f32 %v1139, 1.0
    %v1156 = vsub.f32 %v1140, 1.0
    %v1157 = vsub.f32 %v1141, 1.0
    %v1158 = vsub.f32 %v1142, 1.0
    %v1159 = vsub.f32 %v1143, 1.0
    %v1160 = vsub.f32 %v1144, 1.0
    %v1161 = vsub.f32 %v1145, 1.0
    %v1162 = vsub.f32 %v1146, 1.0
    %v1163 = vsub.f32 %v1147, 1.0
    %v1164 = vsub.f32 %v1148, 1.0
    %v1165 = vsub.f32 %v1149, 1.0
    %v1166 = vsub.f32 %v1150, 1.0
    %v1167 = vsub.f32 %v1151, 1.0
    %v1168 = vsub.f32 %v1152, 1.0
    %v1169 = vsub.f32 %v1153, 1.0
    %v1170 = vmul.f32 %v1122, %v1154
    %v1171 = vmul.f32 %v1123, %v1155
    %v1172 = vmul.f32 %v1124, %v1156
    %v1173 = vmul.f32 %v1125, %v1157
    %v1174 = vmul.f32 %v1126, %v1158
    %v1175 = vmul.f32 %v1127, %v1159
    %v1176 = vmul.f32 %v1128, %v1160
    %v1177 = vmul.f32 %v1129, %v1161
    %v1178 = vmul.f32 %v1130, %v1162
    %v1179 = vmul.f32 %v1131, %v1163
    %v1180 = vmul.f32 %v1132, %v1164
    %v1181 = vmul.f32 %v1133, %v1165
    %v1182 = vmul.f32 %v1134, %v1166
    %v1183 = vmul.f32 %v1135, %v1167
    %v1184 = vmul.f32 %v1136, %v1168
    %v1185 = vmul.f32 %v1137, %v1169
    %v1186 = vadd.f32 %v1170, 0.6666667
    %v1187 = vadd.f32 %v1171, 0.6666667
    %v1188 = vadd.f32 %v1172, 0.6666667
    %v1189 = vadd.f32 %v1173, 0.6666667
    %v1190 = vadd.f32 %v1174, 0.6666667
    %v1191 = vadd.f32 %v1175, 0.6666667
    %v1192 = vadd.f32 %v1176, 0.6666667
    %v1193 = vadd.f32 %v1177, 0.6666667
    %v1194 = vadd.f32 %v1178, 0.6666667
    %v1195 = vadd.f32 %v1179, 0.6666667
    %v1196 = vadd.f32 %v1180, 0.6666667
    %v1197 = vadd.f32 %v1181, 0.6666667
    %v1198 = vadd.f32 %v1182, 0.6666667
    %v1199 = vadd.f32 %v1183, 0.6666667
    %v1200 = vadd.f32 %v1184, 0.6666667
    %v1201 = vadd.f32 %v1185, 0.6666667
    %v1202 = vsub.f32 2.0, %v1106
    %v1203 = vsub.f32 2.0, %v1107
    %v1204 = vsub.f32 2.0, %v1108
    %v1205 = vsub.f32 2.0, %v1109
    %v1206 = vsub.f32 2.0, %v1110
    %v1207 = vsub.f32 2.0, %v1111
    %v1208 = vsub.f32 2.0, %v1112
    %v1209 = vsub.f32 2.0, %v1113
    %v1210 = vsub.f32 2.0, %v1114
    %v1211 = vsub.f32 2.0, %v1115
    %v1212 = vsub.f32 2.0, %v1116
    %v1213 = vsub.f32 2.0, %v1117
    %v1214 = vsub.f32 2.0, %v1118
    %v1215 = vsub.f32 2.0, %v1119
    %v1216 = vsub.f32 2.0, %v1120
    %v1217 = vsub.f32 2.0, %v1121
    %v1218 = vmax.f32 %v1202, 0.0
    %v1219 = vmax.f32 %v1203, 0.0
    %v1220 = vmax.f32 %v1204, 0.0
    %v1221 = vmax.f32 %v1205, 0.0
    %v1222 = vmax.f32 %v1206, 0.0
    %v1223 = vmax.f32 %v1207, 0.0
    %v1224 = vmax.f32 %v1208, 0.0
    %v1225 = vmax.f32 %v1209, 0.0
    %v1226 = vmax.f32 %v1210, 0.0
    %v1227 = vmax.f32 %v1211, 0.0
    %v1228 = vmax.f32 %v1212, 0.0
    %v1229 = vmax.f32 %v1213, 0.0
    %v1230 = vmax.f32 %v1214, 0.0
    %v1231 = vmax.f32 %v1215, 0.0
    %v1232 = vmax.f32 %v1216, 0.0
    %v1233 = vmax.f32 %v1217, 0.0
    %v1234 = vmul.f32 %v1218, %v1218
    %v1235 = vmul.f32 %v1219, %v1219
    %v1236 = vmul.f32 %v1220, %v1220
    %v1237 = vmul.f32 %v1221, %v1221
    %v1238 = vmul.f32 %v1222, %v1222
    %v1239 = vmul.f32 %v1223, %v1223
    %v1240 = vmul.f32 %v1224, %v1224
    %v1241 = vmul.f32 %v1225, %v1225
    %v1242 = vmul.f32 %v1226, %v1226
    %v1243 = vmul.f32 %v1227, %v1227
    %v1244 = vmul.f32 %v1228, %v1228
    %v1245 = vmul.f32 %v1229, %v1229
    %v1246 = vmul.f32 %v1230, %v1230
    %v1247 = vmul.f32 %v1231, %v1231
    %v1248 = vmul.f32 %v1232, %v1232
    %v1249 = vmul.f32 %v1233, %v1233
    %v1250 = vmul.f32 %v1234, %v1218
    %v1251 = vmul.f32 %v1235, %v1219
    %v1252 = vmul.f32 %v1236, %v1220
    %v1253 = vmul.f32 %v1237, %v1221
    %v1254 = vmul.f32 %v1238, %v1222
    %v1255 = vmul.f32 %v1239, %v1223
    %v1256 = vmul.f32 %v1240, %v1224
    %v1257 = vmul.f32 %v1241, %v1225
    %v1258 = vmul.f32 %v1242, %v1226
    %v1259 = vmul.f32 %v1243, %v1227
    %v1260 = vmul.f32 %v1244, %v1228
    %v1261 = vmul.f32 %v1245, %v1229
    %v1262 = vmul.f32 %v1246, %v1230
    %v1263 = vmul.f32 %v1247, %v1231
    %v1264 = vmul.f32 %v1248, %v1232
    %v1265 = vmul.f32 %v1249, %v1233
    %v1266 = vmul.f32 %v1250, 0.16666667
    %v1267 = vmul.f32 %v1251, 0.16666667
    %v1268 = vmul.f32 %v1252, 0.16666667
    %v1269 = vmul.f32 %v1253, 0.16666667
    %v1270 = vmul.f32 %v1254, 0.16666667
    %v1271 = vmul.f32 %v1255, 0.16666667
    %v1272 = vmul.f32 %v1256, 0.16666667
    %v1273 = vmul.f32 %v1257, 0.16666667
    %v1274 = vmul.f32 %v1258, 0.16666667
    %v1275 = vmul.f32 %v1259, 0.16666667
    %v1276 = vmul.f32 %v1260, 0.16666667
    %v1277 = vmul.f32 %v1261, 0.16666667
    %v1278 = vmul.f32 %v1262, 0.16666667
    %v1279 = vmul.f32 %v1263, 0.16666667
    %v1280 = vmul.f32 %v1264, 0.16666667
    %v1281 = vmul.f32 %v1265, 0.16666667
    %vm1282 = vcmp.lt.f32.partialorder %v1106, 1.0
    %vm1283 = vcmp.lt.f32.partialorder %v1107, 1.0
    %vm1284 = vcmp.lt.f32.partialorder %v1108, 1.0
    %vm1285 = vcmp.lt.f32.partialorder %v1109, 1.0
    %vm1286 = vcmp.lt.f32.partialorder %v1110, 1.0
    %vm1287 = vcmp.lt.f32.partialorder %v1111, 1.0
    %vm1288 = vcmp.lt.f32.partialorder %v1112, 1.0
    %vm1289 = vcmp.lt.f32.partialorder %v1113, 1.0
    %vm1290 = vcmp.lt.f32.partialorder %v1114, 1.0
    %vm1291 = vcmp.lt.f32.partialorder %v1115, 1.0
    %vm1292 = vcmp.lt.f32.partialorder %v1116, 1.0
    %vm1293 = vcmp.lt.f32.partialorder %v1117, 1.0
    %vm1294 = vcmp.lt.f32.partialorder %v1118, 1.0
    %vm1295 = vcmp.lt.f32.partialorder %v1119, 1.0
    %vm1296 = vcmp.lt.f32.partialorder %v1120, 1.0
    %vm1297 = vcmp.lt.f32.partialorder %v1121, 1.0
    %v1298 = vsel %vm1282, %v1186, %v1266
    %v1299 = vsel %vm1283, %v1187, %v1267
    %v1300 = vsel %vm1284, %v1188, %v1268
    %v1301 = vsel %vm1285, %v1189, %v1269
    %v1302 = vsel %vm1286, %v1190, %v1270
    %v1303 = vsel %vm1287, %v1191, %v1271
    %v1304 = vsel %vm1288, %v1192, %v1272
    %v1305 = vsel %vm1289, %v1193, %v1273
    %v1306 = vsel %vm1290, %v1194, %v1274
    %v1307 = vsel %vm1291, %v1195, %v1275
    %v1308 = vsel %vm1292, %v1196, %v1276
    %v1309 = vsel %vm1293, %v1197, %v1277
    %v1310 = vsel %vm1294, %v1198, %v1278
    %v1311 = vsel %vm1295, %v1199, %v1279
    %v1312 = vsel %vm1296, %v1200, %v1280
    %v1313 = vsel %vm1297, %v1201, %v1281
    %s1314 = scalar_lea.vmem [#allocation4], 48
    %v1315 = vld [vmem:[%s1314] sm:$0xff]
    %v1316 = vld [vmem:[%s1314 + $0x8] sm:$0xff]
    %v1317 = vmul.f32 %v1298, %v1315
    %v1318 = vmul.f32 %v1299, %v1316
    %v1319 = vmul.f32 %v1300, %v1315
    %v1320 = vmul.f32 %v1301, %v1316
    %v1321 = vmul.f32 %v1302, %v1315
    %v1322 = vmul.f32 %v1303, %v1316
    %v1323 = vmul.f32 %v1304, %v1315
    %v1324 = vmul.f32 %v1305, %v1316
    %v1325 = vmul.f32 %v1306, %v1315
    %v1326 = vmul.f32 %v1307, %v1316
    %v1327 = vmul.f32 %v1308, %v1315
    %v1328 = vmul.f32 %v1309, %v1316
    %v1329 = vmul.f32 %v1310, %v1315
    %v1330 = vmul.f32 %v1311, %v1316
    %v1331 = vmul.f32 %v1312, %v1315
    %v1332 = vmul.f32 %v1313, %v1316
    %v1333 = vadd.f32 %v1317, %v1318
    %v1334 = vrot.slane %v1333, 4
    %v1335 = vadd.f32 %v1333, %v1334
    %v1336 = vrot.slane %v1335, 2
    %v1337 = vadd.f32 %v1335, %v1336
    %v1338 = vrot.slane %v1337, 1
    %v1339 = vadd.f32 %v1337, %v1338
    %v1340 = vadd.f32 %v1319, %v1320
    %v1341 = vrot.slane %v1340, 4
    %v1342 = vadd.f32 %v1340, %v1341
    %v1343 = vrot.slane %v1342, 2
    %v1344 = vadd.f32 %v1342, %v1343
    %v1345 = vrot.slane %v1344, 1
    %v1346 = vadd.f32 %v1344, %v1345
    %v1347 = vadd.f32 %v1321, %v1322
    %v1348 = vrot.slane %v1347, 4
    %v1349 = vadd.f32 %v1347, %v1348
    %v1350 = vrot.slane %v1349, 2
    %v1351 = vadd.f32 %v1349, %v1350
    %v1352 = vrot.slane %v1351, 1
    %v1353 = vadd.f32 %v1351, %v1352
    %v1354 = vadd.f32 %v1323, %v1324
    %v1355 = vrot.slane %v1354, 4
    %v1356 = vadd.f32 %v1354, %v1355
    %v1357 = vrot.slane %v1356, 2
    %v1358 = vadd.f32 %v1356, %v1357
    %v1359 = vrot.slane %v1358, 1
    %v1360 = vadd.f32 %v1358, %v1359
    %v1361 = vadd.f32 %v1325, %v1326
    %v1362 = vrot.slane %v1361, 4
    %v1363 = vadd.f32 %v1361, %v1362
    %v1364 = vrot.slane %v1363, 2
    %v1365 = vadd.f32 %v1363, %v1364
    %v1366 = vrot.slane %v1365, 1
    %v1367 = vadd.f32 %v1365, %v1366
    %v1368 = vadd.f32 %v1327, %v1328
    %v1369 = vrot.slane %v1368, 4
    %v1370 = vadd.f32 %v1368, %v1369
    %v1371 = vrot.slane %v1370, 2
    %v1372 = vadd.f32 %v1370, %v1371
    %v1373 = vrot.slane %v1372, 1
    %v1374 = vadd.f32 %v1372, %v1373
    %v1375 = vadd.f32 %v1329, %v1330
    %v1376 = vrot.slane %v1375, 4
    %v1377 = vadd.f32 %v1375, %v1376
    %v1378 = vrot.slane %v1377, 2
    %v1379 = vadd.f32 %v1377, %v1378
    %v1380 = vrot.slane %v1379, 1
    %v1381 = vadd.f32 %v1379, %v1380
    %v1382 = vadd.f32 %v1331, %v1332
    %v1383 = vrot.slane %v1382, 4
    %v1384 = vadd.f32 %v1382, %v1383
    %v1385 = vrot.slane %v1384, 2
    %v1386 = vadd.f32 %v1384, %v1385
    %v1387 = vrot.slane %v1386, 1
    %v1388 = vadd.f32 %v1386, %v1387
    %v1389 = vadd.f32 %v1080, %v1339
    %v1390 = vadd.f32 %v1081, %v1346
    %v1391 = vadd.f32 %v1082, %v1353
    %v1392 = vadd.f32 %v1083, %v1360
    %v1393 = vadd.f32 %v1084, %v1367
    %v1394 = vadd.f32 %v1085, %v1374
    %v1395 = vadd.f32 %v1086, %v1381
    %v1396 = vadd.f32 %v1087, %v1388
    %s1397 = sld [smem:[#allocation3 + $0x4]]
    %v1398 = vstv %s1397
    %v1399 = vsub.f32 %v146, %v1398
    %v1400 = vsub.f32 %v147, %v1398
    %v1401 = vsub.f32 %v148, %v1398
    %v1402 = vsub.f32 %v149, %v1398
    %v1403 = vsub.f32 %v150, %v1398
    %v1404 = vsub.f32 %v151, %v1398
    %v1405 = vsub.f32 %v152, %v1398
    %v1406 = vsub.f32 %v153, %v1398
    %v1407 = vsub.f32 %v154, %v1398
    %v1408 = vsub.f32 %v155, %v1398
    %v1409 = vsub.f32 %v156, %v1398
    %v1410 = vsub.f32 %v157, %v1398
    %v1411 = vsub.f32 %v158, %v1398
    %v1412 = vsub.f32 %v159, %v1398
    %v1413 = vsub.f32 %v160, %v1398
    %v1414 = vsub.f32 %v161, %v1398
    %v1415 = vand.u32 2147483647, %v1399
    %v1416 = vand.u32 2147483647, %v1400
    %v1417 = vand.u32 2147483647, %v1401
    %v1418 = vand.u32 2147483647, %v1402
    %v1419 = vand.u32 2147483647, %v1403
    %v1420 = vand.u32 2147483647, %v1404
    %v1421 = vand.u32 2147483647, %v1405
    %v1422 = vand.u32 2147483647, %v1406
    %v1423 = vand.u32 2147483647, %v1407
    %v1424 = vand.u32 2147483647, %v1408
    %v1425 = vand.u32 2147483647, %v1409
    %v1426 = vand.u32 2147483647, %v1410
    %v1427 = vand.u32 2147483647, %v1411
    %v1428 = vand.u32 2147483647, %v1412
    %v1429 = vand.u32 2147483647, %v1413
    %v1430 = vand.u32 2147483647, %v1414
    %v1431 = vmul.f32 %v1415, %v1415
    %v1432 = vmul.f32 %v1416, %v1416
    %v1433 = vmul.f32 %v1417, %v1417
    %v1434 = vmul.f32 %v1418, %v1418
    %v1435 = vmul.f32 %v1419, %v1419
    %v1436 = vmul.f32 %v1420, %v1420
    %v1437 = vmul.f32 %v1421, %v1421
    %v1438 = vmul.f32 %v1422, %v1422
    %v1439 = vmul.f32 %v1423, %v1423
    %v1440 = vmul.f32 %v1424, %v1424
    %v1441 = vmul.f32 %v1425, %v1425
    %v1442 = vmul.f32 %v1426, %v1426
    %v1443 = vmul.f32 %v1427, %v1427
    %v1444 = vmul.f32 %v1428, %v1428
    %v1445 = vmul.f32 %v1429, %v1429
    %v1446 = vmul.f32 %v1430, %v1430
    %v1447 = vmul.f32 %v1415, 0.5
    %v1448 = vmul.f32 %v1416, 0.5
    %v1449 = vmul.f32 %v1417, 0.5
    %v1450 = vmul.f32 %v1418, 0.5
    %v1451 = vmul.f32 %v1419, 0.5
    %v1452 = vmul.f32 %v1420, 0.5
    %v1453 = vmul.f32 %v1421, 0.5
    %v1454 = vmul.f32 %v1422, 0.5
    %v1455 = vmul.f32 %v1423, 0.5
    %v1456 = vmul.f32 %v1424, 0.5
    %v1457 = vmul.f32 %v1425, 0.5
    %v1458 = vmul.f32 %v1426, 0.5
    %v1459 = vmul.f32 %v1427, 0.5
    %v1460 = vmul.f32 %v1428, 0.5
    %v1461 = vmul.f32 %v1429, 0.5
    %v1462 = vmul.f32 %v1430, 0.5
    %v1463 = vsub.f32 %v1447, 1.0
    %v1464 = vsub.f32 %v1448, 1.0
    %v1465 = vsub.f32 %v1449, 1.0
    %v1466 = vsub.f32 %v1450, 1.0
    %v1467 = vsub.f32 %v1451, 1.0
    %v1468 = vsub.f32 %v1452, 1.0
    %v1469 = vsub.f32 %v1453, 1.0
    %v1470 = vsub.f32 %v1454, 1.0
    %v1471 = vsub.f32 %v1455, 1.0
    %v1472 = vsub.f32 %v1456, 1.0
    %v1473 = vsub.f32 %v1457, 1.0
    %v1474 = vsub.f32 %v1458, 1.0
    %v1475 = vsub.f32 %v1459, 1.0
    %v1476 = vsub.f32 %v1460, 1.0
    %v1477 = vsub.f32 %v1461, 1.0
    %v1478 = vsub.f32 %v1462, 1.0
    %v1479 = vmul.f32 %v1431, %v1463
    %v1480 = vmul.f32 %v1432, %v1464
    %v1481 = vmul.f32 %v1433, %v1465
    %v1482 = vmul.f32 %v1434, %v1466
    %v1483 = vmul.f32 %v1435, %v1467
    %v1484 = vmul.f32 %v1436, %v1468
    %v1485 = vmul.f32 %v1437, %v1469
    %v1486 = vmul.f32 %v1438, %v1470
    %v1487 = vmul.f32 %v1439, %v1471
    %v1488 = vmul.f32 %v1440, %v1472
    %v1489 = vmul.f32 %v1441, %v1473
    %v1490 = vmul.f32 %v1442, %v1474
    %v1491 = vmul.f32 %v1443, %v1475
    %v1492 = vmul.f32 %v1444, %v1476
    %v1493 = vmul.f32 %v1445, %v1477
    %v1494 = vmul.f32 %v1446, %v1478
    %v1495 = vadd.f32 %v1479, 0.6666667
    %v1496 = vadd.f32 %v1480, 0.6666667
    %v1497 = vadd.f32 %v1481, 0.6666667
    %v1498 = vadd.f32 %v1482, 0.6666667
    %v1499 = vadd.f32 %v1483, 0.6666667
    %v1500 = vadd.f32 %v1484, 0.6666667
    %v1501 = vadd.f32 %v1485, 0.6666667
    %v1502 = vadd.f32 %v1486, 0.6666667
    %v1503 = vadd.f32 %v1487, 0.6666667
    %v1504 = vadd.f32 %v1488, 0.6666667
    %v1505 = vadd.f32 %v1489, 0.6666667
    %v1506 = vadd.f32 %v1490, 0.6666667
    %v1507 = vadd.f32 %v1491, 0.6666667
    %v1508 = vadd.f32 %v1492, 0.6666667
    %v1509 = vadd.f32 %v1493, 0.6666667
    %v1510 = vadd.f32 %v1494, 0.6666667
    %v1511 = vsub.f32 2.0, %v1415
    %v1512 = vsub.f32 2.0, %v1416
    %v1513 = vsub.f32 2.0, %v1417
    %v1514 = vsub.f32 2.0, %v1418
    %v1515 = vsub.f32 2.0, %v1419
    %v1516 = vsub.f32 2.0, %v1420
    %v1517 = vsub.f32 2.0, %v1421
    %v1518 = vsub.f32 2.0, %v1422
    %v1519 = vsub.f32 2.0, %v1423
    %v1520 = vsub.f32 2.0, %v1424
    %v1521 = vsub.f32 2.0, %v1425
    %v1522 = vsub.f32 2.0, %v1426
    %v1523 = vsub.f32 2.0, %v1427
    %v1524 = vsub.f32 2.0, %v1428
    %v1525 = vsub.f32 2.0, %v1429
    %v1526 = vsub.f32 2.0, %v1430
    %v1527 = vmax.f32 %v1511, 0.0
    %v1528 = vmax.f32 %v1512, 0.0
    %v1529 = vmax.f32 %v1513, 0.0
    %v1530 = vmax.f32 %v1514, 0.0
    %v1531 = vmax.f32 %v1515, 0.0
    %v1532 = vmax.f32 %v1516, 0.0
    %v1533 = vmax.f32 %v1517, 0.0
    %v1534 = vmax.f32 %v1518, 0.0
    %v1535 = vmax.f32 %v1519, 0.0
    %v1536 = vmax.f32 %v1520, 0.0
    %v1537 = vmax.f32 %v1521, 0.0
    %v1538 = vmax.f32 %v1522, 0.0
    %v1539 = vmax.f32 %v1523, 0.0
    %v1540 = vmax.f32 %v1524, 0.0
    %v1541 = vmax.f32 %v1525, 0.0
    %v1542 = vmax.f32 %v1526, 0.0
    %v1543 = vmul.f32 %v1527, %v1527
    %v1544 = vmul.f32 %v1528, %v1528
    %v1545 = vmul.f32 %v1529, %v1529
    %v1546 = vmul.f32 %v1530, %v1530
    %v1547 = vmul.f32 %v1531, %v1531
    %v1548 = vmul.f32 %v1532, %v1532
    %v1549 = vmul.f32 %v1533, %v1533
    %v1550 = vmul.f32 %v1534, %v1534
    %v1551 = vmul.f32 %v1535, %v1535
    %v1552 = vmul.f32 %v1536, %v1536
    %v1553 = vmul.f32 %v1537, %v1537
    %v1554 = vmul.f32 %v1538, %v1538
    %v1555 = vmul.f32 %v1539, %v1539
    %v1556 = vmul.f32 %v1540, %v1540
    %v1557 = vmul.f32 %v1541, %v1541
    %v1558 = vmul.f32 %v1542, %v1542
    %v1559 = vmul.f32 %v1543, %v1527
    %v1560 = vmul.f32 %v1544, %v1528
    %v1561 = vmul.f32 %v1545, %v1529
    %v1562 = vmul.f32 %v1546, %v1530
    %v1563 = vmul.f32 %v1547, %v1531
    %v1564 = vmul.f32 %v1548, %v1532
    %v1565 = vmul.f32 %v1549, %v1533
    %v1566 = vmul.f32 %v1550, %v1534
    %v1567 = vmul.f32 %v1551, %v1535
    %v1568 = vmul.f32 %v1552, %v1536
    %v1569 = vmul.f32 %v1553, %v1537
    %v1570 = vmul.f32 %v1554, %v1538
    %v1571 = vmul.f32 %v1555, %v1539
    %v1572 = vmul.f32 %v1556, %v1540
    %v1573 = vmul.f32 %v1557, %v1541
    %v1574 = vmul.f32 %v1558, %v1542
    %v1575 = vmul.f32 %v1559, 0.16666667
    %v1576 = vmul.f32 %v1560, 0.16666667
    %v1577 = vmul.f32 %v1561, 0.16666667
    %v1578 = vmul.f32 %v1562, 0.16666667
    %v1579 = vmul.f32 %v1563, 0.16666667
    %v1580 = vmul.f32 %v1564, 0.16666667
    %v1581 = vmul.f32 %v1565, 0.16666667
    %v1582 = vmul.f32 %v1566, 0.16666667
    %v1583 = vmul.f32 %v1567, 0.16666667
    %v1584 = vmul.f32 %v1568, 0.16666667
    %v1585 = vmul.f32 %v1569, 0.16666667
    %v1586 = vmul.f32 %v1570, 0.16666667
    %v1587 = vmul.f32 %v1571, 0.16666667
    %v1588 = vmul.f32 %v1572, 0.16666667
    %v1589 = vmul.f32 %v1573, 0.16666667
    %v1590 = vmul.f32 %v1574, 0.16666667
    %vm1591 = vcmp.lt.f32.partialorder %v1415, 1.0
    %vm1592 = vcmp.lt.f32.partialorder %v1416, 1.0
    %vm1593 = vcmp.lt.f32.partialorder %v1417, 1.0
    %vm1594 = vcmp.lt.f32.partialorder %v1418, 1.0
    %vm1595 = vcmp.lt.f32.partialorder %v1419, 1.0
    %vm1596 = vcmp.lt.f32.partialorder %v1420, 1.0
    %vm1597 = vcmp.lt.f32.partialorder %v1421, 1.0
    %vm1598 = vcmp.lt.f32.partialorder %v1422, 1.0
    %vm1599 = vcmp.lt.f32.partialorder %v1423, 1.0
    %vm1600 = vcmp.lt.f32.partialorder %v1424, 1.0
    %vm1601 = vcmp.lt.f32.partialorder %v1425, 1.0
    %vm1602 = vcmp.lt.f32.partialorder %v1426, 1.0
    %vm1603 = vcmp.lt.f32.partialorder %v1427, 1.0
    %vm1604 = vcmp.lt.f32.partialorder %v1428, 1.0
    %vm1605 = vcmp.lt.f32.partialorder %v1429, 1.0
    %vm1606 = vcmp.lt.f32.partialorder %v1430, 1.0
    %v1607 = vsel %vm1591, %v1495, %v1575
    %v1608 = vsel %vm1592, %v1496, %v1576
    %v1609 = vsel %vm1593, %v1497, %v1577
    %v1610 = vsel %vm1594, %v1498, %v1578
    %v1611 = vsel %vm1595, %v1499, %v1579
    %v1612 = vsel %vm1596, %v1500, %v1580
    %v1613 = vsel %vm1597, %v1501, %v1581
    %v1614 = vsel %vm1598, %v1502, %v1582
    %v1615 = vsel %vm1599, %v1503, %v1583
    %v1616 = vsel %vm1600, %v1504, %v1584
    %v1617 = vsel %vm1601, %v1505, %v1585
    %v1618 = vsel %vm1602, %v1506, %v1586
    %v1619 = vsel %vm1603, %v1507, %v1587
    %v1620 = vsel %vm1604, %v1508, %v1588
    %v1621 = vsel %vm1605, %v1509, %v1589
    %v1622 = vsel %vm1606, %v1510, %v1590
    %s1623 = scalar_lea.vmem [#allocation4], 64
    %v1624 = vld [vmem:[%s1623] sm:$0xff]
    %v1625 = vld [vmem:[%s1623 + $0x8] sm:$0xff]
    %v1626 = vmul.f32 %v1607, %v1624
    %v1627 = vmul.f32 %v1608, %v1625
    %v1628 = vmul.f32 %v1609, %v1624
    %v1629 = vmul.f32 %v1610, %v1625
    %v1630 = vmul.f32 %v1611, %v1624
    %v1631 = vmul.f32 %v1612, %v1625
    %v1632 = vmul.f32 %v1613, %v1624
    %v1633 = vmul.f32 %v1614, %v1625
    %v1634 = vmul.f32 %v1615, %v1624
    %v1635 = vmul.f32 %v1616, %v1625
    %v1636 = vmul.f32 %v1617, %v1624
    %v1637 = vmul.f32 %v1618, %v1625
    %v1638 = vmul.f32 %v1619, %v1624
    %v1639 = vmul.f32 %v1620, %v1625
    %v1640 = vmul.f32 %v1621, %v1624
    %v1641 = vmul.f32 %v1622, %v1625
    %v1642 = vadd.f32 %v1626, %v1627
    %v1643 = vrot.slane %v1642, 4
    %v1644 = vadd.f32 %v1642, %v1643
    %v1645 = vrot.slane %v1644, 2
    %v1646 = vadd.f32 %v1644, %v1645
    %v1647 = vrot.slane %v1646, 1
    %v1648 = vadd.f32 %v1646, %v1647
    %v1649 = vadd.f32 %v1628, %v1629
    %v1650 = vrot.slane %v1649, 4
    %v1651 = vadd.f32 %v1649, %v1650
    %v1652 = vrot.slane %v1651, 2
    %v1653 = vadd.f32 %v1651, %v1652
    %v1654 = vrot.slane %v1653, 1
    %v1655 = vadd.f32 %v1653, %v1654
    %v1656 = vadd.f32 %v1630, %v1631
    %v1657 = vrot.slane %v1656, 4
    %v1658 = vadd.f32 %v1656, %v1657
    %v1659 = vrot.slane %v1658, 2
    %v1660 = vadd.f32 %v1658, %v1659
    %v1661 = vrot.slane %v1660, 1
    %v1662 = vadd.f32 %v1660, %v1661
    %v1663 = vadd.f32 %v1632, %v1633
    %v1664 = vrot.slane %v1663, 4
    %v1665 = vadd.f32 %v1663, %v1664
    %v1666 = vrot.slane %v1665, 2
    %v1667 = vadd.f32 %v1665, %v1666
    %v1668 = vrot.slane %v1667, 1
    %v1669 = vadd.f32 %v1667, %v1668
    %v1670 = vadd.f32 %v1634, %v1635
    %v1671 = vrot.slane %v1670, 4
    %v1672 = vadd.f32 %v1670, %v1671
    %v1673 = vrot.slane %v1672, 2
    %v1674 = vadd.f32 %v1672, %v1673
    %v1675 = vrot.slane %v1674, 1
    %v1676 = vadd.f32 %v1674, %v1675
    %v1677 = vadd.f32 %v1636, %v1637
    %v1678 = vrot.slane %v1677, 4
    %v1679 = vadd.f32 %v1677, %v1678
    %v1680 = vrot.slane %v1679, 2
    %v1681 = vadd.f32 %v1679, %v1680
    %v1682 = vrot.slane %v1681, 1
    %v1683 = vadd.f32 %v1681, %v1682
    %v1684 = vadd.f32 %v1638, %v1639
    %v1685 = vrot.slane %v1684, 4
    %v1686 = vadd.f32 %v1684, %v1685
    %v1687 = vrot.slane %v1686, 2
    %v1688 = vadd.f32 %v1686, %v1687
    %v1689 = vrot.slane %v1688, 1
    %v1690 = vadd.f32 %v1688, %v1689
    %v1691 = vadd.f32 %v1640, %v1641
    %v1692 = vrot.slane %v1691, 4
    %v1693 = vadd.f32 %v1691, %v1692
    %v1694 = vrot.slane %v1693, 2
    %v1695 = vadd.f32 %v1693, %v1694
    %v1696 = vrot.slane %v1695, 1
    %v1697 = vadd.f32 %v1695, %v1696
    %v1698 = vadd.f32 %v1389, %v1648
    %v1699 = vadd.f32 %v1390, %v1655
    %v1700 = vadd.f32 %v1391, %v1662
    %v1701 = vadd.f32 %v1392, %v1669
    %v1702 = vadd.f32 %v1393, %v1676
    %v1703 = vadd.f32 %v1394, %v1683
    %v1704 = vadd.f32 %v1395, %v1690
    %v1705 = vadd.f32 %v1396, %v1697
    %s1706 = sld [smem:[#allocation3 + $0x5]]
    %v1707 = vstv %s1706
    %v1708 = vsub.f32 %v146, %v1707
    %v1709 = vsub.f32 %v147, %v1707
    %v1710 = vsub.f32 %v148, %v1707
    %v1711 = vsub.f32 %v149, %v1707
    %v1712 = vsub.f32 %v150, %v1707
    %v1713 = vsub.f32 %v151, %v1707
    %v1714 = vsub.f32 %v152, %v1707
    %v1715 = vsub.f32 %v153, %v1707
    %v1716 = vsub.f32 %v154, %v1707
    %v1717 = vsub.f32 %v155, %v1707
    %v1718 = vsub.f32 %v156, %v1707
    %v1719 = vsub.f32 %v157, %v1707
    %v1720 = vsub.f32 %v158, %v1707
    %v1721 = vsub.f32 %v159, %v1707
    %v1722 = vsub.f32 %v160, %v1707
    %v1723 = vsub.f32 %v161, %v1707
    %v1724 = vand.u32 2147483647, %v1708
    %v1725 = vand.u32 2147483647, %v1709
    %v1726 = vand.u32 2147483647, %v1710
    %v1727 = vand.u32 2147483647, %v1711
    %v1728 = vand.u32 2147483647, %v1712
    %v1729 = vand.u32 2147483647, %v1713
    %v1730 = vand.u32 2147483647, %v1714
    %v1731 = vand.u32 2147483647, %v1715
    %v1732 = vand.u32 2147483647, %v1716
    %v1733 = vand.u32 2147483647, %v1717
    %v1734 = vand.u32 2147483647, %v1718
    %v1735 = vand.u32 2147483647, %v1719
    %v1736 = vand.u32 2147483647, %v1720
    %v1737 = vand.u32 2147483647, %v1721
    %v1738 = vand.u32 2147483647, %v1722
    %v1739 = vand.u32 2147483647, %v1723
    %v1740 = vmul.f32 %v1724, %v1724
    %v1741 = vmul.f32 %v1725, %v1725
    %v1742 = vmul.f32 %v1726, %v1726
    %v1743 = vmul.f32 %v1727, %v1727
    %v1744 = vmul.f32 %v1728, %v1728
    %v1745 = vmul.f32 %v1729, %v1729
    %v1746 = vmul.f32 %v1730, %v1730
    %v1747 = vmul.f32 %v1731, %v1731
    %v1748 = vmul.f32 %v1732, %v1732
    %v1749 = vmul.f32 %v1733, %v1733
    %v1750 = vmul.f32 %v1734, %v1734
    %v1751 = vmul.f32 %v1735, %v1735
    %v1752 = vmul.f32 %v1736, %v1736
    %v1753 = vmul.f32 %v1737, %v1737
    %v1754 = vmul.f32 %v1738, %v1738
    %v1755 = vmul.f32 %v1739, %v1739
    %v1756 = vmul.f32 %v1724, 0.5
    %v1757 = vmul.f32 %v1725, 0.5
    %v1758 = vmul.f32 %v1726, 0.5
    %v1759 = vmul.f32 %v1727, 0.5
    %v1760 = vmul.f32 %v1728, 0.5
    %v1761 = vmul.f32 %v1729, 0.5
    %v1762 = vmul.f32 %v1730, 0.5
    %v1763 = vmul.f32 %v1731, 0.5
    %v1764 = vmul.f32 %v1732, 0.5
    %v1765 = vmul.f32 %v1733, 0.5
    %v1766 = vmul.f32 %v1734, 0.5
    %v1767 = vmul.f32 %v1735, 0.5
    %v1768 = vmul.f32 %v1736, 0.5
    %v1769 = vmul.f32 %v1737, 0.5
    %v1770 = vmul.f32 %v1738, 0.5
    %v1771 = vmul.f32 %v1739, 0.5
    %v1772 = vsub.f32 %v1756, 1.0
    %v1773 = vsub.f32 %v1757, 1.0
    %v1774 = vsub.f32 %v1758, 1.0
    %v1775 = vsub.f32 %v1759, 1.0
    %v1776 = vsub.f32 %v1760, 1.0
    %v1777 = vsub.f32 %v1761, 1.0
    %v1778 = vsub.f32 %v1762, 1.0
    %v1779 = vsub.f32 %v1763, 1.0
    %v1780 = vsub.f32 %v1764, 1.0
    %v1781 = vsub.f32 %v1765, 1.0
    %v1782 = vsub.f32 %v1766, 1.0
    %v1783 = vsub.f32 %v1767, 1.0
    %v1784 = vsub.f32 %v1768, 1.0
    %v1785 = vsub.f32 %v1769, 1.0
    %v1786 = vsub.f32 %v1770, 1.0
    %v1787 = vsub.f32 %v1771, 1.0
    %v1788 = vmul.f32 %v1740, %v1772
    %v1789 = vmul.f32 %v1741, %v1773
    %v1790 = vmul.f32 %v1742, %v1774
    %v1791 = vmul.f32 %v1743, %v1775
    %v1792 = vmul.f32 %v1744, %v1776
    %v1793 = vmul.f32 %v1745, %v1777
    %v1794 = vmul.f32 %v1746, %v1778
    %v1795 = vmul.f32 %v1747, %v1779
    %v1796 = vmul.f32 %v1748, %v1780
    %v1797 = vmul.f32 %v1749, %v1781
    %v1798 = vmul.f32 %v1750, %v1782
    %v1799 = vmul.f32 %v1751, %v1783
    %v1800 = vmul.f32 %v1752, %v1784
    %v1801 = vmul.f32 %v1753, %v1785
    %v1802 = vmul.f32 %v1754, %v1786
    %v1803 = vmul.f32 %v1755, %v1787
    %v1804 = vadd.f32 %v1788, 0.6666667
    %v1805 = vadd.f32 %v1789, 0.6666667
    %v1806 = vadd.f32 %v1790, 0.6666667
    %v1807 = vadd.f32 %v1791, 0.6666667
    %v1808 = vadd.f32 %v1792, 0.6666667
    %v1809 = vadd.f32 %v1793, 0.6666667
    %v1810 = vadd.f32 %v1794, 0.6666667
    %v1811 = vadd.f32 %v1795, 0.6666667
    %v1812 = vadd.f32 %v1796, 0.6666667
    %v1813 = vadd.f32 %v1797, 0.6666667
    %v1814 = vadd.f32 %v1798, 0.6666667
    %v1815 = vadd.f32 %v1799, 0.6666667
    %v1816 = vadd.f32 %v1800, 0.6666667
    %v1817 = vadd.f32 %v1801, 0.6666667
    %v1818 = vadd.f32 %v1802, 0.6666667
    %v1819 = vadd.f32 %v1803, 0.6666667
    %v1820 = vsub.f32 2.0, %v1724
    %v1821 = vsub.f32 2.0, %v1725
    %v1822 = vsub.f32 2.0, %v1726
    %v1823 = vsub.f32 2.0, %v1727
    %v1824 = vsub.f32 2.0, %v1728
    %v1825 = vsub.f32 2.0, %v1729
    %v1826 = vsub.f32 2.0, %v1730
    %v1827 = vsub.f32 2.0, %v1731
    %v1828 = vsub.f32 2.0, %v1732
    %v1829 = vsub.f32 2.0, %v1733
    %v1830 = vsub.f32 2.0, %v1734
    %v1831 = vsub.f32 2.0, %v1735
    %v1832 = vsub.f32 2.0, %v1736
    %v1833 = vsub.f32 2.0, %v1737
    %v1834 = vsub.f32 2.0, %v1738
    %v1835 = vsub.f32 2.0, %v1739
    %v1836 = vmax.f32 %v1820, 0.0
    %v1837 = vmax.f32 %v1821, 0.0
    %v1838 = vmax.f32 %v1822, 0.0
    %v1839 = vmax.f32 %v1823, 0.0
    %v1840 = vmax.f32 %v1824, 0.0
    %v1841 = vmax.f32 %v1825, 0.0
    %v1842 = vmax.f32 %v1826, 0.0
    %v1843 = vmax.f32 %v1827, 0.0
    %v1844 = vmax.f32 %v1828, 0.0
    %v1845 = vmax.f32 %v1829, 0.0
    %v1846 = vmax.f32 %v1830, 0.0
    %v1847 = vmax.f32 %v1831, 0.0
    %v1848 = vmax.f32 %v1832, 0.0
    %v1849 = vmax.f32 %v1833, 0.0
    %v1850 = vmax.f32 %v1834, 0.0
    %v1851 = vmax.f32 %v1835, 0.0
    %v1852 = vmul.f32 %v1836, %v1836
    %v1853 = vmul.f32 %v1837, %v1837
    %v1854 = vmul.f32 %v1838, %v1838
    %v1855 = vmul.f32 %v1839, %v1839
    %v1856 = vmul.f32 %v1840, %v1840
    %v1857 = vmul.f32 %v1841, %v1841
    %v1858 = vmul.f32 %v1842, %v1842
    %v1859 = vmul.f32 %v1843, %v1843
    %v1860 = vmul.f32 %v1844, %v1844
    %v1861 = vmul.f32 %v1845, %v1845
    %v1862 = vmul.f32 %v1846, %v1846
    %v1863 = vmul.f32 %v1847, %v1847
    %v1864 = vmul.f32 %v1848, %v1848
    %v1865 = vmul.f32 %v1849, %v1849
    %v1866 = vmul.f32 %v1850, %v1850
    %v1867 = vmul.f32 %v1851, %v1851
    %v1868 = vmul.f32 %v1852, %v1836
    %v1869 = vmul.f32 %v1853, %v1837
    %v1870 = vmul.f32 %v1854, %v1838
    %v1871 = vmul.f32 %v1855, %v1839
    %v1872 = vmul.f32 %v1856, %v1840
    %v1873 = vmul.f32 %v1857, %v1841
    %v1874 = vmul.f32 %v1858, %v1842
    %v1875 = vmul.f32 %v1859, %v1843
    %v1876 = vmul.f32 %v1860, %v1844
    %v1877 = vmul.f32 %v1861, %v1845
    %v1878 = vmul.f32 %v1862, %v1846
    %v1879 = vmul.f32 %v1863, %v1847
    %v1880 = vmul.f32 %v1864, %v1848
    %v1881 = vmul.f32 %v1865, %v1849
    %v1882 = vmul.f32 %v1866, %v1850
    %v1883 = vmul.f32 %v1867, %v1851
    %v1884 = vmul.f32 %v1868, 0.16666667
    %v1885 = vmul.f32 %v1869, 0.16666667
    %v1886 = vmul.f32 %v1870, 0.16666667
    %v1887 = vmul.f32 %v1871, 0.16666667
    %v1888 = vmul.f32 %v1872, 0.16666667
    %v1889 = vmul.f32 %v1873, 0.16666667
    %v1890 = vmul.f32 %v1874, 0.16666667
    %v1891 = vmul.f32 %v1875, 0.16666667
    %v1892 = vmul.f32 %v1876, 0.16666667
    %v1893 = vmul.f32 %v1877, 0.16666667
    %v1894 = vmul.f32 %v1878, 0.16666667
    %v1895 = vmul.f32 %v1879, 0.16666667
    %v1896 = vmul.f32 %v1880, 0.16666667
    %v1897 = vmul.f32 %v1881, 0.16666667
    %v1898 = vmul.f32 %v1882, 0.16666667
    %v1899 = vmul.f32 %v1883, 0.16666667
    %vm1900 = vcmp.lt.f32.partialorder %v1724, 1.0
    %vm1901 = vcmp.lt.f32.partialorder %v1725, 1.0
    %vm1902 = vcmp.lt.f32.partialorder %v1726, 1.0
    %vm1903 = vcmp.lt.f32.partialorder %v1727, 1.0
    %vm1904 = vcmp.lt.f32.partialorder %v1728, 1.0
    %vm1905 = vcmp.lt.f32.partialorder %v1729, 1.0
    %vm1906 = vcmp.lt.f32.partialorder %v1730, 1.0
    %vm1907 = vcmp.lt.f32.partialorder %v1731, 1.0
    %vm1908 = vcmp.lt.f32.partialorder %v1732, 1.0
    %vm1909 = vcmp.lt.f32.partialorder %v1733, 1.0
    %vm1910 = vcmp.lt.f32.partialorder %v1734, 1.0
    %vm1911 = vcmp.lt.f32.partialorder %v1735, 1.0
    %vm1912 = vcmp.lt.f32.partialorder %v1736, 1.0
    %vm1913 = vcmp.lt.f32.partialorder %v1737, 1.0
    %vm1914 = vcmp.lt.f32.partialorder %v1738, 1.0
    %vm1915 = vcmp.lt.f32.partialorder %v1739, 1.0
    %v1916 = vsel %vm1900, %v1804, %v1884
    %v1917 = vsel %vm1901, %v1805, %v1885
    %v1918 = vsel %vm1902, %v1806, %v1886
    %v1919 = vsel %vm1903, %v1807, %v1887
    %v1920 = vsel %vm1904, %v1808, %v1888
    %v1921 = vsel %vm1905, %v1809, %v1889
    %v1922 = vsel %vm1906, %v1810, %v1890
    %v1923 = vsel %vm1907, %v1811, %v1891
    %v1924 = vsel %vm1908, %v1812, %v1892
    %v1925 = vsel %vm1909, %v1813, %v1893
    %v1926 = vsel %vm1910, %v1814, %v1894
    %v1927 = vsel %vm1911, %v1815, %v1895
    %v1928 = vsel %vm1912, %v1816, %v1896
    %v1929 = vsel %vm1913, %v1817, %v1897
    %v1930 = vsel %vm1914, %v1818, %v1898
    %v1931 = vsel %vm1915, %v1819, %v1899
    %s1932 = scalar_lea.vmem [#allocation4], 80
    %v1933 = vld [vmem:[%s1932] sm:$0xff]
    %v1934 = vld [vmem:[%s1932 + $0x8] sm:$0xff]
    %v1935 = vmul.f32 %v1916, %v1933
    %v1936 = vmul.f32 %v1917, %v1934
    %v1937 = vmul.f32 %v1918, %v1933
    %v1938 = vmul.f32 %v1919, %v1934
    %v1939 = vmul.f32 %v1920, %v1933
    %v1940 = vmul.f32 %v1921, %v1934
    %v1941 = vmul.f32 %v1922, %v1933
    %v1942 = vmul.f32 %v1923, %v1934
    %v1943 = vmul.f32 %v1924, %v1933
    %v1944 = vmul.f32 %v1925, %v1934
    %v1945 = vmul.f32 %v1926, %v1933
    %v1946 = vmul.f32 %v1927, %v1934
    %v1947 = vmul.f32 %v1928, %v1933
    %v1948 = vmul.f32 %v1929, %v1934
    %v1949 = vmul.f32 %v1930, %v1933
    %v1950 = vmul.f32 %v1931, %v1934
    %v1951 = vadd.f32 %v1935, %v1936
    %v1952 = vrot.slane %v1951, 4
    %v1953 = vadd.f32 %v1951, %v1952
    %v1954 = vrot.slane %v1953, 2
    %v1955 = vadd.f32 %v1953, %v1954
    %v1956 = vrot.slane %v1955, 1
    %v1957 = vadd.f32 %v1955, %v1956
    %v1958 = vadd.f32 %v1937, %v1938
    %v1959 = vrot.slane %v1958, 4
    %v1960 = vadd.f32 %v1958, %v1959
    %v1961 = vrot.slane %v1960, 2
    %v1962 = vadd.f32 %v1960, %v1961
    %v1963 = vrot.slane %v1962, 1
    %v1964 = vadd.f32 %v1962, %v1963
    %v1965 = vadd.f32 %v1939, %v1940
    %v1966 = vrot.slane %v1965, 4
    %v1967 = vadd.f32 %v1965, %v1966
    %v1968 = vrot.slane %v1967, 2
    %v1969 = vadd.f32 %v1967, %v1968
    %v1970 = vrot.slane %v1969, 1
    %v1971 = vadd.f32 %v1969, %v1970
    %v1972 = vadd.f32 %v1941, %v1942
    %v1973 = vrot.slane %v1972, 4
    %v1974 = vadd.f32 %v1972, %v1973
    %v1975 = vrot.slane %v1974, 2
    %v1976 = vadd.f32 %v1974, %v1975
    %v1977 = vrot.slane %v1976, 1
    %v1978 = vadd.f32 %v1976, %v1977
    %v1979 = vadd.f32 %v1943, %v1944
    %v1980 = vrot.slane %v1979, 4
    %v1981 = vadd.f32 %v1979, %v1980
    %v1982 = vrot.slane %v1981, 2
    %v1983 = vadd.f32 %v1981, %v1982
    %v1984 = vrot.slane %v1983, 1
    %v1985 = vadd.f32 %v1983, %v1984
    %v1986 = vadd.f32 %v1945, %v1946
    %v1987 = vrot.slane %v1986, 4
    %v1988 = vadd.f32 %v1986, %v1987
    %v1989 = vrot.slane %v1988, 2
    %v1990 = vadd.f32 %v1988, %v1989
    %v1991 = vrot.slane %v1990, 1
    %v1992 = vadd.f32 %v1990, %v1991
    %v1993 = vadd.f32 %v1947, %v1948
    %v1994 = vrot.slane %v1993, 4
    %v1995 = vadd.f32 %v1993, %v1994
    %v1996 = vrot.slane %v1995, 2
    %v1997 = vadd.f32 %v1995, %v1996
    %v1998 = vrot.slane %v1997, 1
    %v1999 = vadd.f32 %v1997, %v1998
    %v2000 = vadd.f32 %v1949, %v1950
    %v2001 = vrot.slane %v2000, 4
    %v2002 = vadd.f32 %v2000, %v2001
    %v2003 = vrot.slane %v2002, 2
    %v2004 = vadd.f32 %v2002, %v2003
    %v2005 = vrot.slane %v2004, 1
    %v2006 = vadd.f32 %v2004, %v2005
    %v2007 = vadd.f32 %v1698, %v1957
    %v2008 = vadd.f32 %v1699, %v1964
    %v2009 = vadd.f32 %v1700, %v1971
    %v2010 = vadd.f32 %v1701, %v1978
    %v2011 = vadd.f32 %v1702, %v1985
    %v2012 = vadd.f32 %v1703, %v1992
    %v2013 = vadd.f32 %v1704, %v1999
    %v2014 = vadd.f32 %v1705, %v2006
    %s2015 = sld [smem:[#allocation3 + $0x6]]
    %v2016 = vstv %s2015
    %v2017 = vsub.f32 %v146, %v2016
    %v2018 = vsub.f32 %v147, %v2016
    %v2019 = vsub.f32 %v148, %v2016
    %v2020 = vsub.f32 %v149, %v2016
    %v2021 = vsub.f32 %v150, %v2016
    %v2022 = vsub.f32 %v151, %v2016
    %v2023 = vsub.f32 %v152, %v2016
    %v2024 = vsub.f32 %v153, %v2016
    %v2025 = vsub.f32 %v154, %v2016
    %v2026 = vsub.f32 %v155, %v2016
    %v2027 = vsub.f32 %v156, %v2016
    %v2028 = vsub.f32 %v157, %v2016
    %v2029 = vsub.f32 %v158, %v2016
    %v2030 = vsub.f32 %v159, %v2016
    %v2031 = vsub.f32 %v160, %v2016
    %v2032 = vsub.f32 %v161, %v2016
    %v2033 = vand.u32 2147483647, %v2017
    %v2034 = vand.u32 2147483647, %v2018
    %v2035 = vand.u32 2147483647, %v2019
    %v2036 = vand.u32 2147483647, %v2020
    %v2037 = vand.u32 2147483647, %v2021
    %v2038 = vand.u32 2147483647, %v2022
    %v2039 = vand.u32 2147483647, %v2023
    %v2040 = vand.u32 2147483647, %v2024
    %v2041 = vand.u32 2147483647, %v2025
    %v2042 = vand.u32 2147483647, %v2026
    %v2043 = vand.u32 2147483647, %v2027
    %v2044 = vand.u32 2147483647, %v2028
    %v2045 = vand.u32 2147483647, %v2029
    %v2046 = vand.u32 2147483647, %v2030
    %v2047 = vand.u32 2147483647, %v2031
    %v2048 = vand.u32 2147483647, %v2032
    %v2049 = vmul.f32 %v2033, %v2033
    %v2050 = vmul.f32 %v2034, %v2034
    %v2051 = vmul.f32 %v2035, %v2035
    %v2052 = vmul.f32 %v2036, %v2036
    %v2053 = vmul.f32 %v2037, %v2037
    %v2054 = vmul.f32 %v2038, %v2038
    %v2055 = vmul.f32 %v2039, %v2039
    %v2056 = vmul.f32 %v2040, %v2040
    %v2057 = vmul.f32 %v2041, %v2041
    %v2058 = vmul.f32 %v2042, %v2042
    %v2059 = vmul.f32 %v2043, %v2043
    %v2060 = vmul.f32 %v2044, %v2044
    %v2061 = vmul.f32 %v2045, %v2045
    %v2062 = vmul.f32 %v2046, %v2046
    %v2063 = vmul.f32 %v2047, %v2047
    %v2064 = vmul.f32 %v2048, %v2048
    %v2065 = vmul.f32 %v2033, 0.5
    %v2066 = vmul.f32 %v2034, 0.5
    %v2067 = vmul.f32 %v2035, 0.5
    %v2068 = vmul.f32 %v2036, 0.5
    %v2069 = vmul.f32 %v2037, 0.5
    %v2070 = vmul.f32 %v2038, 0.5
    %v2071 = vmul.f32 %v2039, 0.5
    %v2072 = vmul.f32 %v2040, 0.5
    %v2073 = vmul.f32 %v2041, 0.5
    %v2074 = vmul.f32 %v2042, 0.5
    %v2075 = vmul.f32 %v2043, 0.5
    %v2076 = vmul.f32 %v2044, 0.5
    %v2077 = vmul.f32 %v2045, 0.5
    %v2078 = vmul.f32 %v2046, 0.5
    %v2079 = vmul.f32 %v2047, 0.5
    %v2080 = vmul.f32 %v2048, 0.5
    %v2081 = vsub.f32 %v2065, 1.0
    %v2082 = vsub.f32 %v2066, 1.0
    %v2083 = vsub.f32 %v2067, 1.0
    %v2084 = vsub.f32 %v2068, 1.0
    %v2085 = vsub.f32 %v2069, 1.0
    %v2086 = vsub.f32 %v2070, 1.0
    %v2087 = vsub.f32 %v2071, 1.0
    %v2088 = vsub.f32 %v2072, 1.0
    %v2089 = vsub.f32 %v2073, 1.0
    %v2090 = vsub.f32 %v2074, 1.0
    %v2091 = vsub.f32 %v2075, 1.0
    %v2092 = vsub.f32 %v2076, 1.0
    %v2093 = vsub.f32 %v2077, 1.0
    %v2094 = vsub.f32 %v2078, 1.0
    %v2095 = vsub.f32 %v2079, 1.0
    %v2096 = vsub.f32 %v2080, 1.0
    %v2097 = vmul.f32 %v2049, %v2081
    %v2098 = vmul.f32 %v2050, %v2082
    %v2099 = vmul.f32 %v2051, %v2083
    %v2100 = vmul.f32 %v2052, %v2084
    %v2101 = vmul.f32 %v2053, %v2085
    %v2102 = vmul.f32 %v2054, %v2086
    %v2103 = vmul.f32 %v2055, %v2087
    %v2104 = vmul.f32 %v2056, %v2088
    %v2105 = vmul.f32 %v2057, %v2089
    %v2106 = vmul.f32 %v2058, %v2090
    %v2107 = vmul.f32 %v2059, %v2091
    %v2108 = vmul.f32 %v2060, %v2092
    %v2109 = vmul.f32 %v2061, %v2093
    %v2110 = vmul.f32 %v2062, %v2094
    %v2111 = vmul.f32 %v2063, %v2095
    %v2112 = vmul.f32 %v2064, %v2096
    %v2113 = vadd.f32 %v2097, 0.6666667
    %v2114 = vadd.f32 %v2098, 0.6666667
    %v2115 = vadd.f32 %v2099, 0.6666667
    %v2116 = vadd.f32 %v2100, 0.6666667
    %v2117 = vadd.f32 %v2101, 0.6666667
    %v2118 = vadd.f32 %v2102, 0.6666667
    %v2119 = vadd.f32 %v2103, 0.6666667
    %v2120 = vadd.f32 %v2104, 0.6666667
    %v2121 = vadd.f32 %v2105, 0.6666667
    %v2122 = vadd.f32 %v2106, 0.6666667
    %v2123 = vadd.f32 %v2107, 0.6666667
    %v2124 = vadd.f32 %v2108, 0.6666667
    %v2125 = vadd.f32 %v2109, 0.6666667
    %v2126 = vadd.f32 %v2110, 0.6666667
    %v2127 = vadd.f32 %v2111, 0.6666667
    %v2128 = vadd.f32 %v2112, 0.6666667
    %v2129 = vsub.f32 2.0, %v2033
    %v2130 = vsub.f32 2.0, %v2034
    %v2131 = vsub.f32 2.0, %v2035
    %v2132 = vsub.f32 2.0, %v2036
    %v2133 = vsub.f32 2.0, %v2037
    %v2134 = vsub.f32 2.0, %v2038
    %v2135 = vsub.f32 2.0, %v2039
    %v2136 = vsub.f32 2.0, %v2040
    %v2137 = vsub.f32 2.0, %v2041
    %v2138 = vsub.f32 2.0, %v2042
    %v2139 = vsub.f32 2.0, %v2043
    %v2140 = vsub.f32 2.0, %v2044
    %v2141 = vsub.f32 2.0, %v2045
    %v2142 = vsub.f32 2.0, %v2046
    %v2143 = vsub.f32 2.0, %v2047
    %v2144 = vsub.f32 2.0, %v2048
    %v2145 = vmax.f32 %v2129, 0.0
    %v2146 = vmax.f32 %v2130, 0.0
    %v2147 = vmax.f32 %v2131, 0.0
    %v2148 = vmax.f32 %v2132, 0.0
    %v2149 = vmax.f32 %v2133, 0.0
    %v2150 = vmax.f32 %v2134, 0.0
    %v2151 = vmax.f32 %v2135, 0.0
    %v2152 = vmax.f32 %v2136, 0.0
    %v2153 = vmax.f32 %v2137, 0.0
    %v2154 = vmax.f32 %v2138, 0.0
    %v2155 = vmax.f32 %v2139, 0.0
    %v2156 = vmax.f32 %v2140, 0.0
    %v2157 = vmax.f32 %v2141, 0.0
    %v2158 = vmax.f32 %v2142, 0.0
    %v2159 = vmax.f32 %v2143, 0.0
    %v2160 = vmax.f32 %v2144, 0.0
    %v2161 = vmul.f32 %v2145, %v2145
    %v2162 = vmul.f32 %v2146, %v2146
    %v2163 = vmul.f32 %v2147, %v2147
    %v2164 = vmul.f32 %v2148, %v2148
    %v2165 = vmul.f32 %v2149, %v2149
    %v2166 = vmul.f32 %v2150, %v2150
    %v2167 = vmul.f32 %v2151, %v2151
    %v2168 = vmul.f32 %v2152, %v2152
    %v2169 = vmul.f32 %v2153, %v2153
    %v2170 = vmul.f32 %v2154, %v2154
    %v2171 = vmul.f32 %v2155, %v2155
    %v2172 = vmul.f32 %v2156, %v2156
    %v2173 = vmul.f32 %v2157, %v2157
    %v2174 = vmul.f32 %v2158, %v2158
    %v2175 = vmul.f32 %v2159, %v2159
    %v2176 = vmul.f32 %v2160, %v2160
    %v2177 = vmul.f32 %v2161, %v2145
    %v2178 = vmul.f32 %v2162, %v2146
    %v2179 = vmul.f32 %v2163, %v2147
    %v2180 = vmul.f32 %v2164, %v2148
    %v2181 = vmul.f32 %v2165, %v2149
    %v2182 = vmul.f32 %v2166, %v2150
    %v2183 = vmul.f32 %v2167, %v2151
    %v2184 = vmul.f32 %v2168, %v2152
    %v2185 = vmul.f32 %v2169, %v2153
    %v2186 = vmul.f32 %v2170, %v2154
    %v2187 = vmul.f32 %v2171, %v2155
    %v2188 = vmul.f32 %v2172, %v2156
    %v2189 = vmul.f32 %v2173, %v2157
    %v2190 = vmul.f32 %v2174, %v2158
    %v2191 = vmul.f32 %v2175, %v2159
    %v2192 = vmul.f32 %v2176, %v2160
    %v2193 = vmul.f32 %v2177, 0.16666667
    %v2194 = vmul.f32 %v2178, 0.16666667
    %v2195 = vmul.f32 %v2179, 0.16666667
    %v2196 = vmul.f32 %v2180, 0.16666667
    %v2197 = vmul.f32 %v2181, 0.16666667
    %v2198 = vmul.f32 %v2182, 0.16666667
    %v2199 = vmul.f32 %v2183, 0.16666667
    %v2200 = vmul.f32 %v2184, 0.16666667
    %v2201 = vmul.f32 %v2185, 0.16666667
    %v2202 = vmul.f32 %v2186, 0.16666667
    %v2203 = vmul.f32 %v2187, 0.16666667
    %v2204 = vmul.f32 %v2188, 0.16666667
    %v2205 = vmul.f32 %v2189, 0.16666667
    %v2206 = vmul.f32 %v2190, 0.16666667
    %v2207 = vmul.f32 %v2191, 0.16666667
    %v2208 = vmul.f32 %v2192, 0.16666667
    %vm2209 = vcmp.lt.f32.partialorder %v2033, 1.0
    %vm2210 = vcmp.lt.f32.partialorder %v2034, 1.0
    %vm2211 = vcmp.lt.f32.partialorder %v2035, 1.0
    %vm2212 = vcmp.lt.f32.partialorder %v2036, 1.0
    %vm2213 = vcmp.lt.f32.partialorder %v2037, 1.0
    %vm2214 = vcmp.lt.f32.partialorder %v2038, 1.0
    %vm2215 = vcmp.lt.f32.partialorder %v2039, 1.0
    %vm2216 = vcmp.lt.f32.partialorder %v2040, 1.0
    %vm2217 = vcmp.lt.f32.partialorder %v2041, 1.0
    %vm2218 = vcmp.lt.f32.partialorder %v2042, 1.0
    %vm2219 = vcmp.lt.f32.partialorder %v2043, 1.0
    %vm2220 = vcmp.lt.f32.partialorder %v2044, 1.0
    %vm2221 = vcmp.lt.f32.partialorder %v2045, 1.0
    %vm2222 = vcmp.lt.f32.partialorder %v2046, 1.0
    %vm2223 = vcmp.lt.f32.partialorder %v2047, 1.0
    %vm2224 = vcmp.lt.f32.partialorder %v2048, 1.0
    %v2225 = vsel %vm2209, %v2113, %v2193
    %v2226 = vsel %vm2210, %v2114, %v2194
    %v2227 = vsel %vm2211, %v2115, %v2195
    %v2228 = vsel %vm2212, %v2116, %v2196
    %v2229 = vsel %vm2213, %v2117, %v2197
    %v2230 = vsel %vm2214, %v2118, %v2198
    %v2231 = vsel %vm2215, %v2119, %v2199
    %v2232 = vsel %vm2216, %v2120, %v2200
    %v2233 = vsel %vm2217, %v2121, %v2201
    %v2234 = vsel %vm2218, %v2122, %v2202
    %v2235 = vsel %vm2219, %v2123, %v2203
    %v2236 = vsel %vm2220, %v2124, %v2204
    %v2237 = vsel %vm2221, %v2125, %v2205
    %v2238 = vsel %vm2222, %v2126, %v2206
    %v2239 = vsel %vm2223, %v2127, %v2207
    %v2240 = vsel %vm2224, %v2128, %v2208
    %s2241 = scalar_lea.vmem [#allocation4], 96
    %v2242 = vld [vmem:[%s2241] sm:$0xff]
    %v2243 = vld [vmem:[%s2241 + $0x8] sm:$0xff]
    %v2244 = vmul.f32 %v2225, %v2242
    %v2245 = vmul.f32 %v2226, %v2243
    %v2246 = vmul.f32 %v2227, %v2242
    %v2247 = vmul.f32 %v2228, %v2243
    %v2248 = vmul.f32 %v2229, %v2242
    %v2249 = vmul.f32 %v2230, %v2243
    %v2250 = vmul.f32 %v2231, %v2242
    %v2251 = vmul.f32 %v2232, %v2243
    %v2252 = vmul.f32 %v2233, %v2242
    %v2253 = vmul.f32 %v2234, %v2243
    %v2254 = vmul.f32 %v2235, %v2242
    %v2255 = vmul.f32 %v2236, %v2243
    %v2256 = vmul.f32 %v2237, %v2242
    %v2257 = vmul.f32 %v2238, %v2243
    %v2258 = vmul.f32 %v2239, %v2242
    %v2259 = vmul.f32 %v2240, %v2243
    %v2260 = vadd.f32 %v2244, %v2245
    %v2261 = vrot.slane %v2260, 4
    %v2262 = vadd.f32 %v2260, %v2261
    %v2263 = vrot.slane %v2262, 2
    %v2264 = vadd.f32 %v2262, %v2263
    %v2265 = vrot.slane %v2264, 1
    %v2266 = vadd.f32 %v2264, %v2265
    %v2267 = vadd.f32 %v2246, %v2247
    %v2268 = vrot.slane %v2267, 4
    %v2269 = vadd.f32 %v2267, %v2268
    %v2270 = vrot.slane %v2269, 2
    %v2271 = vadd.f32 %v2269, %v2270
    %v2272 = vrot.slane %v2271, 1
    %v2273 = vadd.f32 %v2271, %v2272
    %v2274 = vadd.f32 %v2248, %v2249
    %v2275 = vrot.slane %v2274, 4
    %v2276 = vadd.f32 %v2274, %v2275
    %v2277 = vrot.slane %v2276, 2
    %v2278 = vadd.f32 %v2276, %v2277
    %v2279 = vrot.slane %v2278, 1
    %v2280 = vadd.f32 %v2278, %v2279
    %v2281 = vadd.f32 %v2250, %v2251
    %v2282 = vrot.slane %v2281, 4
    %v2283 = vadd.f32 %v2281, %v2282
    %v2284 = vrot.slane %v2283, 2
    %v2285 = vadd.f32 %v2283, %v2284
    %v2286 = vrot.slane %v2285, 1
    %v2287 = vadd.f32 %v2285, %v2286
    %v2288 = vadd.f32 %v2252, %v2253
    %v2289 = vrot.slane %v2288, 4
    %v2290 = vadd.f32 %v2288, %v2289
    %v2291 = vrot.slane %v2290, 2
    %v2292 = vadd.f32 %v2290, %v2291
    %v2293 = vrot.slane %v2292, 1
    %v2294 = vadd.f32 %v2292, %v2293
    %v2295 = vadd.f32 %v2254, %v2255
    %v2296 = vrot.slane %v2295, 4
    %v2297 = vadd.f32 %v2295, %v2296
    %v2298 = vrot.slane %v2297, 2
    %v2299 = vadd.f32 %v2297, %v2298
    %v2300 = vrot.slane %v2299, 1
    %v2301 = vadd.f32 %v2299, %v2300
    %v2302 = vadd.f32 %v2256, %v2257
    %v2303 = vrot.slane %v2302, 4
    %v2304 = vadd.f32 %v2302, %v2303
    %v2305 = vrot.slane %v2304, 2
    %v2306 = vadd.f32 %v2304, %v2305
    %v2307 = vrot.slane %v2306, 1
    %v2308 = vadd.f32 %v2306, %v2307
    %v2309 = vadd.f32 %v2258, %v2259
    %v2310 = vrot.slane %v2309, 4
    %v2311 = vadd.f32 %v2309, %v2310
    %v2312 = vrot.slane %v2311, 2
    %v2313 = vadd.f32 %v2311, %v2312
    %v2314 = vrot.slane %v2313, 1
    %v2315 = vadd.f32 %v2313, %v2314
    %v2316 = vadd.f32 %v2007, %v2266
    %v2317 = vadd.f32 %v2008, %v2273
    %v2318 = vadd.f32 %v2009, %v2280
    %v2319 = vadd.f32 %v2010, %v2287
    %v2320 = vadd.f32 %v2011, %v2294
    %v2321 = vadd.f32 %v2012, %v2301
    %v2322 = vadd.f32 %v2013, %v2308
    %v2323 = vadd.f32 %v2014, %v2315
    %s2324 = sld [smem:[#allocation3 + $0x7]]
    %v2325 = vstv %s2324
    %v2326 = vsub.f32 %v146, %v2325
    %v2327 = vsub.f32 %v147, %v2325
    %v2328 = vsub.f32 %v148, %v2325
    %v2329 = vsub.f32 %v149, %v2325
    %v2330 = vsub.f32 %v150, %v2325
    %v2331 = vsub.f32 %v151, %v2325
    %v2332 = vsub.f32 %v152, %v2325
    %v2333 = vsub.f32 %v153, %v2325
    %v2334 = vsub.f32 %v154, %v2325
    %v2335 = vsub.f32 %v155, %v2325
    %v2336 = vsub.f32 %v156, %v2325
    %v2337 = vsub.f32 %v157, %v2325
    %v2338 = vsub.f32 %v158, %v2325
    %v2339 = vsub.f32 %v159, %v2325
    %v2340 = vsub.f32 %v160, %v2325
    %v2341 = vsub.f32 %v161, %v2325
    %v2342 = vand.u32 2147483647, %v2326
    %v2343 = vand.u32 2147483647, %v2327
    %v2344 = vand.u32 2147483647, %v2328
    %v2345 = vand.u32 2147483647, %v2329
    %v2346 = vand.u32 2147483647, %v2330
    %v2347 = vand.u32 2147483647, %v2331
    %v2348 = vand.u32 2147483647, %v2332
    %v2349 = vand.u32 2147483647, %v2333
    %v2350 = vand.u32 2147483647, %v2334
    %v2351 = vand.u32 2147483647, %v2335
    %v2352 = vand.u32 2147483647, %v2336
    %v2353 = vand.u32 2147483647, %v2337
    %v2354 = vand.u32 2147483647, %v2338
    %v2355 = vand.u32 2147483647, %v2339
    %v2356 = vand.u32 2147483647, %v2340
    %v2357 = vand.u32 2147483647, %v2341
    %v2358 = vmul.f32 %v2342, %v2342
    %v2359 = vmul.f32 %v2343, %v2343
    %v2360 = vmul.f32 %v2344, %v2344
    %v2361 = vmul.f32 %v2345, %v2345
    %v2362 = vmul.f32 %v2346, %v2346
    %v2363 = vmul.f32 %v2347, %v2347
    %v2364 = vmul.f32 %v2348, %v2348
    %v2365 = vmul.f32 %v2349, %v2349
    %v2366 = vmul.f32 %v2350, %v2350
    %v2367 = vmul.f32 %v2351, %v2351
    %v2368 = vmul.f32 %v2352, %v2352
    %v2369 = vmul.f32 %v2353, %v2353
    %v2370 = vmul.f32 %v2354, %v2354
    %v2371 = vmul.f32 %v2355, %v2355
    %v2372 = vmul.f32 %v2356, %v2356
    %v2373 = vmul.f32 %v2357, %v2357
    %v2374 = vmul.f32 %v2342, 0.5
    %v2375 = vmul.f32 %v2343, 0.5
    %v2376 = vmul.f32 %v2344, 0.5
    %v2377 = vmul.f32 %v2345, 0.5
    %v2378 = vmul.f32 %v2346, 0.5
    %v2379 = vmul.f32 %v2347, 0.5
    %v2380 = vmul.f32 %v2348, 0.5
    %v2381 = vmul.f32 %v2349, 0.5
    %v2382 = vmul.f32 %v2350, 0.5
    %v2383 = vmul.f32 %v2351, 0.5
    %v2384 = vmul.f32 %v2352, 0.5
    %v2385 = vmul.f32 %v2353, 0.5
    %v2386 = vmul.f32 %v2354, 0.5
    %v2387 = vmul.f32 %v2355, 0.5
    %v2388 = vmul.f32 %v2356, 0.5
    %v2389 = vmul.f32 %v2357, 0.5
    %v2390 = vsub.f32 %v2374, 1.0
    %v2391 = vsub.f32 %v2375, 1.0
    %v2392 = vsub.f32 %v2376, 1.0
    %v2393 = vsub.f32 %v2377, 1.0
    %v2394 = vsub.f32 %v2378, 1.0
    %v2395 = vsub.f32 %v2379, 1.0
    %v2396 = vsub.f32 %v2380, 1.0
    %v2397 = vsub.f32 %v2381, 1.0
    %v2398 = vsub.f32 %v2382, 1.0
    %v2399 = vsub.f32 %v2383, 1.0
    %v2400 = vsub.f32 %v2384, 1.0
    %v2401 = vsub.f32 %v2385, 1.0
    %v2402 = vsub.f32 %v2386, 1.0
    %v2403 = vsub.f32 %v2387, 1.0
    %v2404 = vsub.f32 %v2388, 1.0
    %v2405 = vsub.f32 %v2389, 1.0
    %v2406 = vmul.f32 %v2358, %v2390
    %v2407 = vmul.f32 %v2359, %v2391
    %v2408 = vmul.f32 %v2360, %v2392
    %v2409 = vmul.f32 %v2361, %v2393
    %v2410 = vmul.f32 %v2362, %v2394
    %v2411 = vmul.f32 %v2363, %v2395
    %v2412 = vmul.f32 %v2364, %v2396
    %v2413 = vmul.f32 %v2365, %v2397
    %v2414 = vmul.f32 %v2366, %v2398
    %v2415 = vmul.f32 %v2367, %v2399
    %v2416 = vmul.f32 %v2368, %v2400
    %v2417 = vmul.f32 %v2369, %v2401
    %v2418 = vmul.f32 %v2370, %v2402
    %v2419 = vmul.f32 %v2371, %v2403
    %v2420 = vmul.f32 %v2372, %v2404
    %v2421 = vmul.f32 %v2373, %v2405
    %v2422 = vadd.f32 %v2406, 0.6666667
    %v2423 = vadd.f32 %v2407, 0.6666667
    %v2424 = vadd.f32 %v2408, 0.6666667
    %v2425 = vadd.f32 %v2409, 0.6666667
    %v2426 = vadd.f32 %v2410, 0.6666667
    %v2427 = vadd.f32 %v2411, 0.6666667
    %v2428 = vadd.f32 %v2412, 0.6666667
    %v2429 = vadd.f32 %v2413, 0.6666667
    %v2430 = vadd.f32 %v2414, 0.6666667
    %v2431 = vadd.f32 %v2415, 0.6666667
    %v2432 = vadd.f32 %v2416, 0.6666667
    %v2433 = vadd.f32 %v2417, 0.6666667
    %v2434 = vadd.f32 %v2418, 0.6666667
    %v2435 = vadd.f32 %v2419, 0.6666667
    %v2436 = vadd.f32 %v2420, 0.6666667
    %v2437 = vadd.f32 %v2421, 0.6666667
    %v2438 = vsub.f32 2.0, %v2342
    %v2439 = vsub.f32 2.0, %v2343
    %v2440 = vsub.f32 2.0, %v2344
    %v2441 = vsub.f32 2.0, %v2345
    %v2442 = vsub.f32 2.0, %v2346
    %v2443 = vsub.f32 2.0, %v2347
    %v2444 = vsub.f32 2.0, %v2348
    %v2445 = vsub.f32 2.0, %v2349
    %v2446 = vsub.f32 2.0, %v2350
    %v2447 = vsub.f32 2.0, %v2351
    %v2448 = vsub.f32 2.0, %v2352
    %v2449 = vsub.f32 2.0, %v2353
    %v2450 = vsub.f32 2.0, %v2354
    %v2451 = vsub.f32 2.0, %v2355
    %v2452 = vsub.f32 2.0, %v2356
    %v2453 = vsub.f32 2.0, %v2357
    %v2454 = vmax.f32 %v2438, 0.0
    %v2455 = vmax.f32 %v2439, 0.0
    %v2456 = vmax.f32 %v2440, 0.0
    %v2457 = vmax.f32 %v2441, 0.0
    %v2458 = vmax.f32 %v2442, 0.0
    %v2459 = vmax.f32 %v2443, 0.0
    %v2460 = vmax.f32 %v2444, 0.0
    %v2461 = vmax.f32 %v2445, 0.0
    %v2462 = vmax.f32 %v2446, 0.0
    %v2463 = vmax.f32 %v2447, 0.0
    %v2464 = vmax.f32 %v2448, 0.0
    %v2465 = vmax.f32 %v2449, 0.0
    %v2466 = vmax.f32 %v2450, 0.0
    %v2467 = vmax.f32 %v2451, 0.0
    %v2468 = vmax.f32 %v2452, 0.0
    %v2469 = vmax.f32 %v2453, 0.0
    %v2470 = vmul.f32 %v2454, %v2454
    %v2471 = vmul.f32 %v2455, %v2455
    %v2472 = vmul.f32 %v2456, %v2456
    %v2473 = vmul.f32 %v2457, %v2457
    %v2474 = vmul.f32 %v2458, %v2458
    %v2475 = vmul.f32 %v2459, %v2459
    %v2476 = vmul.f32 %v2460, %v2460
    %v2477 = vmul.f32 %v2461, %v2461
    %v2478 = vmul.f32 %v2462, %v2462
    %v2479 = vmul.f32 %v2463, %v2463
    %v2480 = vmul.f32 %v2464, %v2464
    %v2481 = vmul.f32 %v2465, %v2465
    %v2482 = vmul.f32 %v2466, %v2466
    %v2483 = vmul.f32 %v2467, %v2467
    %v2484 = vmul.f32 %v2468, %v2468
    %v2485 = vmul.f32 %v2469, %v2469
    %v2486 = vmul.f32 %v2470, %v2454
    %v2487 = vmul.f32 %v2471, %v2455
    %v2488 = vmul.f32 %v2472, %v2456
    %v2489 = vmul.f32 %v2473, %v2457
    %v2490 = vmul.f32 %v2474, %v2458
    %v2491 = vmul.f32 %v2475, %v2459
    %v2492 = vmul.f32 %v2476, %v2460
    %v2493 = vmul.f32 %v2477, %v2461
    %v2494 = vmul.f32 %v2478, %v2462
    %v2495 = vmul.f32 %v2479, %v2463
    %v2496 = vmul.f32 %v2480, %v2464
    %v2497 = vmul.f32 %v2481, %v2465
    %v2498 = vmul.f32 %v2482, %v2466
    %v2499 = vmul.f32 %v2483, %v2467
    %v2500 = vmul.f32 %v2484, %v2468
    %v2501 = vmul.f32 %v2485, %v2469
    %v2502 = vmul.f32 %v2486, 0.16666667
    %v2503 = vmul.f32 %v2487, 0.16666667
    %v2504 = vmul.f32 %v2488, 0.16666667
    %v2505 = vmul.f32 %v2489, 0.16666667
    %v2506 = vmul.f32 %v2490, 0.16666667
    %v2507 = vmul.f32 %v2491, 0.16666667
    %v2508 = vmul.f32 %v2492, 0.16666667
    %v2509 = vmul.f32 %v2493, 0.16666667
    %v2510 = vmul.f32 %v2494, 0.16666667
    %v2511 = vmul.f32 %v2495, 0.16666667
    %v2512 = vmul.f32 %v2496, 0.16666667
    %v2513 = vmul.f32 %v2497, 0.16666667
    %v2514 = vmul.f32 %v2498, 0.16666667
    %v2515 = vmul.f32 %v2499, 0.16666667
    %v2516 = vmul.f32 %v2500, 0.16666667
    %v2517 = vmul.f32 %v2501, 0.16666667
    %vm2518 = vcmp.lt.f32.partialorder %v2342, 1.0
    %vm2519 = vcmp.lt.f32.partialorder %v2343, 1.0
    %vm2520 = vcmp.lt.f32.partialorder %v2344, 1.0
    %vm2521 = vcmp.lt.f32.partialorder %v2345, 1.0
    %vm2522 = vcmp.lt.f32.partialorder %v2346, 1.0
    %vm2523 = vcmp.lt.f32.partialorder %v2347, 1.0
    %vm2524 = vcmp.lt.f32.partialorder %v2348, 1.0
    %vm2525 = vcmp.lt.f32.partialorder %v2349, 1.0
    %vm2526 = vcmp.lt.f32.partialorder %v2350, 1.0
    %vm2527 = vcmp.lt.f32.partialorder %v2351, 1.0
    %vm2528 = vcmp.lt.f32.partialorder %v2352, 1.0
    %vm2529 = vcmp.lt.f32.partialorder %v2353, 1.0
    %vm2530 = vcmp.lt.f32.partialorder %v2354, 1.0
    %vm2531 = vcmp.lt.f32.partialorder %v2355, 1.0
    %vm2532 = vcmp.lt.f32.partialorder %v2356, 1.0
    %vm2533 = vcmp.lt.f32.partialorder %v2357, 1.0
    %v2534 = vsel %vm2518, %v2422, %v2502
    %v2535 = vsel %vm2519, %v2423, %v2503
    %v2536 = vsel %vm2520, %v2424, %v2504
    %v2537 = vsel %vm2521, %v2425, %v2505
    %v2538 = vsel %vm2522, %v2426, %v2506
    %v2539 = vsel %vm2523, %v2427, %v2507
    %v2540 = vsel %vm2524, %v2428, %v2508
    %v2541 = vsel %vm2525, %v2429, %v2509
    %v2542 = vsel %vm2526, %v2430, %v2510
    %v2543 = vsel %vm2527, %v2431, %v2511
    %v2544 = vsel %vm2528, %v2432, %v2512
    %v2545 = vsel %vm2529, %v2433, %v2513
    %v2546 = vsel %vm2530, %v2434, %v2514
    %v2547 = vsel %vm2531, %v2435, %v2515
    %v2548 = vsel %vm2532, %v2436, %v2516
    %v2549 = vsel %vm2533, %v2437, %v2517
    %s2550 = scalar_lea.vmem [#allocation4], 112
    %v2551 = vld [vmem:[%s2550] sm:$0xff]
    %v2552 = vld [vmem:[%s2550 + $0x8] sm:$0xff]
    %v2553 = vmul.f32 %v2534, %v2551
    %v2554 = vmul.f32 %v2535, %v2552
    %v2555 = vmul.f32 %v2536, %v2551
    %v2556 = vmul.f32 %v2537, %v2552
    %v2557 = vmul.f32 %v2538, %v2551
    %v2558 = vmul.f32 %v2539, %v2552
    %v2559 = vmul.f32 %v2540, %v2551
    %v2560 = vmul.f32 %v2541, %v2552
    %v2561 = vmul.f32 %v2542, %v2551
    %v2562 = vmul.f32 %v2543, %v2552
    %v2563 = vmul.f32 %v2544, %v2551
    %v2564 = vmul.f32 %v2545, %v2552
    %v2565 = vmul.f32 %v2546, %v2551
    %v2566 = vmul.f32 %v2547, %v2552
    %v2567 = vmul.f32 %v2548, %v2551
    %v2568 = vmul.f32 %v2549, %v2552
    %v2569 = vadd.f32 %v2553, %v2554
    %v2570 = vrot.slane %v2569, 4
    %v2571 = vadd.f32 %v2569, %v2570
    %v2572 = vrot.slane %v2571, 2
    %v2573 = vadd.f32 %v2571, %v2572
    %v2574 = vrot.slane %v2573, 1
    %v2575 = vadd.f32 %v2573, %v2574
    %v2576 = vadd.f32 %v2555, %v2556
    %v2577 = vrot.slane %v2576, 4
    %v2578 = vadd.f32 %v2576, %v2577
    %v2579 = vrot.slane %v2578, 2
    %v2580 = vadd.f32 %v2578, %v2579
    %v2581 = vrot.slane %v2580, 1
    %v2582 = vadd.f32 %v2580, %v2581
    %v2583 = vadd.f32 %v2557, %v2558
    %v2584 = vrot.slane %v2583, 4
    %v2585 = vadd.f32 %v2583, %v2584
    %v2586 = vrot.slane %v2585, 2
    %v2587 = vadd.f32 %v2585, %v2586
    %v2588 = vrot.slane %v2587, 1
    %v2589 = vadd.f32 %v2587, %v2588
    %v2590 = vadd.f32 %v2559, %v2560
    %v2591 = vrot.slane %v2590, 4
    %v2592 = vadd.f32 %v2590, %v2591
    %v2593 = vrot.slane %v2592, 2
    %v2594 = vadd.f32 %v2592, %v2593
    %v2595 = vrot.slane %v2594, 1
    %v2596 = vadd.f32 %v2594, %v2595
    %v2597 = vadd.f32 %v2561, %v2562
    %v2598 = vrot.slane %v2597, 4
    %v2599 = vadd.f32 %v2597, %v2598
    %v2600 = vrot.slane %v2599, 2
    %v2601 = vadd.f32 %v2599, %v2600
    %v2602 = vrot.slane %v2601, 1
    %v2603 = vadd.f32 %v2601, %v2602
    %v2604 = vadd.f32 %v2563, %v2564
    %v2605 = vrot.slane %v2604, 4
    %v2606 = vadd.f32 %v2604, %v2605
    %v2607 = vrot.slane %v2606, 2
    %v2608 = vadd.f32 %v2606, %v2607
    %v2609 = vrot.slane %v2608, 1
    %v2610 = vadd.f32 %v2608, %v2609
    %v2611 = vadd.f32 %v2565, %v2566
    %v2612 = vrot.slane %v2611, 4
    %v2613 = vadd.f32 %v2611, %v2612
    %v2614 = vrot.slane %v2613, 2
    %v2615 = vadd.f32 %v2613, %v2614
    %v2616 = vrot.slane %v2615, 1
    %v2617 = vadd.f32 %v2615, %v2616
    %v2618 = vadd.f32 %v2567, %v2568
    %v2619 = vrot.slane %v2618, 4
    %v2620 = vadd.f32 %v2618, %v2619
    %v2621 = vrot.slane %v2620, 2
    %v2622 = vadd.f32 %v2620, %v2621
    %v2623 = vrot.slane %v2622, 1
    %v2624 = vadd.f32 %v2622, %v2623
    %v2625 = vadd.f32 %v2316, %v2575
    %v2626 = vadd.f32 %v2317, %v2582
    %v2627 = vadd.f32 %v2318, %v2589
    %v2628 = vadd.f32 %v2319, %v2596
    %v2629 = vadd.f32 %v2320, %v2603
    %v2630 = vadd.f32 %v2321, %v2610
    %v2631 = vadd.f32 %v2322, %v2617
    %v2632 = vadd.f32 %v2323, %v2624
    %s2633 = sld [smem:[#allocation3 + $0x8]]
    %v2634 = vstv %s2633
    %v2635 = vsub.f32 %v146, %v2634
    %v2636 = vsub.f32 %v147, %v2634
    %v2637 = vsub.f32 %v148, %v2634
    %v2638 = vsub.f32 %v149, %v2634
    %v2639 = vsub.f32 %v150, %v2634
    %v2640 = vsub.f32 %v151, %v2634
    %v2641 = vsub.f32 %v152, %v2634
    %v2642 = vsub.f32 %v153, %v2634
    %v2643 = vsub.f32 %v154, %v2634
    %v2644 = vsub.f32 %v155, %v2634
    %v2645 = vsub.f32 %v156, %v2634
    %v2646 = vsub.f32 %v157, %v2634
    %v2647 = vsub.f32 %v158, %v2634
    %v2648 = vsub.f32 %v159, %v2634
    %v2649 = vsub.f32 %v160, %v2634
    %v2650 = vsub.f32 %v161, %v2634
    %v2651 = vand.u32 2147483647, %v2635
    %v2652 = vand.u32 2147483647, %v2636
    %v2653 = vand.u32 2147483647, %v2637
    %v2654 = vand.u32 2147483647, %v2638
    %v2655 = vand.u32 2147483647, %v2639
    %v2656 = vand.u32 2147483647, %v2640
    %v2657 = vand.u32 2147483647, %v2641
    %v2658 = vand.u32 2147483647, %v2642
    %v2659 = vand.u32 2147483647, %v2643
    %v2660 = vand.u32 2147483647, %v2644
    %v2661 = vand.u32 2147483647, %v2645
    %v2662 = vand.u32 2147483647, %v2646
    %v2663 = vand.u32 2147483647, %v2647
    %v2664 = vand.u32 2147483647, %v2648
    %v2665 = vand.u32 2147483647, %v2649
    %v2666 = vand.u32 2147483647, %v2650
    %v2667 = vmul.f32 %v2651, %v2651
    %v2668 = vmul.f32 %v2652, %v2652
    %v2669 = vmul.f32 %v2653, %v2653
    %v2670 = vmul.f32 %v2654, %v2654
    %v2671 = vmul.f32 %v2655, %v2655
    %v2672 = vmul.f32 %v2656, %v2656
    %v2673 = vmul.f32 %v2657, %v2657
    %v2674 = vmul.f32 %v2658, %v2658
    %v2675 = vmul.f32 %v2659, %v2659
    %v2676 = vmul.f32 %v2660, %v2660
    %v2677 = vmul.f32 %v2661, %v2661
    %v2678 = vmul.f32 %v2662, %v2662
    %v2679 = vmul.f32 %v2663, %v2663
    %v2680 = vmul.f32 %v2664, %v2664
    %v2681 = vmul.f32 %v2665, %v2665
    %v2682 = vmul.f32 %v2666, %v2666
    %v2683 = vmul.f32 %v2651, 0.5
    %v2684 = vmul.f32 %v2652, 0.5
    %v2685 = vmul.f32 %v2653, 0.5
    %v2686 = vmul.f32 %v2654, 0.5
    %v2687 = vmul.f32 %v2655, 0.5
    %v2688 = vmul.f32 %v2656, 0.5
    %v2689 = vmul.f32 %v2657, 0.5
    %v2690 = vmul.f32 %v2658, 0.5
    %v2691 = vmul.f32 %v2659, 0.5
    %v2692 = vmul.f32 %v2660, 0.5
    %v2693 = vmul.f32 %v2661, 0.5
    %v2694 = vmul.f32 %v2662, 0.5
    %v2695 = vmul.f32 %v2663, 0.5
    %v2696 = vmul.f32 %v2664, 0.5
    %v2697 = vmul.f32 %v2665, 0.5
    %v2698 = vmul.f32 %v2666, 0.5
    %v2699 = vsub.f32 %v2683, 1.0
    %v2700 = vsub.f32 %v2684, 1.0
    %v2701 = vsub.f32 %v2685, 1.0
    %v2702 = vsub.f32 %v2686, 1.0
    %v2703 = vsub.f32 %v2687, 1.0
    %v2704 = vsub.f32 %v2688, 1.0
    %v2705 = vsub.f32 %v2689, 1.0
    %v2706 = vsub.f32 %v2690, 1.0
    %v2707 = vsub.f32 %v2691, 1.0
    %v2708 = vsub.f32 %v2692, 1.0
    %v2709 = vsub.f32 %v2693, 1.0
    %v2710 = vsub.f32 %v2694, 1.0
    %v2711 = vsub.f32 %v2695, 1.0
    %v2712 = vsub.f32 %v2696, 1.0
    %v2713 = vsub.f32 %v2697, 1.0
    %v2714 = vsub.f32 %v2698, 1.0
    %v2715 = vmul.f32 %v2667, %v2699
    %v2716 = vmul.f32 %v2668, %v2700
    %v2717 = vmul.f32 %v2669, %v2701
    %v2718 = vmul.f32 %v2670, %v2702
    %v2719 = vmul.f32 %v2671, %v2703
    %v2720 = vmul.f32 %v2672, %v2704
    %v2721 = vmul.f32 %v2673, %v2705
    %v2722 = vmul.f32 %v2674, %v2706
    %v2723 = vmul.f32 %v2675, %v2707
    %v2724 = vmul.f32 %v2676, %v2708
    %v2725 = vmul.f32 %v2677, %v2709
    %v2726 = vmul.f32 %v2678, %v2710
    %v2727 = vmul.f32 %v2679, %v2711
    %v2728 = vmul.f32 %v2680, %v2712
    %v2729 = vmul.f32 %v2681, %v2713
    %v2730 = vmul.f32 %v2682, %v2714
    %v2731 = vadd.f32 %v2715, 0.6666667
    %v2732 = vadd.f32 %v2716, 0.6666667
    %v2733 = vadd.f32 %v2717, 0.6666667
    %v2734 = vadd.f32 %v2718, 0.6666667
    %v2735 = vadd.f32 %v2719, 0.6666667
    %v2736 = vadd.f32 %v2720, 0.6666667
    %v2737 = vadd.f32 %v2721, 0.6666667
    %v2738 = vadd.f32 %v2722, 0.6666667
    %v2739 = vadd.f32 %v2723, 0.6666667
    %v2740 = vadd.f32 %v2724, 0.6666667
    %v2741 = vadd.f32 %v2725, 0.6666667
    %v2742 = vadd.f32 %v2726, 0.6666667
    %v2743 = vadd.f32 %v2727, 0.6666667
    %v2744 = vadd.f32 %v2728, 0.6666667
    %v2745 = vadd.f32 %v2729, 0.6666667
    %v2746 = vadd.f32 %v2730, 0.6666667
    %v2747 = vsub.f32 2.0, %v2651
    %v2748 = vsub.f32 2.0, %v2652
    %v2749 = vsub.f32 2.0, %v2653
    %v2750 = vsub.f32 2.0, %v2654
    %v2751 = vsub.f32 2.0, %v2655
    %v2752 = vsub.f32 2.0, %v2656
    %v2753 = vsub.f32 2.0, %v2657
    %v2754 = vsub.f32 2.0, %v2658
    %v2755 = vsub.f32 2.0, %v2659
    %v2756 = vsub.f32 2.0, %v2660
    %v2757 = vsub.f32 2.0, %v2661
    %v2758 = vsub.f32 2.0, %v2662
    %v2759 = vsub.f32 2.0, %v2663
    %v2760 = vsub.f32 2.0, %v2664
    %v2761 = vsub.f32 2.0, %v2665
    %v2762 = vsub.f32 2.0, %v2666
    %v2763 = vmax.f32 %v2747, 0.0
    %v2764 = vmax.f32 %v2748, 0.0
    %v2765 = vmax.f32 %v2749, 0.0
    %v2766 = vmax.f32 %v2750, 0.0
    %v2767 = vmax.f32 %v2751, 0.0
    %v2768 = vmax.f32 %v2752, 0.0
    %v2769 = vmax.f32 %v2753, 0.0
    %v2770 = vmax.f32 %v2754, 0.0
    %v2771 = vmax.f32 %v2755, 0.0
    %v2772 = vmax.f32 %v2756, 0.0
    %v2773 = vmax.f32 %v2757, 0.0
    %v2774 = vmax.f32 %v2758, 0.0
    %v2775 = vmax.f32 %v2759, 0.0
    %v2776 = vmax.f32 %v2760, 0.0
    %v2777 = vmax.f32 %v2761, 0.0
    %v2778 = vmax.f32 %v2762, 0.0
    %v2779 = vmul.f32 %v2763, %v2763
    %v2780 = vmul.f32 %v2764, %v2764
    %v2781 = vmul.f32 %v2765, %v2765
    %v2782 = vmul.f32 %v2766, %v2766
    %v2783 = vmul.f32 %v2767, %v2767
    %v2784 = vmul.f32 %v2768, %v2768
    %v2785 = vmul.f32 %v2769, %v2769
    %v2786 = vmul.f32 %v2770, %v2770
    %v2787 = vmul.f32 %v2771, %v2771
    %v2788 = vmul.f32 %v2772, %v2772
    %v2789 = vmul.f32 %v2773, %v2773
    %v2790 = vmul.f32 %v2774, %v2774
    %v2791 = vmul.f32 %v2775, %v2775
    %v2792 = vmul.f32 %v2776, %v2776
    %v2793 = vmul.f32 %v2777, %v2777
    %v2794 = vmul.f32 %v2778, %v2778
    %v2795 = vmul.f32 %v2779, %v2763
    %v2796 = vmul.f32 %v2780, %v2764
    %v2797 = vmul.f32 %v2781, %v2765
    %v2798 = vmul.f32 %v2782, %v2766
    %v2799 = vmul.f32 %v2783, %v2767
    %v2800 = vmul.f32 %v2784, %v2768
    %v2801 = vmul.f32 %v2785, %v2769
    %v2802 = vmul.f32 %v2786, %v2770
    %v2803 = vmul.f32 %v2787, %v2771
    %v2804 = vmul.f32 %v2788, %v2772
    %v2805 = vmul.f32 %v2789, %v2773
    %v2806 = vmul.f32 %v2790, %v2774
    %v2807 = vmul.f32 %v2791, %v2775
    %v2808 = vmul.f32 %v2792, %v2776
    %v2809 = vmul.f32 %v2793, %v2777
    %v2810 = vmul.f32 %v2794, %v2778
    %v2811 = vmul.f32 %v2795, 0.16666667
    %v2812 = vmul.f32 %v2796, 0.16666667
    %v2813 = vmul.f32 %v2797, 0.16666667
    %v2814 = vmul.f32 %v2798, 0.16666667
    %v2815 = vmul.f32 %v2799, 0.16666667
    %v2816 = vmul.f32 %v2800, 0.16666667
    %v2817 = vmul.f32 %v2801, 0.16666667
    %v2818 = vmul.f32 %v2802, 0.16666667
    %v2819 = vmul.f32 %v2803, 0.16666667
    %v2820 = vmul.f32 %v2804, 0.16666667
    %v2821 = vmul.f32 %v2805, 0.16666667
    %v2822 = vmul.f32 %v2806, 0.16666667
    %v2823 = vmul.f32 %v2807, 0.16666667
    %v2824 = vmul.f32 %v2808, 0.16666667
    %v2825 = vmul.f32 %v2809, 0.16666667
    %v2826 = vmul.f32 %v2810, 0.16666667
    %vm2827 = vcmp.lt.f32.partialorder %v2651, 1.0
    %vm2828 = vcmp.lt.f32.partialorder %v2652, 1.0
    %vm2829 = vcmp.lt.f32.partialorder %v2653, 1.0
    %vm2830 = vcmp.lt.f32.partialorder %v2654, 1.0
    %vm2831 = vcmp.lt.f32.partialorder %v2655, 1.0
    %vm2832 = vcmp.lt.f32.partialorder %v2656, 1.0
    %vm2833 = vcmp.lt.f32.partialorder %v2657, 1.0
    %vm2834 = vcmp.lt.f32.partialorder %v2658, 1.0
    %vm2835 = vcmp.lt.f32.partialorder %v2659, 1.0
    %vm2836 = vcmp.lt.f32.partialorder %v2660, 1.0
    %vm2837 = vcmp.lt.f32.partialorder %v2661, 1.0
    %vm2838 = vcmp.lt.f32.partialorder %v2662, 1.0
    %vm2839 = vcmp.lt.f32.partialorder %v2663, 1.0
    %vm2840 = vcmp.lt.f32.partialorder %v2664, 1.0
    %vm2841 = vcmp.lt.f32.partialorder %v2665, 1.0
    %vm2842 = vcmp.lt.f32.partialorder %v2666, 1.0
    %v2843 = vsel %vm2827, %v2731, %v2811
    %v2844 = vsel %vm2828, %v2732, %v2812
    %v2845 = vsel %vm2829, %v2733, %v2813
    %v2846 = vsel %vm2830, %v2734, %v2814
    %v2847 = vsel %vm2831, %v2735, %v2815
    %v2848 = vsel %vm2832, %v2736, %v2816
    %v2849 = vsel %vm2833, %v2737, %v2817
    %v2850 = vsel %vm2834, %v2738, %v2818
    %v2851 = vsel %vm2835, %v2739, %v2819
    %v2852 = vsel %vm2836, %v2740, %v2820
    %v2853 = vsel %vm2837, %v2741, %v2821
    %v2854 = vsel %vm2838, %v2742, %v2822
    %v2855 = vsel %vm2839, %v2743, %v2823
    %v2856 = vsel %vm2840, %v2744, %v2824
    %v2857 = vsel %vm2841, %v2745, %v2825
    %v2858 = vsel %vm2842, %v2746, %v2826
    %s2859 = scalar_lea.vmem [#allocation4], 128
    %v2860 = vld [vmem:[%s2859] sm:$0xff]
    %v2861 = vld [vmem:[%s2859 + $0x8] sm:$0xff]
    %v2862 = vmul.f32 %v2843, %v2860
    %v2863 = vmul.f32 %v2844, %v2861
    %v2864 = vmul.f32 %v2845, %v2860
    %v2865 = vmul.f32 %v2846, %v2861
    %v2866 = vmul.f32 %v2847, %v2860
    %v2867 = vmul.f32 %v2848, %v2861
    %v2868 = vmul.f32 %v2849, %v2860
    %v2869 = vmul.f32 %v2850, %v2861
    %v2870 = vmul.f32 %v2851, %v2860
    %v2871 = vmul.f32 %v2852, %v2861
    %v2872 = vmul.f32 %v2853, %v2860
    %v2873 = vmul.f32 %v2854, %v2861
    %v2874 = vmul.f32 %v2855, %v2860
    %v2875 = vmul.f32 %v2856, %v2861
    %v2876 = vmul.f32 %v2857, %v2860
    %v2877 = vmul.f32 %v2858, %v2861
    %v2878 = vadd.f32 %v2862, %v2863
    %v2879 = vrot.slane %v2878, 4
    %v2880 = vadd.f32 %v2878, %v2879
    %v2881 = vrot.slane %v2880, 2
    %v2882 = vadd.f32 %v2880, %v2881
    %v2883 = vrot.slane %v2882, 1
    %v2884 = vadd.f32 %v2882, %v2883
    %v2885 = vadd.f32 %v2864, %v2865
    %v2886 = vrot.slane %v2885, 4
    %v2887 = vadd.f32 %v2885, %v2886
    %v2888 = vrot.slane %v2887, 2
    %v2889 = vadd.f32 %v2887, %v2888
    %v2890 = vrot.slane %v2889, 1
    %v2891 = vadd.f32 %v2889, %v2890
    %v2892 = vadd.f32 %v2866, %v2867
    %v2893 = vrot.slane %v2892, 4
    %v2894 = vadd.f32 %v2892, %v2893
    %v2895 = vrot.slane %v2894, 2
    %v2896 = vadd.f32 %v2894, %v2895
    %v2897 = vrot.slane %v2896, 1
    %v2898 = vadd.f32 %v2896, %v2897
    %v2899 = vadd.f32 %v2868, %v2869
    %v2900 = vrot.slane %v2899, 4
    %v2901 = vadd.f32 %v2899, %v2900
    %v2902 = vrot.slane %v2901, 2
    %v2903 = vadd.f32 %v2901, %v2902
    %v2904 = vrot.slane %v2903, 1
    %v2905 = vadd.f32 %v2903, %v2904
    %v2906 = vadd.f32 %v2870, %v2871
    %v2907 = vrot.slane %v2906, 4
    %v2908 = vadd.f32 %v2906, %v2907
    %v2909 = vrot.slane %v2908, 2
    %v2910 = vadd.f32 %v2908, %v2909
    %v2911 = vrot.slane %v2910, 1
    %v2912 = vadd.f32 %v2910, %v2911
    %v2913 = vadd.f32 %v2872, %v2873
    %v2914 = vrot.slane %v2913, 4
    %v2915 = vadd.f32 %v2913, %v2914
    %v2916 = vrot.slane %v2915, 2
    %v2917 = vadd.f32 %v2915, %v2916
    %v2918 = vrot.slane %v2917, 1
    %v2919 = vadd.f32 %v2917, %v2918
    %v2920 = vadd.f32 %v2874, %v2875
    %v2921 = vrot.slane %v2920, 4
    %v2922 = vadd.f32 %v2920, %v2921
    %v2923 = vrot.slane %v2922, 2
    %v2924 = vadd.f32 %v2922, %v2923
    %v2925 = vrot.slane %v2924, 1
    %v2926 = vadd.f32 %v2924, %v2925
    %v2927 = vadd.f32 %v2876, %v2877
    %v2928 = vrot.slane %v2927, 4
    %v2929 = vadd.f32 %v2927, %v2928
    %v2930 = vrot.slane %v2929, 2
    %v2931 = vadd.f32 %v2929, %v2930
    %v2932 = vrot.slane %v2931, 1
    %v2933 = vadd.f32 %v2931, %v2932
    %v2934 = vadd.f32 %v2625, %v2884
    %v2935 = vadd.f32 %v2626, %v2891
    %v2936 = vadd.f32 %v2627, %v2898
    %v2937 = vadd.f32 %v2628, %v2905
    %v2938 = vadd.f32 %v2629, %v2912
    %v2939 = vadd.f32 %v2630, %v2919
    %v2940 = vadd.f32 %v2631, %v2926
    %v2941 = vadd.f32 %v2632, %v2933
    %s2942 = sld [smem:[#allocation3 + $0x9]]
    %v2943 = vstv %s2942
    %v2944 = vsub.f32 %v146, %v2943
    %v2945 = vsub.f32 %v147, %v2943
    %v2946 = vsub.f32 %v148, %v2943
    %v2947 = vsub.f32 %v149, %v2943
    %v2948 = vsub.f32 %v150, %v2943
    %v2949 = vsub.f32 %v151, %v2943
    %v2950 = vsub.f32 %v152, %v2943
    %v2951 = vsub.f32 %v153, %v2943
    %v2952 = vsub.f32 %v154, %v2943
    %v2953 = vsub.f32 %v155, %v2943
    %v2954 = vsub.f32 %v156, %v2943
    %v2955 = vsub.f32 %v157, %v2943
    %v2956 = vsub.f32 %v158, %v2943
    %v2957 = vsub.f32 %v159, %v2943
    %v2958 = vsub.f32 %v160, %v2943
    %v2959 = vsub.f32 %v161, %v2943
    %v2960 = vand.u32 2147483647, %v2944
    %v2961 = vand.u32 2147483647, %v2945
    %v2962 = vand.u32 2147483647, %v2946
    %v2963 = vand.u32 2147483647, %v2947
    %v2964 = vand.u32 2147483647, %v2948
    %v2965 = vand.u32 2147483647, %v2949
    %v2966 = vand.u32 2147483647, %v2950
    %v2967 = vand.u32 2147483647, %v2951
    %v2968 = vand.u32 2147483647, %v2952
    %v2969 = vand.u32 2147483647, %v2953
    %v2970 = vand.u32 2147483647, %v2954
    %v2971 = vand.u32 2147483647, %v2955
    %v2972 = vand.u32 2147483647, %v2956
    %v2973 = vand.u32 2147483647, %v2957
    %v2974 = vand.u32 2147483647, %v2958
    %v2975 = vand.u32 2147483647, %v2959
    %v2976 = vmul.f32 %v2960, %v2960
    %v2977 = vmul.f32 %v2961, %v2961
    %v2978 = vmul.f32 %v2962, %v2962
    %v2979 = vmul.f32 %v2963, %v2963
    %v2980 = vmul.f32 %v2964, %v2964
    %v2981 = vmul.f32 %v2965, %v2965
    %v2982 = vmul.f32 %v2966, %v2966
    %v2983 = vmul.f32 %v2967, %v2967
    %v2984 = vmul.f32 %v2968, %v2968
    %v2985 = vmul.f32 %v2969, %v2969
    %v2986 = vmul.f32 %v2970, %v2970
    %v2987 = vmul.f32 %v2971, %v2971
    %v2988 = vmul.f32 %v2972, %v2972
    %v2989 = vmul.f32 %v2973, %v2973
    %v2990 = vmul.f32 %v2974, %v2974
    %v2991 = vmul.f32 %v2975, %v2975
    %v2992 = vmul.f32 %v2960, 0.5
    %v2993 = vmul.f32 %v2961, 0.5
    %v2994 = vmul.f32 %v2962, 0.5
    %v2995 = vmul.f32 %v2963, 0.5
    %v2996 = vmul.f32 %v2964, 0.5
    %v2997 = vmul.f32 %v2965, 0.5
    %v2998 = vmul.f32 %v2966, 0.5
    %v2999 = vmul.f32 %v2967, 0.5
    %v3000 = vmul.f32 %v2968, 0.5
    %v3001 = vmul.f32 %v2969, 0.5
    %v3002 = vmul.f32 %v2970, 0.5
    %v3003 = vmul.f32 %v2971, 0.5
    %v3004 = vmul.f32 %v2972, 0.5
    %v3005 = vmul.f32 %v2973, 0.5
    %v3006 = vmul.f32 %v2974, 0.5
    %v3007 = vmul.f32 %v2975, 0.5
    %v3008 = vsub.f32 %v2992, 1.0
    %v3009 = vsub.f32 %v2993, 1.0
    %v3010 = vsub.f32 %v2994, 1.0
    %v3011 = vsub.f32 %v2995, 1.0
    %v3012 = vsub.f32 %v2996, 1.0
    %v3013 = vsub.f32 %v2997, 1.0
    %v3014 = vsub.f32 %v2998, 1.0
    %v3015 = vsub.f32 %v2999, 1.0
    %v3016 = vsub.f32 %v3000, 1.0
    %v3017 = vsub.f32 %v3001, 1.0
    %v3018 = vsub.f32 %v3002, 1.0
    %v3019 = vsub.f32 %v3003, 1.0
    %v3020 = vsub.f32 %v3004, 1.0
    %v3021 = vsub.f32 %v3005, 1.0
    %v3022 = vsub.f32 %v3006, 1.0
    %v3023 = vsub.f32 %v3007, 1.0
    %v3024 = vmul.f32 %v2976, %v3008
    %v3025 = vmul.f32 %v2977, %v3009
    %v3026 = vmul.f32 %v2978, %v3010
    %v3027 = vmul.f32 %v2979, %v3011
    %v3028 = vmul.f32 %v2980, %v3012
    %v3029 = vmul.f32 %v2981, %v3013
    %v3030 = vmul.f32 %v2982, %v3014
    %v3031 = vmul.f32 %v2983, %v3015
    %v3032 = vmul.f32 %v2984, %v3016
    %v3033 = vmul.f32 %v2985, %v3017
    %v3034 = vmul.f32 %v2986, %v3018
    %v3035 = vmul.f32 %v2987, %v3019
    %v3036 = vmul.f32 %v2988, %v3020
    %v3037 = vmul.f32 %v2989, %v3021
    %v3038 = vmul.f32 %v2990, %v3022
    %v3039 = vmul.f32 %v2991, %v3023
    %v3040 = vadd.f32 %v3024, 0.6666667
    %v3041 = vadd.f32 %v3025, 0.6666667
    %v3042 = vadd.f32 %v3026, 0.6666667
    %v3043 = vadd.f32 %v3027, 0.6666667
    %v3044 = vadd.f32 %v3028, 0.6666667
    %v3045 = vadd.f32 %v3029, 0.6666667
    %v3046 = vadd.f32 %v3030, 0.6666667
    %v3047 = vadd.f32 %v3031, 0.6666667
    %v3048 = vadd.f32 %v3032, 0.6666667
    %v3049 = vadd.f32 %v3033, 0.6666667
    %v3050 = vadd.f32 %v3034, 0.6666667
    %v3051 = vadd.f32 %v3035, 0.6666667
    %v3052 = vadd.f32 %v3036, 0.6666667
    %v3053 = vadd.f32 %v3037, 0.6666667
    %v3054 = vadd.f32 %v3038, 0.6666667
    %v3055 = vadd.f32 %v3039, 0.6666667
    %v3056 = vsub.f32 2.0, %v2960
    %v3057 = vsub.f32 2.0, %v2961
    %v3058 = vsub.f32 2.0, %v2962
    %v3059 = vsub.f32 2.0, %v2963
    %v3060 = vsub.f32 2.0, %v2964
    %v3061 = vsub.f32 2.0, %v2965
    %v3062 = vsub.f32 2.0, %v2966
    %v3063 = vsub.f32 2.0, %v2967
    %v3064 = vsub.f32 2.0, %v2968
    %v3065 = vsub.f32 2.0, %v2969
    %v3066 = vsub.f32 2.0, %v2970
    %v3067 = vsub.f32 2.0, %v2971
    %v3068 = vsub.f32 2.0, %v2972
    %v3069 = vsub.f32 2.0, %v2973
    %v3070 = vsub.f32 2.0, %v2974
    %v3071 = vsub.f32 2.0, %v2975
    %v3072 = vmax.f32 %v3056, 0.0
    %v3073 = vmax.f32 %v3057, 0.0
    %v3074 = vmax.f32 %v3058, 0.0
    %v3075 = vmax.f32 %v3059, 0.0
    %v3076 = vmax.f32 %v3060, 0.0
    %v3077 = vmax.f32 %v3061, 0.0
    %v3078 = vmax.f32 %v3062, 0.0
    %v3079 = vmax.f32 %v3063, 0.0
    %v3080 = vmax.f32 %v3064, 0.0
    %v3081 = vmax.f32 %v3065, 0.0
    %v3082 = vmax.f32 %v3066, 0.0
    %v3083 = vmax.f32 %v3067, 0.0
    %v3084 = vmax.f32 %v3068, 0.0
    %v3085 = vmax.f32 %v3069, 0.0
    %v3086 = vmax.f32 %v3070, 0.0
    %v3087 = vmax.f32 %v3071, 0.0
    %v3088 = vmul.f32 %v3072, %v3072
    %v3089 = vmul.f32 %v3073, %v3073
    %v3090 = vmul.f32 %v3074, %v3074
    %v3091 = vmul.f32 %v3075, %v3075
    %v3092 = vmul.f32 %v3076, %v3076
    %v3093 = vmul.f32 %v3077, %v3077
    %v3094 = vmul.f32 %v3078, %v3078
    %v3095 = vmul.f32 %v3079, %v3079
    %v3096 = vmul.f32 %v3080, %v3080
    %v3097 = vmul.f32 %v3081, %v3081
    %v3098 = vmul.f32 %v3082, %v3082
    %v3099 = vmul.f32 %v3083, %v3083
    %v3100 = vmul.f32 %v3084, %v3084
    %v3101 = vmul.f32 %v3085, %v3085
    %v3102 = vmul.f32 %v3086, %v3086
    %v3103 = vmul.f32 %v3087, %v3087
    %v3104 = vmul.f32 %v3088, %v3072
    %v3105 = vmul.f32 %v3089, %v3073
    %v3106 = vmul.f32 %v3090, %v3074
    %v3107 = vmul.f32 %v3091, %v3075
    %v3108 = vmul.f32 %v3092, %v3076
    %v3109 = vmul.f32 %v3093, %v3077
    %v3110 = vmul.f32 %v3094, %v3078
    %v3111 = vmul.f32 %v3095, %v3079
    %v3112 = vmul.f32 %v3096, %v3080
    %v3113 = vmul.f32 %v3097, %v3081
    %v3114 = vmul.f32 %v3098, %v3082
    %v3115 = vmul.f32 %v3099, %v3083
    %v3116 = vmul.f32 %v3100, %v3084
    %v3117 = vmul.f32 %v3101, %v3085
    %v3118 = vmul.f32 %v3102, %v3086
    %v3119 = vmul.f32 %v3103, %v3087
    %v3120 = vmul.f32 %v3104, 0.16666667
    %v3121 = vmul.f32 %v3105, 0.16666667
    %v3122 = vmul.f32 %v3106, 0.16666667
    %v3123 = vmul.f32 %v3107, 0.16666667
    %v3124 = vmul.f32 %v3108, 0.16666667
    %v3125 = vmul.f32 %v3109, 0.16666667
    %v3126 = vmul.f32 %v3110, 0.16666667
    %v3127 = vmul.f32 %v3111, 0.16666667
    %v3128 = vmul.f32 %v3112, 0.16666667
    %v3129 = vmul.f32 %v3113, 0.16666667
    %v3130 = vmul.f32 %v3114, 0.16666667
    %v3131 = vmul.f32 %v3115, 0.16666667
    %v3132 = vmul.f32 %v3116, 0.16666667
    %v3133 = vmul.f32 %v3117, 0.16666667
    %v3134 = vmul.f32 %v3118, 0.16666667
    %v3135 = vmul.f32 %v3119, 0.16666667
    %vm3136 = vcmp.lt.f32.partialorder %v2960, 1.0
    %vm3137 = vcmp.lt.f32.partialorder %v2961, 1.0
    %vm3138 = vcmp.lt.f32.partialorder %v2962, 1.0
    %vm3139 = vcmp.lt.f32.partialorder %v2963, 1.0
    %vm3140 = vcmp.lt.f32.partialorder %v2964, 1.0
    %vm3141 = vcmp.lt.f32.partialorder %v2965, 1.0
    %vm3142 = vcmp.lt.f32.partialorder %v2966, 1.0
    %vm3143 = vcmp.lt.f32.partialorder %v2967, 1.0
    %vm3144 = vcmp.lt.f32.partialorder %v2968, 1.0
    %vm3145 = vcmp.lt.f32.partialorder %v2969, 1.0
    %vm3146 = vcmp.lt.f32.partialorder %v2970, 1.0
    %vm3147 = vcmp.lt.f32.partialorder %v2971, 1.0
    %vm3148 = vcmp.lt.f32.partialorder %v2972, 1.0
    %vm3149 = vcmp.lt.f32.partialorder %v2973, 1.0
    %vm3150 = vcmp.lt.f32.partialorder %v2974, 1.0
    %vm3151 = vcmp.lt.f32.partialorder %v2975, 1.0
    %v3152 = vsel %vm3136, %v3040, %v3120
    %v3153 = vsel %vm3137, %v3041, %v3121
    %v3154 = vsel %vm3138, %v3042, %v3122
    %v3155 = vsel %vm3139, %v3043, %v3123
    %v3156 = vsel %vm3140, %v3044, %v3124
    %v3157 = vsel %vm3141, %v3045, %v3125
    %v3158 = vsel %vm3142, %v3046, %v3126
    %v3159 = vsel %vm3143, %v3047, %v3127
    %v3160 = vsel %vm3144, %v3048, %v3128
    %v3161 = vsel %vm3145, %v3049, %v3129
    %v3162 = vsel %vm3146, %v3050, %v3130
    %v3163 = vsel %vm3147, %v3051, %v3131
    %v3164 = vsel %vm3148, %v3052, %v3132
    %v3165 = vsel %vm3149, %v3053, %v3133
    %v3166 = vsel %vm3150, %v3054, %v3134
    %v3167 = vsel %vm3151, %v3055, %v3135
    %s3168 = scalar_lea.vmem [#allocation4], 144
    %v3169 = vld [vmem:[%s3168] sm:$0xff]
    %v3170 = vld [vmem:[%s3168 + $0x8] sm:$0xff]
    %v3171 = vmul.f32 %v3152, %v3169
    %v3172 = vmul.f32 %v3153, %v3170
    %v3173 = vmul.f32 %v3154, %v3169
    %v3174 = vmul.f32 %v3155, %v3170
    %v3175 = vmul.f32 %v3156, %v3169
    %v3176 = vmul.f32 %v3157, %v3170
    %v3177 = vmul.f32 %v3158, %v3169
    %v3178 = vmul.f32 %v3159, %v3170
    %v3179 = vmul.f32 %v3160, %v3169
    %v3180 = vmul.f32 %v3161, %v3170
    %v3181 = vmul.f32 %v3162, %v3169
    %v3182 = vmul.f32 %v3163, %v3170
    %v3183 = vmul.f32 %v3164, %v3169
    %v3184 = vmul.f32 %v3165, %v3170
    %v3185 = vmul.f32 %v3166, %v3169
    %v3186 = vmul.f32 %v3167, %v3170
    %v3187 = vadd.f32 %v3171, %v3172
    %v3188 = vrot.slane %v3187, 4
    %v3189 = vadd.f32 %v3187, %v3188
    %v3190 = vrot.slane %v3189, 2
    %v3191 = vadd.f32 %v3189, %v3190
    %v3192 = vrot.slane %v3191, 1
    %v3193 = vadd.f32 %v3191, %v3192
    %v3194 = vadd.f32 %v3173, %v3174
    %v3195 = vrot.slane %v3194, 4
    %v3196 = vadd.f32 %v3194, %v3195
    %v3197 = vrot.slane %v3196, 2
    %v3198 = vadd.f32 %v3196, %v3197
    %v3199 = vrot.slane %v3198, 1
    %v3200 = vadd.f32 %v3198, %v3199
    %v3201 = vadd.f32 %v3175, %v3176
    %v3202 = vrot.slane %v3201, 4
    %v3203 = vadd.f32 %v3201, %v3202
    %v3204 = vrot.slane %v3203, 2
    %v3205 = vadd.f32 %v3203, %v3204
    %v3206 = vrot.slane %v3205, 1
    %v3207 = vadd.f32 %v3205, %v3206
    %v3208 = vadd.f32 %v3177, %v3178
    %v3209 = vrot.slane %v3208, 4
    %v3210 = vadd.f32 %v3208, %v3209
    %v3211 = vrot.slane %v3210, 2
    %v3212 = vadd.f32 %v3210, %v3211
    %v3213 = vrot.slane %v3212, 1
    %v3214 = vadd.f32 %v3212, %v3213
    %v3215 = vadd.f32 %v3179, %v3180
    %v3216 = vrot.slane %v3215, 4
    %v3217 = vadd.f32 %v3215, %v3216
    %v3218 = vrot.slane %v3217, 2
    %v3219 = vadd.f32 %v3217, %v3218
    %v3220 = vrot.slane %v3219, 1
    %v3221 = vadd.f32 %v3219, %v3220
    %v3222 = vadd.f32 %v3181, %v3182
    %v3223 = vrot.slane %v3222, 4
    %v3224 = vadd.f32 %v3222, %v3223
    %v3225 = vrot.slane %v3224, 2
    %v3226 = vadd.f32 %v3224, %v3225
    %v3227 = vrot.slane %v3226, 1
    %v3228 = vadd.f32 %v3226, %v3227
    %v3229 = vadd.f32 %v3183, %v3184
    %v3230 = vrot.slane %v3229, 4
    %v3231 = vadd.f32 %v3229, %v3230
    %v3232 = vrot.slane %v3231, 2
    %v3233 = vadd.f32 %v3231, %v3232
    %v3234 = vrot.slane %v3233, 1
    %v3235 = vadd.f32 %v3233, %v3234
    %v3236 = vadd.f32 %v3185, %v3186
    %v3237 = vrot.slane %v3236, 4
    %v3238 = vadd.f32 %v3236, %v3237
    %v3239 = vrot.slane %v3238, 2
    %v3240 = vadd.f32 %v3238, %v3239
    %v3241 = vrot.slane %v3240, 1
    %v3242 = vadd.f32 %v3240, %v3241
    %v3243 = vadd.f32 %v2934, %v3193
    %v3244 = vadd.f32 %v2935, %v3200
    %v3245 = vadd.f32 %v2936, %v3207
    %v3246 = vadd.f32 %v2937, %v3214
    %v3247 = vadd.f32 %v2938, %v3221
    %v3248 = vadd.f32 %v2939, %v3228
    %v3249 = vadd.f32 %v2940, %v3235
    %v3250 = vadd.f32 %v2941, %v3242
    %v3251 = vld [vmem:[#allocation7] sm:$0xff]
    %vm3260 = vcmask 1041409
    %v3261 = vsel %vm3260, %v3244, %v3243
    %vm3262 = vcmask 1042434
    %v3263 = vsel %vm3262, %v3245, %v3261
    %vm3264 = vcmask 1043459
    %v3265 = vsel %vm3264, %v3246, %v3263
    %vm3266 = vcmask 1044484
    %v3267 = vsel %vm3266, %v3247, %v3265
    %vm3268 = vcmask 1045509
    %v3269 = vsel %vm3268, %v3248, %v3267
    %vm3270 = vcmask 1046534
    %v3271 = vsel %vm3270, %v3249, %v3269
    %vm3272 = vcmask 1047559
    %v3273 = vsel %vm3272, %v3250, %v3271
    %v3275 = vadd.f32 %v3251, %v3273
    %3276 = vst [vmem:[#allocation7] sm:$0xff] %v3275
    // Predicated region
    $region26: #{tpu_custom_call.1} parent=1 // pred_check
      %p3277 = pneg %p43
    $region27: #{tpu_custom_call.1} parent=1 // pred_check_branch
      %3279 = sbr.rel (%p3277) target = $region29
    $region28: #{tpu_custom_call.1} parent=1 // pred_region
      %v3280 = vld [vmem:[#allocation7] sm:$0xff]
      %v3281 = vld [vmem:[%s4] sm:$0x1]
      %v3283 = vperm.slane %v3281, 0
      %v3285 = vadd.f32 %v3280, %v3283
      %3286 = vst [vmem:[#allocation7] sm:$0xff] %v3285
    $region29: #{tpu_custom_call.1} parent=1 // pred_fallthru
      _
    // Predicated region
    $region30: #{tpu_custom_call.1} parent=1 // pred_check
      _
    $region31: #{tpu_custom_call.1} parent=1 // pred_check_branch
      %3288 = sbr.rel (0) target = $region33
    $region32: #{tpu_custom_call.1} parent=1 // pred_region
      %3290 = vsyncadd [#allocation6], 0
      %s3292 = sshll.u32 [#allocation7], 4
      %s3293 = int_to_ptr.vmem [resolvable:$true] %s3292
      %s3294 = sshll.u32 %s5, 4
      %s3295 = int_to_ptr.hbm [resolvable:$true] %s3294
      %3297 = dma.vmem_to_hbm [thread:$0]  %s3293, 128, %s3295, [#allocation6]
    $region33: #{tpu_custom_call.1} parent=1 // pred_fallthru
      _
    // Predicated region
    $region34: #{tpu_custom_call.1} parent=1 // pred_check
      _
    $region35: #{tpu_custom_call.1} parent=1 // pred_check_branch
      %3299 = sbr.rel (0) target = $region37
    $region36: #{tpu_custom_call.1} parent=1 // pred_region
      %3301 = dma.done [#allocation6], 128
    $region37: #{tpu_custom_call.1} parent=1 // pred_fallthru
      _
    %3302 = vsyncpa [#allocation5], 1
    %3303 = vsyncpa [#allocation6], 1

</llo_original>
